<compile_context>
chip_gen: v5e
topology: v5e:2x2
jax: 0.10.0
libtpu: 0.0.40
codegen_flags: <defaults>
</compile_context>

<pallas_src>
import numpy as np
import jax
import jax.numpy as jnp
from jax.experimental import pallas as pl
from jax.experimental.pallas import tpu as pltpu

EMBED_SIZE = 128      # self.embed_size
HIDDEN_SIZE = 256     # self.hidden_size
LAMBDA = 0.01         # sparsity_threshold (softshrink lambda)
LEAKY_SLOPE = 0.01    # nn.LeakyReLU default negative slope
SCALE = 0.02


# ---------------------------------------------------------------------------
# Real-matrix forms of torch.fft.rfft / irfft with norm='ortho'
# ---------------------------------------------------------------------------
def _rfft_mats(L):
    """FR, FI such that rfft(x, norm='ortho') = FR @ x + 1j * (FI @ x)."""
    K = L // 2 + 1
    k = np.arange(K, dtype=np.float64)[:, None]
    n = np.arange(L, dtype=np.float64)[None, :]
    ang = 2.0 * np.pi * k * n / L
    FR = np.cos(ang) / np.sqrt(L)
    FI = -np.sin(ang) / np.sqrt(L)
    return FR.astype(np.float32), FI.astype(np.float32)


def _irfft_mats(L):
    """GR, GI such that irfft(X, n=L, norm='ortho') = GR @ Re(X) + GI @ Im(X)."""
    K = L // 2 + 1
    n = np.arange(L, dtype=np.float64)[:, None]
    k = np.arange(K, dtype=np.float64)[None, :]
    ang = 2.0 * np.pi * k * n / L
    w = np.full((1, K), 2.0)
    w[0, 0] = 1.0
    if L % 2 == 0:
        w[0, -1] = 1.0
    GR = w * np.cos(ang) / np.sqrt(L)
    GI = -w * np.sin(ang) / np.sqrt(L)
    return GR.astype(np.float32), GI.astype(np.float32)


# ---------------------------------------------------------------------------
# Deterministic parameter init (synthetic; matches __init__ shapes)
# ---------------------------------------------------------------------------
def init_params(key, seq_len, pred_len):
    D, H = EMBED_SIZE, HIDDEN_SIZE
    ks = jax.random.split(key, 13)
    rnd = lambda k, shp: jax.random.normal(k, shp, jnp.float32)
    return dict(
        emb=rnd(ks[0], (1, D)),
        r1=SCALE * rnd(ks[1], (D, D)),
        i1=SCALE * rnd(ks[2], (D, D)),
        rb1=SCALE * rnd(ks[3], (D,)),
        ib1=SCALE * rnd(ks[4], (D,)),
        r2=SCALE * rnd(ks[5], (D, D)),
        i2=SCALE * rnd(ks[6], (D, D)),
        rb2=SCALE * rnd(ks[7], (D,)),
        ib2=SCALE * rnd(ks[8], (D,)),
        w1=SCALE * rnd(ks[9], (seq_len * D, H)),
        b1=SCALE * rnd(ks[10], (H,)),
        w2=SCALE * rnd(ks[11], (H, pred_len)),
        b2=SCALE * rnd(ks[12], (pred_len,)),
    )


# ---------------------------------------------------------------------------
# Pallas implementation
# ---------------------------------------------------------------------------
def frets_forward_pallas(x, params, pred_len, block_batch=None):
    """x: (B, T, N) float32 -> (B, pred_len, N) float32 (FreTS forward)."""
    B, T, N = x.shape
    D, H, P = EMBED_SIZE, HIDDEN_SIZE, pred_len
    KN, KT = N // 2 + 1, T // 2 + 1
    KNp = ((KN + 7) // 8) * 8           # pad Re/Im halves to 8-sublane multiples
    KTp = ((KT + 7) // 8) * 8
    bf16 = jnp.bfloat16

    # ---- pick how many batch elements to fuse per grid step (bb*N rows) ----
    if block_batch is None:
        bb = 1
        for cand in range(1, B + 1):
            if B % cand == 0 and cand * N <= 256 and ((cand * N) % 8 == 0 or cand == B):
                bb = cand
    else:
        bb = block_batch
    M = bb * N                          # matmul M-dim / rows per grid step

    # ---- constant operators (host numpy -> bf16 device constants) ----------
    FNr, FNi = _rfft_mats(N)
    GNr, GNi = _irfft_mats(N)
    FTr, FTi = _rfft_mats(T)
    GTr, GTi = _irfft_mats(T)

    def pad_r(a, rows):
        o = np.zeros((rows, a.shape[1]), np.float32); o[: a.shape[0]] = a; return o

    def pad_c(a, cols):
        o = np.zeros((a.shape[0], cols), np.float32); o[:, : a.shape[1]] = a; return o

    eye_bb = np.eye(bb, dtype=np.float32)
    # channel rfft/irfft: [Re;Im]-stacked, zero-padded to KNp, block-diag over bb
    fnbd = np.concatenate([np.kron(eye_bb, pad_r(FNr, KNp)),
                           np.kron(eye_bb, pad_r(FNi, KNp))], axis=0)   # (2*bb*KNp, M)
    gnbd = np.concatenate([np.kron(eye_bb, pad_c(GNr, KNp)),
                           np.kron(eye_bb, pad_c(GNi, KNp))], axis=1)   # (M, 2*bb*KNp)
    # temporal rfft/irfft: [Re;Im]-stacked, zero-padded to KTp (shared by all rows)
    ftp = np.concatenate([pad_r(FTr, KTp), pad_r(FTi, KTp)], axis=0)    # (2*KTp, T)
    gtp = np.concatenate([pad_c(GTr, KTp), pad_c(GTi, KTp)], axis=1)    # (T, 2*KTp)

    fnbd = jnp.asarray(fnbd, bf16)
    gnbd = jnp.asarray(gnbd, bf16)
    ftp = jnp.asarray(ftp, bf16)
    gtp = jnp.asarray(gtp, bf16)

    # tokenEmb as a single matmul: e0 = x_tile(M, T) @ kron(I_T, emb)(T, T*D)
    embk = jnp.kron(jnp.eye(T, dtype=jnp.float32), params["emb"]).astype(bf16)

    # FreMLP only uses the DIAGONAL of r/i (einsum 'bijd,dd->bijd'); lambda is
    # pre-subtracted from the biases (softshrink(relu(v)) == relu(v - lambda)).
    prm1 = jnp.concatenate([
        jnp.tile(jnp.diagonal(params["r1"])[None, :], (1, T)),
        jnp.tile(jnp.diagonal(params["i1"])[None, :], (1, T)),
        jnp.tile(params["rb1"][None, :], (1, T)) - LAMBDA,
        jnp.tile(params["ib1"][None, :], (1, T)) - LAMBDA], axis=0)     # (4, T*D)
    prm2 = jnp.concatenate([
        jnp.tile(jnp.diagonal(params["r2"])[None, :], (1, M)),
        jnp.tile(jnp.diagonal(params["i2"])[None, :], (1, M)),
        jnp.tile(params["rb2"][None, :], (1, M)) - LAMBDA,
        jnp.tile(params["ib2"][None, :], (1, M)) - LAMBDA], axis=0)     # (4, M*D)

    w1 = params["w1"].astype(bf16)                                      # (T*D, H)
    w2 = params["w2"].astype(bf16)                                      # (H, P)
    b1 = params["b1"].reshape(1, H)
    b2 = params["b2"].reshape(1, P)

    # lane-dense input slab: row = b*N + n, lanes = T
    x2d = jnp.transpose(x, (0, 2, 1)).reshape(B * N, T).astype(jnp.float32)

    half_n = bb * KNp                   # Re/Im split point (multiple of 8)
    half_t = KTp

    def kernel(x_ref, embk_ref, fnbd_ref, gnbd_ref, ftp_ref, gtp_ref,
               prm1_ref, prm2_ref, w1_ref, b1_ref, w2_ref, b2_ref, out_ref):
        f32 = jnp.float32

        # ---- tokenEmb: one MXU push -> slab (M, T*D), lane = t*D + d --------
        e0 = jnp.dot(x_ref[...].astype(bf16), embk_ref[...],
                     preferred_element_type=f32)                        # (M, T*D)

        # ---- MLP_channel: block-diag rfft/irfft over channels ---------------
        p1 = prm1_ref[...]
        xc = jnp.dot(fnbd_ref[...], e0.astype(bf16),
                     preferred_element_type=f32)                        # (2*bb*KNp, T*D)
        xr, xi = xc[:half_n], xc[half_n:]
        o_r = jnp.maximum(xr * p1[0:1] - xi * p1[1:2] + p1[2:3], 0.0)
        o_i = jnp.maximum(xi * p1[0:1] + xr * p1[1:2] + p1[3:4], 0.0)
        y1 = jnp.concatenate([o_r, o_i], axis=0).astype(bf16)
        e1 = jnp.dot(gnbd_ref[...], y1, preferred_element_type=f32)     # (M, T*D)

        # ---- relayout (M, T*D) -> (T, M*D) via 128-lane-aligned slices -------
        e1_3 = e1.reshape(M, T, D)
        e1_t = jnp.concatenate([e1_3[m] for m in range(M)],
                               axis=1).astype(bf16)                     # (T, M*D)

        # ---- MLP_temporal: single 2D matmuls for rfft/irfft over time --------
        p2 = prm2_ref[...]
        x2 = jnp.dot(ftp_ref[...], e1_t, preferred_element_type=f32)    # (2*KTp, M*D)
        xr2, xi2 = x2[:half_t], x2[half_t:]
        o_r2 = jnp.maximum(xr2 * p2[0:1] - xi2 * p2[1:2] + p2[2:3], 0.0)
        o_i2 = jnp.maximum(xi2 * p2[0:1] + xr2 * p2[1:2] + p2[3:4], 0.0)
        y2 = jnp.concatenate([o_r2, o_i2], axis=0).astype(bf16)
        e2_t = jnp.dot(gtp_ref[...], y2, preferred_element_type=f32)    # (T, M*D)

        # ---- relayout back, residual, fc head -------------------------------
        e2 = jnp.stack([e2_t[:, m * D:(m + 1) * D] for m in range(M)],
                       axis=0).reshape(M, T * D)
        z = (e2 + e0).astype(bf16)                                      # (M, T*D)
        h = jnp.dot(z, w1_ref[...], preferred_element_type=f32) + b1_ref[...]
        h = jnp.where(h > 0, h, LEAKY_SLOPE * h)
        o = jnp.dot(h.astype(bf16), w2_ref[...],
                    preferred_element_type=f32) + b2_ref[...]           # (M, P)
        out_ref[...] = o.astype(out_ref.dtype)

    def fixed(shape):
        return pl.BlockSpec(shape, lambda b: (0, 0))

    grid_spec = pltpu.PrefetchScalarGridSpec(
        num_scalar_prefetch=0,
        grid=(B // bb,),
        in_specs=[
            pl.BlockSpec((M, T), lambda b: (b, 0)),   # x slab (row = b*N + n)
            fixed((T, T * D)),                        # kron(I_T, emb)
            fixed((2 * bb * KNp, M)),                 # channel rfft  [Re;Im], block-diag
            fixed((M, 2 * bb * KNp)),                 # channel irfft [Re|Im], block-diag
            fixed((2 * KTp, T)),                      # temporal rfft  [Re;Im]
            fixed((T, 2 * KTp)),                      # temporal irfft [Re|Im]
            fixed((4, T * D)),                        # FreMLP1 diag/bias (lambda folded)
            fixed((4, M * D)),                        # FreMLP2 diag/bias (lambda folded)
            fixed((T * D, H)),                        # fc W1
            fixed((1, H)),                            # fc b1
            fixed((H, P)),                            # fc W2
            fixed((1, P)),                            # fc b2
        ],
        out_specs=pl.BlockSpec((M, P), lambda b: (b, 0)),
    )

    out = pl.pallas_call(
        kernel,
        grid_spec=grid_spec,
        out_shape=jax.ShapeDtypeStruct((B * N, P), jnp.float32),
        compiler_params=pltpu.CompilerParams(
            dimension_semantics=("parallel",)),       # no carry across batch blocks
    )(x2d, embk, fnbd, gnbd, ftp, gtp, prm1, prm2, w1, b1, w2, b2)

    return jnp.transpose(out.reshape(B, N, P), (0, 2, 1))   # (B, pred_len, N)


# ---------------------------------------------------------------------------
# Pure-JAX reference (mirrors the PyTorch forward) for verification
# ---------------------------------------------------------------------------
def frets_forward_reference(x, params, pred_len):
    B, T, N = x.shape
    xe = jnp.transpose(x, (0, 2, 1))[..., None] * params["emb"]   # (B,N,T,D)
    bias = xe

    def fre(xc, r, i, rb, ib):
        rd, idg = jnp.diagonal(r), jnp.diagonal(i)   # einsum 'bijd,dd->bijd'
        o_r = jax.nn.relu(xc.real * rd - xc.imag * idg + rb)
        o_i = jax.nn.relu(xc.imag * rd + xc.real * idg + ib)
        ss = lambda y: jnp.where(y > LAMBDA, y - LAMBDA,
                                 jnp.where(y < -LAMBDA, y + LAMBDA, 0.0))
        return ss(o_r) + 1j * ss(o_i)

    # MLP_channel (channel_independence == 1)
    xp = jnp.transpose(xe, (0, 2, 1, 3))
    xc = jnp.fft.rfft(xp, axis=2, norm="ortho")
    y = fre(xc, params["r1"], params["i1"], params["rb1"], params["ib1"])
    xp = jnp.fft.irfft(y, n=N, axis=2, norm="ortho")
    xch = jnp.transpose(xp, (0, 2, 1, 3))

    # MLP_temporal
    xc = jnp.fft.rfft(xch, axis=2, norm="ortho")
    y = fre(xc, params["r2"], params["i2"], params["rb2"], params["ib2"])
    xt = jnp.fft.irfft(y, n=T, axis=2, norm="ortho")

    z = (xt + bias).reshape(B, N, T * EMBED_SIZE)
    h = jnp.einsum("bnk,kh->bnh", z, params["w1"],
                   precision=jax.lax.Precision.HIGHEST) + params["b1"]
    h = jnp.where(h > 0, h, LEAKY_SLOPE * h)
    o = jnp.einsum("bnh,hp->bnp", h, params["w2"],
                   precision=jax.lax.Precision.HIGHEST) + params["b2"]
    return jnp.transpose(o, (0, 2, 1))


if __name__ == "__main__":
    # configs: seq_len=8, c_in=8, pred_len=4, channel_independence=1
    B, T, N, P = 2, 8, 8, 4
    key = jax.random.PRNGKey(0)
    kx, kp = jax.random.split(key)
    x = jax.random.normal(kx, (B, T, N), jnp.float32)
    params = init_params(kp, T, P)

    out = jax.block_until_ready(frets_forward_pallas(x, params, P))
    ref = jax.block_until_ready(frets_forward_reference(x, params, P))

    assert out.shape == (B, P, N)
    # bf16 MXU inputs (f32 accumulation, incl. bf16 tokenEmb matmul) vs f32
    # HIGHEST reference -> looser tolerance.
    np.testing.assert_allclose(np.asarray(out), np.asarray(ref),
                               rtol=2e-2, atol=1e-2)
    print("KERNEL_OK")
</pallas_src>

<mosaic_0001>
module attributes {stable_mosaic.version = 11 : i64} {
  func.func @kernel(%arg0: i32, %arg1: memref<16x8xf32, #tpu.memory_space<vmem>>, %arg2: memref<8x1024xbf16, #tpu.memory_space<vmem>>, %arg3: memref<32x16xbf16, #tpu.memory_space<vmem>>, %arg4: memref<16x32xbf16, #tpu.memory_space<vmem>>, %arg5: memref<16x8xbf16, #tpu.memory_space<vmem>>, %arg6: memref<8x16xbf16, #tpu.memory_space<vmem>>, %arg7: memref<4x1024xf32, #tpu.memory_space<vmem>>, %arg8: memref<4x2048xf32, #tpu.memory_space<vmem>>, %arg9: memref<1024x256xbf16, #tpu.memory_space<vmem>>, %arg10: memref<1x256xf32, #tpu.memory_space<vmem>>, %arg11: memref<256x4xbf16, #tpu.memory_space<vmem>>, %arg12: memref<1x4xf32, #tpu.memory_space<vmem>>, %arg13: memref<16x4xf32, #tpu.memory_space<vmem>>) attributes {dimension_semantics = [#tpu.dimension_semantics<parallel>], iteration_bounds = array<i64: 1>, scalar_prefetch = 0 : i64, scratch_operands = 0 : i64, tpu.core_type = #tpu.core_type<tc>, window_params = [{transform_indices = @transform_0, window_bounds = array<i64: 16, 8>}, {pipeline_mode = #tpu.pipeline_mode<synchronous>, transform_indices = @transform_1, window_bounds = array<i64: 8, 1024>}, {pipeline_mode = #tpu.pipeline_mode<synchronous>, transform_indices = @transform_2, window_bounds = array<i64: 32, 16>}, {pipeline_mode = #tpu.pipeline_mode<synchronous>, transform_indices = @transform_3, window_bounds = array<i64: 16, 32>}, {pipeline_mode = #tpu.pipeline_mode<synchronous>, transform_indices = @transform_4, window_bounds = array<i64: 16, 8>}, {pipeline_mode = #tpu.pipeline_mode<synchronous>, transform_indices = @transform_5, window_bounds = array<i64: 8, 16>}, {pipeline_mode = #tpu.pipeline_mode<synchronous>, transform_indices = @transform_6, window_bounds = array<i64: 4, 1024>}, {pipeline_mode = #tpu.pipeline_mode<synchronous>, transform_indices = @transform_7, window_bounds = array<i64: 4, 2048>}, {pipeline_mode = #tpu.pipeline_mode<synchronous>, transform_indices = @transform_8, window_bounds = array<i64: 1024, 256>}, {pipeline_mode = #tpu.pipeline_mode<synchronous>, transform_indices = @transform_9, window_bounds = array<i64: 1, 256>}, {pipeline_mode = #tpu.pipeline_mode<synchronous>, transform_indices = @transform_10, window_bounds = array<i64: 256, 4>}, {pipeline_mode = #tpu.pipeline_mode<synchronous>, transform_indices = @transform_11, window_bounds = array<i64: 1, 4>}, {transform_indices = @transform_12, window_bounds = array<i64: 16, 4>}]} {
    %c0 = arith.constant 0 : index
    %c0_0 = arith.constant 0 : index
    %0 = vector.load %arg1[%c0, %c0_0] : memref<16x8xf32, #tpu.memory_space<vmem>>, vector<16x8xf32>
    %1 = arith.truncf %0 : vector<16x8xf32> to vector<16x8xbf16>
    %c0_1 = arith.constant 0 : index
    %c0_2 = arith.constant 0 : index
    %2 = vector.load %arg2[%c0_1, %c0_2] : memref<8x1024xbf16, #tpu.memory_space<vmem>>, vector<8x1024xbf16>
    %cst = arith.constant dense<0.000000e+00> : vector<16x1024xf32>
    %3 = tpu.matmul %1, %2, %cst {dimension_numbers = #tpu.dot_dimension_numbers<[1], [0], [0], [1], [0, 0, 1, 1], [], []>} : vector<16x8xbf16>, vector<8x1024xbf16>, vector<16x1024xf32> -> vector<16x1024xf32>
    %c0_3 = arith.constant 0 : index
    %c0_4 = arith.constant 0 : index
    %4 = vector.load %arg7[%c0_3, %c0_4] : memref<4x1024xf32, #tpu.memory_space<vmem>>, vector<4x1024xf32>
    %c0_5 = arith.constant 0 : index
    %c0_6 = arith.constant 0 : index
    %5 = vector.load %arg3[%c0_5, %c0_6] : memref<32x16xbf16, #tpu.memory_space<vmem>>, vector<32x16xbf16>
    %6 = arith.truncf %3 : vector<16x1024xf32> to vector<16x1024xbf16>
    %cst_7 = arith.constant dense<0.000000e+00> : vector<32x1024xf32>
    %7 = tpu.matmul %5, %6, %cst_7 {dimension_numbers = #tpu.dot_dimension_numbers<[1], [0], [0], [1], [0, 0, 1, 1], [], []>} : vector<32x16xbf16>, vector<16x1024xbf16>, vector<32x1024xf32> -> vector<32x1024xf32>
    %8 = vector.extract_strided_slice %7 {offsets = [0, 0], sizes = [16, 1024], strides = [1, 1]} : vector<32x1024xf32> to vector<16x1024xf32>
    %9 = vector.extract_strided_slice %7 {offsets = [16, 0], sizes = [16, 1024], strides = [1, 1]} : vector<32x1024xf32> to vector<16x1024xf32>
    %10 = vector.extract_strided_slice %4 {offsets = [0, 0], sizes = [1, 1024], strides = [1, 1]} : vector<4x1024xf32> to vector<1x1024xf32>
    %11 = vector.broadcast %10 : vector<1x1024xf32> to vector<16x1024xf32>
    %12 = arith.mulf %8, %11 : vector<16x1024xf32>
    %13 = vector.extract_strided_slice %4 {offsets = [1, 0], sizes = [1, 1024], strides = [1, 1]} : vector<4x1024xf32> to vector<1x1024xf32>
    %14 = vector.broadcast %13 : vector<1x1024xf32> to vector<16x1024xf32>
    %15 = arith.mulf %9, %14 : vector<16x1024xf32>
    %16 = arith.subf %12, %15 : vector<16x1024xf32>
    %17 = vector.extract_strided_slice %4 {offsets = [2, 0], sizes = [1, 1024], strides = [1, 1]} : vector<4x1024xf32> to vector<1x1024xf32>
    %18 = vector.broadcast %17 : vector<1x1024xf32> to vector<16x1024xf32>
    %19 = arith.addf %16, %18 : vector<16x1024xf32>
    %cst_8 = arith.constant 0.000000e+00 : f32
    %20 = vector.broadcast %cst_8 : f32 to vector<16x1024xf32>
    %21 = arith.maximumf %19, %20 : vector<16x1024xf32>
    %22 = vector.extract_strided_slice %4 {offsets = [0, 0], sizes = [1, 1024], strides = [1, 1]} : vector<4x1024xf32> to vector<1x1024xf32>
    %23 = vector.broadcast %22 : vector<1x1024xf32> to vector<16x1024xf32>
    %24 = arith.mulf %9, %23 : vector<16x1024xf32>
    %25 = vector.extract_strided_slice %4 {offsets = [1, 0], sizes = [1, 1024], strides = [1, 1]} : vector<4x1024xf32> to vector<1x1024xf32>
    %26 = vector.broadcast %25 : vector<1x1024xf32> to vector<16x1024xf32>
    %27 = arith.mulf %8, %26 : vector<16x1024xf32>
    %28 = arith.addf %24, %27 : vector<16x1024xf32>
    %29 = vector.extract_strided_slice %4 {offsets = [3, 0], sizes = [1, 1024], strides = [1, 1]} : vector<4x1024xf32> to vector<1x1024xf32>
    %30 = vector.broadcast %29 : vector<1x1024xf32> to vector<16x1024xf32>
    %31 = arith.addf %28, %30 : vector<16x1024xf32>
    %cst_9 = arith.constant 0.000000e+00 : f32
    %32 = vector.broadcast %cst_9 : f32 to vector<16x1024xf32>
    %33 = arith.maximumf %31, %32 : vector<16x1024xf32>
    %34 = tpu.concatenate %21, %33 in 0 : vector<16x1024xf32>, vector<16x1024xf32> -> vector<32x1024xf32>
    %35 = arith.truncf %34 : vector<32x1024xf32> to vector<32x1024xbf16>
    %c0_10 = arith.constant 0 : index
    %c0_11 = arith.constant 0 : index
    %36 = vector.load %arg4[%c0_10, %c0_11] : memref<16x32xbf16, #tpu.memory_space<vmem>>, vector<16x32xbf16>
    %cst_12 = arith.constant dense<0.000000e+00> : vector<16x1024xf32>
    %37 = tpu.matmul %36, %35, %cst_12 {dimension_numbers = #tpu.dot_dimension_numbers<[1], [0], [0], [1], [0, 0, 1, 1], [], []>} : vector<16x32xbf16>, vector<32x1024xbf16>, vector<16x1024xf32> -> vector<16x1024xf32>
    %38 = vector.shape_cast %37 : vector<16x1024xf32> to vector<16x8x128xf32>
    %39 = vector.extract_strided_slice %38 {offsets = [0, 0, 0], sizes = [1, 8, 128], strides = [1, 1, 1]} : vector<16x8x128xf32> to vector<1x8x128xf32>
    %40 = vector.shape_cast %39 : vector<1x8x128xf32> to vector<8x128xf32>
    %41 = vector.extract_strided_slice %38 {offsets = [1, 0, 0], sizes = [1, 8, 128], strides = [1, 1, 1]} : vector<16x8x128xf32> to vector<1x8x128xf32>
    %42 = vector.shape_cast %41 : vector<1x8x128xf32> to vector<8x128xf32>
    %43 = vector.extract_strided_slice %38 {offsets = [2, 0, 0], sizes = [1, 8, 128], strides = [1, 1, 1]} : vector<16x8x128xf32> to vector<1x8x128xf32>
    %44 = vector.shape_cast %43 : vector<1x8x128xf32> to vector<8x128xf32>
    %45 = vector.extract_strided_slice %38 {offsets = [3, 0, 0], sizes = [1, 8, 128], strides = [1, 1, 1]} : vector<16x8x128xf32> to vector<1x8x128xf32>
    %46 = vector.shape_cast %45 : vector<1x8x128xf32> to vector<8x128xf32>
    %47 = vector.extract_strided_slice %38 {offsets = [4, 0, 0], sizes = [1, 8, 128], strides = [1, 1, 1]} : vector<16x8x128xf32> to vector<1x8x128xf32>
    %48 = vector.shape_cast %47 : vector<1x8x128xf32> to vector<8x128xf32>
    %49 = vector.extract_strided_slice %38 {offsets = [5, 0, 0], sizes = [1, 8, 128], strides = [1, 1, 1]} : vector<16x8x128xf32> to vector<1x8x128xf32>
    %50 = vector.shape_cast %49 : vector<1x8x128xf32> to vector<8x128xf32>
    %51 = vector.extract_strided_slice %38 {offsets = [6, 0, 0], sizes = [1, 8, 128], strides = [1, 1, 1]} : vector<16x8x128xf32> to vector<1x8x128xf32>
    %52 = vector.shape_cast %51 : vector<1x8x128xf32> to vector<8x128xf32>
    %53 = vector.extract_strided_slice %38 {offsets = [7, 0, 0], sizes = [1, 8, 128], strides = [1, 1, 1]} : vector<16x8x128xf32> to vector<1x8x128xf32>
    %54 = vector.shape_cast %53 : vector<1x8x128xf32> to vector<8x128xf32>
    %55 = vector.extract_strided_slice %38 {offsets = [8, 0, 0], sizes = [1, 8, 128], strides = [1, 1, 1]} : vector<16x8x128xf32> to vector<1x8x128xf32>
    %56 = vector.shape_cast %55 : vector<1x8x128xf32> to vector<8x128xf32>
    %57 = vector.extract_strided_slice %38 {offsets = [9, 0, 0], sizes = [1, 8, 128], strides = [1, 1, 1]} : vector<16x8x128xf32> to vector<1x8x128xf32>
    %58 = vector.shape_cast %57 : vector<1x8x128xf32> to vector<8x128xf32>
    %59 = vector.extract_strided_slice %38 {offsets = [10, 0, 0], sizes = [1, 8, 128], strides = [1, 1, 1]} : vector<16x8x128xf32> to vector<1x8x128xf32>
    %60 = vector.shape_cast %59 : vector<1x8x128xf32> to vector<8x128xf32>
    %61 = vector.extract_strided_slice %38 {offsets = [11, 0, 0], sizes = [1, 8, 128], strides = [1, 1, 1]} : vector<16x8x128xf32> to vector<1x8x128xf32>
    %62 = vector.shape_cast %61 : vector<1x8x128xf32> to vector<8x128xf32>
    %63 = vector.extract_strided_slice %38 {offsets = [12, 0, 0], sizes = [1, 8, 128], strides = [1, 1, 1]} : vector<16x8x128xf32> to vector<1x8x128xf32>
    %64 = vector.shape_cast %63 : vector<1x8x128xf32> to vector<8x128xf32>
    %65 = vector.extract_strided_slice %38 {offsets = [13, 0, 0], sizes = [1, 8, 128], strides = [1, 1, 1]} : vector<16x8x128xf32> to vector<1x8x128xf32>
    %66 = vector.shape_cast %65 : vector<1x8x128xf32> to vector<8x128xf32>
    %67 = vector.extract_strided_slice %38 {offsets = [14, 0, 0], sizes = [1, 8, 128], strides = [1, 1, 1]} : vector<16x8x128xf32> to vector<1x8x128xf32>
    %68 = vector.shape_cast %67 : vector<1x8x128xf32> to vector<8x128xf32>
    %69 = vector.extract_strided_slice %38 {offsets = [15, 0, 0], sizes = [1, 8, 128], strides = [1, 1, 1]} : vector<16x8x128xf32> to vector<1x8x128xf32>
    %70 = vector.shape_cast %69 : vector<1x8x128xf32> to vector<8x128xf32>
    %71 = tpu.concatenate %40, %42, %44, %46, %48, %50, %52, %54, %56, %58, %60, %62, %64, %66, %68, %70 in 1 : vector<8x128xf32>, vector<8x128xf32>, vector<8x128xf32>, vector<8x128xf32>, vector<8x128xf32>, vector<8x128xf32>, vector<8x128xf32>, vector<8x128xf32>, vector<8x128xf32>, vector<8x128xf32>, vector<8x128xf32>, vector<8x128xf32>, vector<8x128xf32>, vector<8x128xf32>, vector<8x128xf32>, vector<8x128xf32> -> vector<8x2048xf32>
    %72 = arith.truncf %71 : vector<8x2048xf32> to vector<8x2048xbf16>
    %c0_13 = arith.constant 0 : index
    %c0_14 = arith.constant 0 : index
    %73 = vector.load %arg8[%c0_13, %c0_14] : memref<4x2048xf32, #tpu.memory_space<vmem>>, vector<4x2048xf32>
    %c0_15 = arith.constant 0 : index
    %c0_16 = arith.constant 0 : index
    %74 = vector.load %arg5[%c0_15, %c0_16] : memref<16x8xbf16, #tpu.memory_space<vmem>>, vector<16x8xbf16>
    %cst_17 = arith.constant dense<0.000000e+00> : vector<16x2048xf32>
    %75 = tpu.matmul %74, %72, %cst_17 {dimension_numbers = #tpu.dot_dimension_numbers<[1], [0], [0], [1], [0, 0, 1, 1], [], []>} : vector<16x8xbf16>, vector<8x2048xbf16>, vector<16x2048xf32> -> vector<16x2048xf32>
    %76 = vector.extract_strided_slice %75 {offsets = [0, 0], sizes = [8, 2048], strides = [1, 1]} : vector<16x2048xf32> to vector<8x2048xf32>
    %77 = vector.extract_strided_slice %75 {offsets = [8, 0], sizes = [8, 2048], strides = [1, 1]} : vector<16x2048xf32> to vector<8x2048xf32>
    %78 = vector.extract_strided_slice %73 {offsets = [0, 0], sizes = [1, 2048], strides = [1, 1]} : vector<4x2048xf32> to vector<1x2048xf32>
    %79 = vector.broadcast %78 : vector<1x2048xf32> to vector<8x2048xf32>
    %80 = arith.mulf %76, %79 : vector<8x2048xf32>
    %81 = vector.extract_strided_slice %73 {offsets = [1, 0], sizes = [1, 2048], strides = [1, 1]} : vector<4x2048xf32> to vector<1x2048xf32>
    %82 = vector.broadcast %81 : vector<1x2048xf32> to vector<8x2048xf32>
    %83 = arith.mulf %77, %82 : vector<8x2048xf32>
    %84 = arith.subf %80, %83 : vector<8x2048xf32>
    %85 = vector.extract_strided_slice %73 {offsets = [2, 0], sizes = [1, 2048], strides = [1, 1]} : vector<4x2048xf32> to vector<1x2048xf32>
    %86 = vector.broadcast %85 : vector<1x2048xf32> to vector<8x2048xf32>
    %87 = arith.addf %84, %86 : vector<8x2048xf32>
    %cst_18 = arith.constant 0.000000e+00 : f32
    %88 = vector.broadcast %cst_18 : f32 to vector<8x2048xf32>
    %89 = arith.maximumf %87, %88 : vector<8x2048xf32>
    %90 = vector.extract_strided_slice %73 {offsets = [0, 0], sizes = [1, 2048], strides = [1, 1]} : vector<4x2048xf32> to vector<1x2048xf32>
    %91 = vector.broadcast %90 : vector<1x2048xf32> to vector<8x2048xf32>
    %92 = arith.mulf %77, %91 : vector<8x2048xf32>
    %93 = vector.extract_strided_slice %73 {offsets = [1, 0], sizes = [1, 2048], strides = [1, 1]} : vector<4x2048xf32> to vector<1x2048xf32>
    %94 = vector.broadcast %93 : vector<1x2048xf32> to vector<8x2048xf32>
    %95 = arith.mulf %76, %94 : vector<8x2048xf32>
    %96 = arith.addf %92, %95 : vector<8x2048xf32>
    %97 = vector.extract_strided_slice %73 {offsets = [3, 0], sizes = [1, 2048], strides = [1, 1]} : vector<4x2048xf32> to vector<1x2048xf32>
    %98 = vector.broadcast %97 : vector<1x2048xf32> to vector<8x2048xf32>
    %99 = arith.addf %96, %98 : vector<8x2048xf32>
    %cst_19 = arith.constant 0.000000e+00 : f32
    %100 = vector.broadcast %cst_19 : f32 to vector<8x2048xf32>
    %101 = arith.maximumf %99, %100 : vector<8x2048xf32>
    %102 = tpu.concatenate %89, %101 in 0 : vector<8x2048xf32>, vector<8x2048xf32> -> vector<16x2048xf32>
    %103 = arith.truncf %102 : vector<16x2048xf32> to vector<16x2048xbf16>
    %c0_20 = arith.constant 0 : index
    %c0_21 = arith.constant 0 : index
    %104 = vector.load %arg6[%c0_20, %c0_21] : memref<8x16xbf16, #tpu.memory_space<vmem>>, vector<8x16xbf16>
    %cst_22 = arith.constant dense<0.000000e+00> : vector<8x2048xf32>
    %105 = tpu.matmul %104, %103, %cst_22 {dimension_numbers = #tpu.dot_dimension_numbers<[1], [0], [0], [1], [0, 0, 1, 1], [], []>} : vector<8x16xbf16>, vector<16x2048xbf16>, vector<8x2048xf32> -> vector<8x2048xf32>
    %106 = vector.extract_strided_slice %105 {offsets = [0, 0], sizes = [8, 128], strides = [1, 1]} : vector<8x2048xf32> to vector<8x128xf32>
    %107 = vector.extract_strided_slice %105 {offsets = [0, 128], sizes = [8, 128], strides = [1, 1]} : vector<8x2048xf32> to vector<8x128xf32>
    %108 = vector.extract_strided_slice %105 {offsets = [0, 256], sizes = [8, 128], strides = [1, 1]} : vector<8x2048xf32> to vector<8x128xf32>
    %109 = vector.extract_strided_slice %105 {offsets = [0, 384], sizes = [8, 128], strides = [1, 1]} : vector<8x2048xf32> to vector<8x128xf32>
    %110 = vector.extract_strided_slice %105 {offsets = [0, 512], sizes = [8, 128], strides = [1, 1]} : vector<8x2048xf32> to vector<8x128xf32>
    %111 = vector.extract_strided_slice %105 {offsets = [0, 640], sizes = [8, 128], strides = [1, 1]} : vector<8x2048xf32> to vector<8x128xf32>
    %112 = vector.extract_strided_slice %105 {offsets = [0, 768], sizes = [8, 128], strides = [1, 1]} : vector<8x2048xf32> to vector<8x128xf32>
    %113 = vector.extract_strided_slice %105 {offsets = [0, 896], sizes = [8, 128], strides = [1, 1]} : vector<8x2048xf32> to vector<8x128xf32>
    %114 = vector.extract_strided_slice %105 {offsets = [0, 1024], sizes = [8, 128], strides = [1, 1]} : vector<8x2048xf32> to vector<8x128xf32>
    %115 = vector.extract_strided_slice %105 {offsets = [0, 1152], sizes = [8, 128], strides = [1, 1]} : vector<8x2048xf32> to vector<8x128xf32>
    %116 = vector.extract_strided_slice %105 {offsets = [0, 1280], sizes = [8, 128], strides = [1, 1]} : vector<8x2048xf32> to vector<8x128xf32>
    %117 = vector.extract_strided_slice %105 {offsets = [0, 1408], sizes = [8, 128], strides = [1, 1]} : vector<8x2048xf32> to vector<8x128xf32>
    %118 = vector.extract_strided_slice %105 {offsets = [0, 1536], sizes = [8, 128], strides = [1, 1]} : vector<8x2048xf32> to vector<8x128xf32>
    %119 = vector.extract_strided_slice %105 {offsets = [0, 1664], sizes = [8, 128], strides = [1, 1]} : vector<8x2048xf32> to vector<8x128xf32>
    %120 = vector.extract_strided_slice %105 {offsets = [0, 1792], sizes = [8, 128], strides = [1, 1]} : vector<8x2048xf32> to vector<8x128xf32>
    %121 = vector.extract_strided_slice %105 {offsets = [0, 1920], sizes = [8, 128], strides = [1, 1]} : vector<8x2048xf32> to vector<8x128xf32>
    %122 = vector.shape_cast %106 : vector<8x128xf32> to vector<1x8x128xf32>
    %123 = vector.shape_cast %107 : vector<8x128xf32> to vector<1x8x128xf32>
    %124 = vector.shape_cast %108 : vector<8x128xf32> to vector<1x8x128xf32>
    %125 = vector.shape_cast %109 : vector<8x128xf32> to vector<1x8x128xf32>
    %126 = vector.shape_cast %110 : vector<8x128xf32> to vector<1x8x128xf32>
    %127 = vector.shape_cast %111 : vector<8x128xf32> to vector<1x8x128xf32>
    %128 = vector.shape_cast %112 : vector<8x128xf32> to vector<1x8x128xf32>
    %129 = vector.shape_cast %113 : vector<8x128xf32> to vector<1x8x128xf32>
    %130 = vector.shape_cast %114 : vector<8x128xf32> to vector<1x8x128xf32>
    %131 = vector.shape_cast %115 : vector<8x128xf32> to vector<1x8x128xf32>
    %132 = vector.shape_cast %116 : vector<8x128xf32> to vector<1x8x128xf32>
    %133 = vector.shape_cast %117 : vector<8x128xf32> to vector<1x8x128xf32>
    %134 = vector.shape_cast %118 : vector<8x128xf32> to vector<1x8x128xf32>
    %135 = vector.shape_cast %119 : vector<8x128xf32> to vector<1x8x128xf32>
    %136 = vector.shape_cast %120 : vector<8x128xf32> to vector<1x8x128xf32>
    %137 = vector.shape_cast %121 : vector<8x128xf32> to vector<1x8x128xf32>
    %138 = tpu.concatenate %122, %123, %124, %125, %126, %127, %128, %129, %130, %131, %132, %133, %134, %135, %136, %137 in 0 : vector<1x8x128xf32>, vector<1x8x128xf32>, vector<1x8x128xf32>, vector<1x8x128xf32>, vector<1x8x128xf32>, vector<1x8x128xf32>, vector<1x8x128xf32>, vector<1x8x128xf32>, vector<1x8x128xf32>, vector<1x8x128xf32>, vector<1x8x128xf32>, vector<1x8x128xf32>, vector<1x8x128xf32>, vector<1x8x128xf32>, vector<1x8x128xf32>, vector<1x8x128xf32> -> vector<16x8x128xf32>
    %139 = vector.shape_cast %138 : vector<16x8x128xf32> to vector<16x1024xf32>
    %140 = arith.addf %139, %3 : vector<16x1024xf32>
    %141 = arith.truncf %140 : vector<16x1024xf32> to vector<16x1024xbf16>
    %c0_23 = arith.constant 0 : index
    %c0_24 = arith.constant 0 : index
    %142 = vector.load %arg9[%c0_23, %c0_24] : memref<1024x256xbf16, #tpu.memory_space<vmem>>, vector<1024x256xbf16>
    %cst_25 = arith.constant dense<0.000000e+00> : vector<16x256xf32>
    %143 = tpu.matmul %141, %142, %cst_25 {dimension_numbers = #tpu.dot_dimension_numbers<[1], [0], [0], [1], [0, 0, 1, 1], [], []>} : vector<16x1024xbf16>, vector<1024x256xbf16>, vector<16x256xf32> -> vector<16x256xf32>
    %c0_26 = arith.constant 0 : index
    %c0_27 = arith.constant 0 : index
    %144 = vector.load %arg10[%c0_26, %c0_27] : memref<1x256xf32, #tpu.memory_space<vmem>>, vector<1x256xf32>
    %145 = vector.broadcast %144 : vector<1x256xf32> to vector<16x256xf32>
    %146 = arith.addf %143, %145 : vector<16x256xf32>
    %cst_28 = arith.constant 0.000000e+00 : f32
    %147 = vector.broadcast %cst_28 : f32 to vector<16x256xf32>
    %148 = arith.cmpf ogt, %146, %147 : vector<16x256xf32>
    %cst_29 = arith.constant 0.00999999977 : f32
    %149 = vector.broadcast %cst_29 : f32 to vector<16x256xf32>
    %150 = arith.mulf %149, %146 : vector<16x256xf32>
    %151 = arith.select %148, %146, %150 : vector<16x256xi1>, vector<16x256xf32>
    %152 = arith.truncf %151 : vector<16x256xf32> to vector<16x256xbf16>
    %c0_30 = arith.constant 0 : index
    %c0_31 = arith.constant 0 : index
    %153 = vector.load %arg11[%c0_30, %c0_31] : memref<256x4xbf16, #tpu.memory_space<vmem>>, vector<256x4xbf16>
    %cst_32 = arith.constant dense<0.000000e+00> : vector<16x4xf32>
    %154 = tpu.matmul %152, %153, %cst_32 {dimension_numbers = #tpu.dot_dimension_numbers<[1], [0], [0], [1], [0, 0, 1, 1], [], []>} : vector<16x256xbf16>, vector<256x4xbf16>, vector<16x4xf32> -> vector<16x4xf32>
    %c0_33 = arith.constant 0 : index
    %c0_34 = arith.constant 0 : index
    %155 = vector.load %arg12[%c0_33, %c0_34] : memref<1x4xf32, #tpu.memory_space<vmem>>, vector<1x4xf32>
    %156 = vector.broadcast %155 : vector<1x4xf32> to vector<16x4xf32>
    %157 = arith.addf %154, %156 : vector<16x4xf32>
    %c0_35 = arith.constant 0 : index
    %c0_36 = arith.constant 0 : index
    %158 = vector.load %arg13[%c0_35, %c0_36] : memref<16x4xf32, #tpu.memory_space<vmem>>, vector<16x4xf32>
    tpu.vector_store %arg13[%c0_35, %c0_36], %157 {strides = array<i32>} : memref<16x4xf32, #tpu.memory_space<vmem>>, vector<16x4xf32>,
    return
  }
  func.func @transform_0(%arg0: i32) -> (i32, i32) {
    %c0_i32 = arith.constant 0 : i32
    %c0_i32_0 = arith.constant 0 : i32
    return %arg0, %c0_i32 : i32, i32
  }
  func.func @transform_1(%arg0: i32) -> (i32, i32) {
    %c0_i32 = arith.constant 0 : i32
    %c0_i32_0 = arith.constant 0 : i32
    %c0_i32_1 = arith.constant 0 : i32
    return %c0_i32, %c0_i32_0 : i32, i32
  }
  func.func @transform_2(%arg0: i32) -> (i32, i32) {
    %c0_i32 = arith.constant 0 : i32
    %c0_i32_0 = arith.constant 0 : i32
    %c0_i32_1 = arith.constant 0 : i32
    return %c0_i32, %c0_i32_0 : i32, i32
  }
  func.func @transform_3(%arg0: i32) -> (i32, i32) {
    %c0_i32 = arith.constant 0 : i32
    %c0_i32_0 = arith.constant 0 : i32
    %c0_i32_1 = arith.constant 0 : i32
    return %c0_i32, %c0_i32_0 : i32, i32
  }
  func.func @transform_4(%arg0: i32) -> (i32, i32) {
    %c0_i32 = arith.constant 0 : i32
    %c0_i32_0 = arith.constant 0 : i32
    %c0_i32_1 = arith.constant 0 : i32
    return %c0_i32, %c0_i32_0 : i32, i32
  }
  func.func @transform_5(%arg0: i32) -> (i32, i32) {
    %c0_i32 = arith.constant 0 : i32
    %c0_i32_0 = arith.constant 0 : i32
    %c0_i32_1 = arith.constant 0 : i32
    return %c0_i32, %c0_i32_0 : i32, i32
  }
  func.func @transform_6(%arg0: i32) -> (i32, i32) {
    %c0_i32 = arith.constant 0 : i32
    %c0_i32_0 = arith.constant 0 : i32
    %c0_i32_1 = arith.constant 0 : i32
    return %c0_i32, %c0_i32_0 : i32, i32
  }
  func.func @transform_7(%arg0: i32) -> (i32, i32) {
    %c0_i32 = arith.constant 0 : i32
    %c0_i32_0 = arith.constant 0 : i32
    %c0_i32_1 = arith.constant 0 : i32
    return %c0_i32, %c0_i32_0 : i32, i32
  }
  func.func @transform_8(%arg0: i32) -> (i32, i32) {
    %c0_i32 = arith.constant 0 : i32
    %c0_i32_0 = arith.constant 0 : i32
    %c0_i32_1 = arith.constant 0 : i32
    return %c0_i32, %c0_i32_0 : i32, i32
  }
  func.func @transform_9(%arg0: i32) -> (i32, i32) {
    %c0_i32 = arith.constant 0 : i32
    %c0_i32_0 = arith.constant 0 : i32
    %c0_i32_1 = arith.constant 0 : i32
    return %c0_i32, %c0_i32_0 : i32, i32
  }
  func.func @transform_10(%arg0: i32) -> (i32, i32) {
    %c0_i32 = arith.constant 0 : i32
    %c0_i32_0 = arith.constant 0 : i32
    %c0_i32_1 = arith.constant 0 : i32
    return %c0_i32, %c0_i32_0 : i32, i32
  }
  func.func @transform_11(%arg0: i32) -> (i32, i32) {
    %c0_i32 = arith.constant 0 : i32
    %c0_i32_0 = arith.constant 0 : i32
    %c0_i32_1 = arith.constant 0 : i32
    return %c0_i32, %c0_i32_0 : i32, i32
  }
  func.func @transform_12(%arg0: i32) -> (i32, i32) {
    %c0_i32 = arith.constant 0 : i32
    %c0_i32_0 = arith.constant 0 : i32
    return %arg0, %c0_i32 : i32, i32
  }
}

</mosaic_0001>

<llo_original>
// kernel: tpu_custom_call.1
$region0: #{tpu_custom_call.1}
  #allocation0 [shape = 'u32[]', space=smem, size = 0x4, offset = 0x4, fixed_abs, tag = 'smem constant byte address 0x4 - core index']
  #allocation1 [shape = 'u32[72,128]{1,0:T(1,128)}', space=vmem, size = 0x9000, scoped, tag = 'internal scratch']
  %s0 = inlined_call_operand.vmem [shape: f32[16,8], index: 0, kind: input, shape index: {}]
  %s1 = inlined_call_operand.vmem [shape: bf16[8,1024], index: 1, kind: input, shape index: {}]
  %s2 = inlined_call_operand.vmem [shape: bf16[32,16], index: 2, kind: input, shape index: {}]
  %s3 = inlined_call_operand.vmem [shape: bf16[16,32], index: 3, kind: input, shape index: {}]
  %s4 = inlined_call_operand.vmem [shape: bf16[16,8], index: 4, kind: input, shape index: {}]
  %s5 = inlined_call_operand.vmem [shape: bf16[8,16], index: 5, kind: input, shape index: {}]
  %s6 = inlined_call_operand.vmem [shape: f32[4,1024], index: 6, kind: input, shape index: {}]
  %s7 = inlined_call_operand.vmem [shape: f32[4,2048], index: 7, kind: input, shape index: {}]
  %s8 = inlined_call_operand.hbm [shape: bf16[1024,256], index: 8, kind: input, shape index: {}]
  %s9 = inlined_call_operand.vmem [shape: f32[1,256], index: 9, kind: input, shape index: {}]
  %s10 = inlined_call_operand.vmem [shape: bf16[256,4], index: 10, kind: input, shape index: {}]
  %s11 = inlined_call_operand.vmem [shape: f32[1,4], index: 11, kind: input, shape index: {}]
  %s12 = inlined_call_operand.vmem [shape: f32[16,4], index: 12, kind: output, shape index: {}]
  %s13 = sld [smem:[#allocation0]]
  $region62: #{tpu_custom_call.1} parent=0
    _
  %s15 = ssub.s32 1, %s13
  %s16 = scalar_select 0, %s15, %s13
  $region1: #{tpu_custom_call.1} parent=0
    #allocation2 [shape = 'u8[524288]{0}', space=vmem, size = 0x80000, scoped, tag = 'input window, operand 8, single buffered']
    #allocation3 [shape = 's32[1]{0}', space=sflag, size = 0x4, scoped, tag = 'scoped memory for tpu_custom_call.1']
    %17 = vsyncpa [#allocation3], 0
    // Predicated region
    $region2: #{tpu_custom_call.1} parent=1 // pred_check
      _
    $region3: #{tpu_custom_call.1} parent=1 // pred_check_branch
      %19 = sbr.rel (0) target = $region5
    $region4: #{tpu_custom_call.1} parent=1 // pred_region
      _
    $region5: #{tpu_custom_call.1} parent=1 // pred_fallthru
      _
    // Predicated region
    $region6: #{tpu_custom_call.1} parent=1 // pred_check
      _
    $region7: #{tpu_custom_call.1} parent=1 // pred_check_branch
      %21 = sbr.rel (0) target = $region9
    $region8: #{tpu_custom_call.1} parent=1 // pred_region
      _
    $region9: #{tpu_custom_call.1} parent=1 // pred_fallthru
      _
    // Predicated region
    $region10: #{tpu_custom_call.1} parent=1 // pred_check
      _
    $region11: #{tpu_custom_call.1} parent=1 // pred_check_branch
      %23 = sbr.rel (0) target = $region13
    $region12: #{tpu_custom_call.1} parent=1 // pred_region
      _
    $region13: #{tpu_custom_call.1} parent=1 // pred_fallthru
      _
    // Predicated region
    $region14: #{tpu_custom_call.1} parent=1 // pred_check
      _
    $region15: #{tpu_custom_call.1} parent=1 // pred_check_branch
      %25 = sbr.rel (0) target = $region17
    $region16: #{tpu_custom_call.1} parent=1 // pred_region
      _
    $region17: #{tpu_custom_call.1} parent=1 // pred_fallthru
      _
    // Predicated region
    $region18: #{tpu_custom_call.1} parent=1 // pred_check
      _
    $region19: #{tpu_custom_call.1} parent=1 // pred_check_branch
      %27 = sbr.rel (0) target = $region21
    $region20: #{tpu_custom_call.1} parent=1 // pred_region
      _
    $region21: #{tpu_custom_call.1} parent=1 // pred_fallthru
      _
    // Predicated region
    $region22: #{tpu_custom_call.1} parent=1 // pred_check
      _
    $region23: #{tpu_custom_call.1} parent=1 // pred_check_branch
      %29 = sbr.rel (0) target = $region25
    $region24: #{tpu_custom_call.1} parent=1 // pred_region
      _
    $region25: #{tpu_custom_call.1} parent=1 // pred_fallthru
      _
    // Predicated region
    $region26: #{tpu_custom_call.1} parent=1 // pred_check
      _
    $region27: #{tpu_custom_call.1} parent=1 // pred_check_branch
      %31 = sbr.rel (0) target = $region29
    $region28: #{tpu_custom_call.1} parent=1 // pred_region
      _
    $region29: #{tpu_custom_call.1} parent=1 // pred_fallthru
      _
    // Predicated region
    $region30: #{tpu_custom_call.1} parent=1 // pred_check
      _
    $region31: #{tpu_custom_call.1} parent=1 // pred_check_branch
      %33 = sbr.rel (0) target = $region33
    $region32: #{tpu_custom_call.1} parent=1 // pred_region
      _
    $region33: #{tpu_custom_call.1} parent=1 // pred_fallthru
      _
    // Predicated region
    $region34: #{tpu_custom_call.1} parent=1 // pred_check
      _
    $region35: #{tpu_custom_call.1} parent=1 // pred_check_branch
      %35 = sbr.rel (0) target = $region37
    $region36: #{tpu_custom_call.1} parent=1 // pred_region
      %37 = vsyncadd [#allocation3], 0
      %s38 = sshll.u32 %s8, 4
      %s39 = int_to_ptr.hbm [resolvable:$true] %s38
      %s40 = sshll.u32 [#allocation2], 4
      %s41 = int_to_ptr.vmem [resolvable:$true] %s40
      %46 = dma.hbm_to_vmem [thread:$0]  %s39, 16384, %s41, [#allocation3], 128, 128, 8
    $region37: #{tpu_custom_call.1} parent=1 // pred_fallthru
      _
    // Predicated region
    $region38: #{tpu_custom_call.1} parent=1 // pred_check
      _
    $region39: #{tpu_custom_call.1} parent=1 // pred_check_branch
      %48 = sbr.rel (0) target = $region41
    $region40: #{tpu_custom_call.1} parent=1 // pred_region
      _
    $region41: #{tpu_custom_call.1} parent=1 // pred_fallthru
      _
    // Predicated region
    $region42: #{tpu_custom_call.1} parent=1 // pred_check
      _
    $region43: #{tpu_custom_call.1} parent=1 // pred_check_branch
      %50 = sbr.rel (0) target = $region45
    $region44: #{tpu_custom_call.1} parent=1 // pred_region
      _
    $region45: #{tpu_custom_call.1} parent=1 // pred_fallthru
      _
    // Predicated region
    $region46: #{tpu_custom_call.1} parent=1 // pred_check
      _
    $region47: #{tpu_custom_call.1} parent=1 // pred_check_branch
      %52 = sbr.rel (0) target = $region49
    $region48: #{tpu_custom_call.1} parent=1 // pred_region
      _
    $region49: #{tpu_custom_call.1} parent=1 // pred_fallthru
      _
    // Predicated region
    $region50: #{tpu_custom_call.1} parent=1 // pred_check
      _
    $region51: #{tpu_custom_call.1} parent=1 // pred_check_branch
      %54 = sbr.rel (0) target = $region53
    $region52: #{tpu_custom_call.1} parent=1 // pred_region
      %56 = dma.done [#allocation3], 16384
    $region53: #{tpu_custom_call.1} parent=1 // pred_fallthru
      _
    %v58 = vld [vmem:[%s0] sm:$0xff]
    %v59 = vld [vmem:[%s0 + $0x8] sm:$0xff]
    %v60 = vpack.c.bf16 %v59, %v58
    %v61 = vld [vmem:[%s1] sm:$0xff]
    %v62 = vld [vmem:[%s1 + $0x8] sm:$0xff]
    %v63 = vld [vmem:[%s1 + $0x10] sm:$0xff]
    %v64 = vld [vmem:[%s1 + $0x18] sm:$0xff]
    %v69 = vunpack.c.l.b16 %v61
    %v70 = vunpack.c.h.b16 %v61
    %v71 = vunpack.c.l.b16 %v62
    %v72 = vunpack.c.h.b16 %v62
    %v73 = vunpack.c.l.b16 %v63
    %v74 = vunpack.c.h.b16 %v63
    %v75 = vunpack.c.l.b16 %v64
    %v76 = vunpack.c.h.b16 %v64
    %v77 = vpack.c.b16 %v69, %v69
    %v78 = vpack.c.b16 %v70, %v70
    %v79 = vpack.c.b16 %v71, %v71
    %v80 = vpack.c.b16 %v72, %v72
    %v81 = vpack.c.b16 %v73, %v73
    %v82 = vpack.c.b16 %v74, %v74
    %v83 = vpack.c.b16 %v75, %v75
    %v84 = vpack.c.b16 %v76, %v76
    %vm85 = vcmask 64512
    %v87 = vsel %vm85, %v60, 0
    %vm89 = vcmask 1043456
    %v91 = vsel %vm89, %v77, 0
    %v94 = vsel %vm89, %v78, 0
    %v97 = vsel %vm89, %v79, 0
    %v100 = vsel %vm89, %v80, 0
    %v103 = vsel %vm89, %v81, 0
    %v106 = vsel %vm89, %v82, 0
    %v109 = vsel %vm89, %v83, 0
    %v112 = vsel %vm89, %v84, 0
    %114 = vmatpush.bf16.msra.mxu0 0
    %115 = vmatpush.bf16.msra.mxu0 0
    %116 = vmatpush.bf16.msra.mxu0 0
    %117 = vmatpush.bf16.msra.mxu0 0
    %118 = vmatpush.bf16.msra.mxu0 0
    %119 = vmatpush.bf16.msra.mxu0 0
    %120 = vmatpush.bf16.msra.mxu0 0
    %121 = vmatpush.bf16.msra.mxu0 %v91
    %122 = vmatmul.bf16.gmra.mxu0 %v87
    %v123 = vpop.f32.mrf.mxu0
    %v124 = vadd.f32 0.0, %v123
    %v125 = vpop.f32.mrf.mxu0
    %v126 = vadd.f32 0.0, %v125
    %127 = vdwg.mxu0
    %128 = vmatpush.bf16.msra.mxu0 0
    %129 = vmatpush.bf16.msra.mxu0 0
    %130 = vmatpush.bf16.msra.mxu0 0
    %131 = vmatpush.bf16.msra.mxu0 0
    %132 = vmatpush.bf16.msra.mxu0 0
    %133 = vmatpush.bf16.msra.mxu0 0
    %134 = vmatpush.bf16.msra.mxu0 0
    %135 = vmatpush.bf16.msra.mxu0 %v94
    %136 = vmatmul.bf16.gmra.mxu0 %v87
    %v137 = vpop.f32.mrf.mxu0
    %v138 = vadd.f32 0.0, %v137
    %v139 = vpop.f32.mrf.mxu0
    %v140 = vadd.f32 0.0, %v139
    %141 = vdwg.mxu0
    %142 = vmatpush.bf16.msra.mxu0 0
    %143 = vmatpush.bf16.msra.mxu0 0
    %144 = vmatpush.bf16.msra.mxu0 0
    %145 = vmatpush.bf16.msra.mxu0 0
    %146 = vmatpush.bf16.msra.mxu0 0
    %147 = vmatpush.bf16.msra.mxu0 0
    %148 = vmatpush.bf16.msra.mxu0 0
    %149 = vmatpush.bf16.msra.mxu0 %v97
    %150 = vmatmul.bf16.gmra.mxu0 %v87
    %v151 = vpop.f32.mrf.mxu0
    %v152 = vadd.f32 0.0, %v151
    %v153 = vpop.f32.mrf.mxu0
    %v154 = vadd.f32 0.0, %v153
    %155 = vdwg.mxu0
    %156 = vmatpush.bf16.msra.mxu0 0
    %157 = vmatpush.bf16.msra.mxu0 0
    %158 = vmatpush.bf16.msra.mxu0 0
    %159 = vmatpush.bf16.msra.mxu0 0
    %160 = vmatpush.bf16.msra.mxu0 0
    %161 = vmatpush.bf16.msra.mxu0 0
    %162 = vmatpush.bf16.msra.mxu0 0
    %163 = vmatpush.bf16.msra.mxu0 %v100
    %164 = vmatmul.bf16.gmra.mxu0 %v87
    %v165 = vpop.f32.mrf.mxu0
    %v166 = vadd.f32 0.0, %v165
    %v167 = vpop.f32.mrf.mxu0
    %v168 = vadd.f32 0.0, %v167
    %169 = vdwg.mxu0
    %170 = vmatpush.bf16.msra.mxu0 0
    %171 = vmatpush.bf16.msra.mxu0 0
    %172 = vmatpush.bf16.msra.mxu0 0
    %173 = vmatpush.bf16.msra.mxu0 0
    %174 = vmatpush.bf16.msra.mxu0 0
    %175 = vmatpush.bf16.msra.mxu0 0
    %176 = vmatpush.bf16.msra.mxu0 0
    %177 = vmatpush.bf16.msra.mxu0 %v103
    %178 = vmatmul.bf16.gmra.mxu0 %v87
    %v179 = vpop.f32.mrf.mxu0
    %v180 = vadd.f32 0.0, %v179
    %v181 = vpop.f32.mrf.mxu0
    %v182 = vadd.f32 0.0, %v181
    %183 = vdwg.mxu0
    %184 = vmatpush.bf16.msra.mxu0 0
    %185 = vmatpush.bf16.msra.mxu0 0
    %186 = vmatpush.bf16.msra.mxu0 0
    %187 = vmatpush.bf16.msra.mxu0 0
    %188 = vmatpush.bf16.msra.mxu0 0
    %189 = vmatpush.bf16.msra.mxu0 0
    %190 = vmatpush.bf16.msra.mxu0 0
    %191 = vmatpush.bf16.msra.mxu0 %v106
    %192 = vmatmul.bf16.gmra.mxu0 %v87
    %v193 = vpop.f32.mrf.mxu0
    %v194 = vadd.f32 0.0, %v193
    %v195 = vpop.f32.mrf.mxu0
    %v196 = vadd.f32 0.0, %v195
    %197 = vdwg.mxu0
    %198 = vmatpush.bf16.msra.mxu0 0
    %199 = vmatpush.bf16.msra.mxu0 0
    %200 = vmatpush.bf16.msra.mxu0 0
    %201 = vmatpush.bf16.msra.mxu0 0
    %202 = vmatpush.bf16.msra.mxu0 0
    %203 = vmatpush.bf16.msra.mxu0 0
    %204 = vmatpush.bf16.msra.mxu0 0
    %205 = vmatpush.bf16.msra.mxu0 %v109
    %206 = vmatmul.bf16.gmra.mxu0 %v87
    %v207 = vpop.f32.mrf.mxu0
    %v208 = vadd.f32 0.0, %v207
    %v209 = vpop.f32.mrf.mxu0
    %v210 = vadd.f32 0.0, %v209
    %211 = vdwg.mxu0
    %212 = vmatpush.bf16.msra.mxu0 0
    %213 = vmatpush.bf16.msra.mxu0 0
    %214 = vmatpush.bf16.msra.mxu0 0
    %215 = vmatpush.bf16.msra.mxu0 0
    %216 = vmatpush.bf16.msra.mxu0 0
    %217 = vmatpush.bf16.msra.mxu0 0
    %218 = vmatpush.bf16.msra.mxu0 0
    %219 = vmatpush.bf16.msra.mxu0 %v112
    %220 = vmatmul.bf16.gmra.mxu0 %v87
    %v221 = vpop.f32.mrf.mxu0
    %v222 = vadd.f32 0.0, %v221
    %v223 = vpop.f32.mrf.mxu0
    %v224 = vadd.f32 0.0, %v223
    %225 = vdwg.mxu0
    %v226 = vld [vmem:[%s6] sm:$0xff]
    %v227 = vld [vmem:[%s6 + $0x8] sm:$0xff]
    %v228 = vld [vmem:[%s6 + $0x10] sm:$0xff]
    %v229 = vld [vmem:[%s6 + $0x18] sm:$0xff]
    %v230 = vld [vmem:[%s2] sm:$0xf]
    %v231 = vld [vmem:[%s2 + $0x4] sm:$0xf]
    %v232 = vld [vmem:[%s2 + $0x8] sm:$0xf]
    %v233 = vld [vmem:[%s2 + $0xc] sm:$0xf]
    %v234 = vpack.c.bf16 %v126, %v124
    %v235 = vpack.c.bf16 %v140, %v138
    %v236 = vpack.c.bf16 %v154, %v152
    %v237 = vpack.c.bf16 %v168, %v166
    %v238 = vpack.c.bf16 %v182, %v180
    %v239 = vpack.c.bf16 %v196, %v194
    %v240 = vpack.c.bf16 %v210, %v208
    %v241 = vpack.c.bf16 %v224, %v222
    %v246 = vunpack.c.l.b16 %v230
    %v247 = vunpack.c.l.b16 %v231
    %v248 = vunpack.c.l.b16 %v232
    %v249 = vunpack.c.l.b16 %v233
    %v250 = vpack.c.b16 %v247, %v246
    %v251 = vpack.c.b16 %v249, %v248
    %vm252 = vcmask 130048
    %v254 = vsel %vm252, %v250, 0
    %v257 = vsel %vm252, %v251, 0
    %259 = vmatpush.bf16.msra.mxu0 0
    %260 = vmatpush.bf16.msra.mxu0 0
    %261 = vmatpush.bf16.msra.mxu0 0
    %262 = vmatpush.bf16.msra.mxu0 0
    %263 = vmatpush.bf16.msra.mxu0 0
    %264 = vmatpush.bf16.msra.mxu0 0
    %265 = vmatpush.bf16.msra.mxu0 0
    %266 = vmatpush.bf16.msra.mxu0 %v234
    %267 = vmatmul.bf16.gmra.mxu0 %v254
    %v268 = vpop.f32.mrf.mxu0
    %v269 = vadd.f32 0.0, %v268
    %v270 = vpop.f32.mrf.mxu0
    %v271 = vadd.f32 0.0, %v270
    %272 = vmatmul.bf16.gmra.mxu0 %v257
    %v273 = vpop.f32.mrf.mxu0
    %v274 = vadd.f32 0.0, %v273
    %v275 = vpop.f32.mrf.mxu0
    %v276 = vadd.f32 0.0, %v275
    %277 = vdwg.mxu0
    %278 = vmatpush.bf16.msra.mxu0 0
    %279 = vmatpush.bf16.msra.mxu0 0
    %280 = vmatpush.bf16.msra.mxu0 0
    %281 = vmatpush.bf16.msra.mxu0 0
    %282 = vmatpush.bf16.msra.mxu0 0
    %283 = vmatpush.bf16.msra.mxu0 0
    %284 = vmatpush.bf16.msra.mxu0 0
    %285 = vmatpush.bf16.msra.mxu0 %v235
    %286 = vmatmul.bf16.gmra.mxu0 %v254
    %v287 = vpop.f32.mrf.mxu0
    %v288 = vadd.f32 0.0, %v287
    %v289 = vpop.f32.mrf.mxu0
    %v290 = vadd.f32 0.0, %v289
    %291 = vmatmul.bf16.gmra.mxu0 %v257
    %v292 = vpop.f32.mrf.mxu0
    %v293 = vadd.f32 0.0, %v292
    %v294 = vpop.f32.mrf.mxu0
    %v295 = vadd.f32 0.0, %v294
    %296 = vdwg.mxu0
    %297 = vmatpush.bf16.msra.mxu0 0
    %298 = vmatpush.bf16.msra.mxu0 0
    %299 = vmatpush.bf16.msra.mxu0 0
    %300 = vmatpush.bf16.msra.mxu0 0
    %301 = vmatpush.bf16.msra.mxu0 0
    %302 = vmatpush.bf16.msra.mxu0 0
    %303 = vmatpush.bf16.msra.mxu0 0
    %304 = vmatpush.bf16.msra.mxu0 %v236
    %305 = vmatmul.bf16.gmra.mxu0 %v254
    %v306 = vpop.f32.mrf.mxu0
    %v307 = vadd.f32 0.0, %v306
    %v308 = vpop.f32.mrf.mxu0
    %v309 = vadd.f32 0.0, %v308
    %310 = vmatmul.bf16.gmra.mxu0 %v257
    %v311 = vpop.f32.mrf.mxu0
    %v312 = vadd.f32 0.0, %v311
    %v313 = vpop.f32.mrf.mxu0
    %v314 = vadd.f32 0.0, %v313
    %315 = vdwg.mxu0
    %316 = vmatpush.bf16.msra.mxu0 0
    %317 = vmatpush.bf16.msra.mxu0 0
    %318 = vmatpush.bf16.msra.mxu0 0
    %319 = vmatpush.bf16.msra.mxu0 0
    %320 = vmatpush.bf16.msra.mxu0 0
    %321 = vmatpush.bf16.msra.mxu0 0
    %322 = vmatpush.bf16.msra.mxu0 0
    %323 = vmatpush.bf16.msra.mxu0 %v237
    %324 = vmatmul.bf16.gmra.mxu0 %v254
    %v325 = vpop.f32.mrf.mxu0
    %v326 = vadd.f32 0.0, %v325
    %v327 = vpop.f32.mrf.mxu0
    %v328 = vadd.f32 0.0, %v327
    %329 = vmatmul.bf16.gmra.mxu0 %v257
    %v330 = vpop.f32.mrf.mxu0
    %v331 = vadd.f32 0.0, %v330
    %v332 = vpop.f32.mrf.mxu0
    %v333 = vadd.f32 0.0, %v332
    %334 = vdwg.mxu0
    %335 = vmatpush.bf16.msra.mxu0 0
    %336 = vmatpush.bf16.msra.mxu0 0
    %337 = vmatpush.bf16.msra.mxu0 0
    %338 = vmatpush.bf16.msra.mxu0 0
    %339 = vmatpush.bf16.msra.mxu0 0
    %340 = vmatpush.bf16.msra.mxu0 0
    %341 = vmatpush.bf16.msra.mxu0 0
    %342 = vmatpush.bf16.msra.mxu0 %v238
    %343 = vmatmul.bf16.gmra.mxu0 %v254
    %v344 = vpop.f32.mrf.mxu0
    %v345 = vadd.f32 0.0, %v344
    %v346 = vpop.f32.mrf.mxu0
    %v347 = vadd.f32 0.0, %v346
    %348 = vmatmul.bf16.gmra.mxu0 %v257
    %v349 = vpop.f32.mrf.mxu0
    %v350 = vadd.f32 0.0, %v349
    %v351 = vpop.f32.mrf.mxu0
    %v352 = vadd.f32 0.0, %v351
    %353 = vdwg.mxu0
    %354 = vmatpush.bf16.msra.mxu0 0
    %355 = vmatpush.bf16.msra.mxu0 0
    %356 = vmatpush.bf16.msra.mxu0 0
    %357 = vmatpush.bf16.msra.mxu0 0
    %358 = vmatpush.bf16.msra.mxu0 0
    %359 = vmatpush.bf16.msra.mxu0 0
    %360 = vmatpush.bf16.msra.mxu0 0
    %361 = vmatpush.bf16.msra.mxu0 %v239
    %362 = vmatmul.bf16.gmra.mxu0 %v254
    %v363 = vpop.f32.mrf.mxu0
    %v364 = vadd.f32 0.0, %v363
    %v365 = vpop.f32.mrf.mxu0
    %v366 = vadd.f32 0.0, %v365
    %367 = vmatmul.bf16.gmra.mxu0 %v257
    %v368 = vpop.f32.mrf.mxu0
    %v369 = vadd.f32 0.0, %v368
    %v370 = vpop.f32.mrf.mxu0
    %v371 = vadd.f32 0.0, %v370
    %372 = vdwg.mxu0
    %373 = vmatpush.bf16.msra.mxu0 0
    %374 = vmatpush.bf16.msra.mxu0 0
    %375 = vmatpush.bf16.msra.mxu0 0
    %376 = vmatpush.bf16.msra.mxu0 0
    %377 = vmatpush.bf16.msra.mxu0 0
    %378 = vmatpush.bf16.msra.mxu0 0
    %379 = vmatpush.bf16.msra.mxu0 0
    %380 = vmatpush.bf16.msra.mxu0 %v240
    %381 = vmatmul.bf16.gmra.mxu0 %v254
    %v382 = vpop.f32.mrf.mxu0
    %v383 = vadd.f32 0.0, %v382
    %v384 = vpop.f32.mrf.mxu0
    %v385 = vadd.f32 0.0, %v384
    %386 = vmatmul.bf16.gmra.mxu0 %v257
    %v387 = vpop.f32.mrf.mxu0
    %v388 = vadd.f32 0.0, %v387
    %v389 = vpop.f32.mrf.mxu0
    %v390 = vadd.f32 0.0, %v389
    %391 = vdwg.mxu0
    %392 = vmatpush.bf16.msra.mxu0 0
    %393 = vmatpush.bf16.msra.mxu0 0
    %394 = vmatpush.bf16.msra.mxu0 0
    %395 = vmatpush.bf16.msra.mxu0 0
    %396 = vmatpush.bf16.msra.mxu0 0
    %397 = vmatpush.bf16.msra.mxu0 0
    %398 = vmatpush.bf16.msra.mxu0 0
    %399 = vmatpush.bf16.msra.mxu0 %v241
    %400 = vmatmul.bf16.gmra.mxu0 %v254
    %v401 = vpop.f32.mrf.mxu0
    %v402 = vadd.f32 0.0, %v401
    %v403 = vpop.f32.mrf.mxu0
    %v404 = vadd.f32 0.0, %v403
    %405 = vmatmul.bf16.gmra.mxu0 %v257
    %v406 = vpop.f32.mrf.mxu0
    %v407 = vadd.f32 0.0, %v406
    %v408 = vpop.f32.mrf.mxu0
    %v409 = vadd.f32 0.0, %v408
    %410 = vdwg.mxu0
    %v415 = vperm.slane %v226, 0
    %v416 = vperm.slane %v226, 4
    %v417 = vperm.slane %v227, 0
    %v418 = vperm.slane %v227, 4
    %v419 = vperm.slane %v228, 0
    %v420 = vperm.slane %v228, 4
    %v421 = vperm.slane %v229, 0
    %v422 = vperm.slane %v229, 4
    %v431 = vperm.slane %v415, 0
    %v432 = vperm.slane %v416, 0
    %v433 = vperm.slane %v417, 0
    %v434 = vperm.slane %v418, 0
    %v435 = vperm.slane %v419, 0
    %v436 = vperm.slane %v420, 0
    %v437 = vperm.slane %v421, 0
    %v438 = vperm.slane %v422, 0
    %v439 = vmul.f32 %v269, %v431
    %v440 = vmul.f32 %v288, %v432
    %v441 = vmul.f32 %v307, %v433
    %v442 = vmul.f32 %v326, %v434
    %v443 = vmul.f32 %v345, %v435
    %v444 = vmul.f32 %v364, %v436
    %v445 = vmul.f32 %v383, %v437
    %v446 = vmul.f32 %v402, %v438
    %v447 = vmul.f32 %v271, %v431
    %v448 = vmul.f32 %v290, %v432
    %v449 = vmul.f32 %v309, %v433
    %v450 = vmul.f32 %v328, %v434
    %v451 = vmul.f32 %v347, %v435
    %v452 = vmul.f32 %v366, %v436
    %v453 = vmul.f32 %v385, %v437
    %v454 = vmul.f32 %v404, %v438
    %v455 = vperm.slane %v226, 1
    %v456 = vperm.slane %v226, 5
    %v457 = vperm.slane %v227, 1
    %v458 = vperm.slane %v227, 5
    %v459 = vperm.slane %v228, 1
    %v460 = vperm.slane %v228, 5
    %v461 = vperm.slane %v229, 1
    %v462 = vperm.slane %v229, 5
    %v471 = vperm.slane %v455, 1
    %v472 = vperm.slane %v456, 1
    %v473 = vperm.slane %v457, 1
    %v474 = vperm.slane %v458, 1
    %v475 = vperm.slane %v459, 1
    %v476 = vperm.slane %v460, 1
    %v477 = vperm.slane %v461, 1
    %v478 = vperm.slane %v462, 1
    %v479 = vmul.f32 %v274, %v471
    %v480 = vmul.f32 %v293, %v472
    %v481 = vmul.f32 %v312, %v473
    %v482 = vmul.f32 %v331, %v474
    %v483 = vmul.f32 %v350, %v475
    %v484 = vmul.f32 %v369, %v476
    %v485 = vmul.f32 %v388, %v477
    %v486 = vmul.f32 %v407, %v478
    %v487 = vmul.f32 %v276, %v471
    %v488 = vmul.f32 %v295, %v472
    %v489 = vmul.f32 %v314, %v473
    %v490 = vmul.f32 %v333, %v474
    %v491 = vmul.f32 %v352, %v475
    %v492 = vmul.f32 %v371, %v476
    %v493 = vmul.f32 %v390, %v477
    %v494 = vmul.f32 %v409, %v478
    %v495 = vsub.f32 %v439, %v479
    %v496 = vsub.f32 %v440, %v480
    %v497 = vsub.f32 %v441, %v481
    %v498 = vsub.f32 %v442, %v482
    %v499 = vsub.f32 %v443, %v483
    %v500 = vsub.f32 %v444, %v484
    %v501 = vsub.f32 %v445, %v485
    %v502 = vsub.f32 %v446, %v486
    %v503 = vsub.f32 %v447, %v487
    %v504 = vsub.f32 %v448, %v488
    %v505 = vsub.f32 %v449, %v489
    %v506 = vsub.f32 %v450, %v490
    %v507 = vsub.f32 %v451, %v491
    %v508 = vsub.f32 %v452, %v492
    %v509 = vsub.f32 %v453, %v493
    %v510 = vsub.f32 %v454, %v494
    %v511 = vperm.slane %v226, 2
    %v512 = vperm.slane %v226, 6
    %v513 = vperm.slane %v227, 2
    %v514 = vperm.slane %v227, 6
    %v515 = vperm.slane %v228, 2
    %v516 = vperm.slane %v228, 6
    %v517 = vperm.slane %v229, 2
    %v518 = vperm.slane %v229, 6
    %v527 = vperm.slane %v511, 2
    %v528 = vperm.slane %v512, 2
    %v529 = vperm.slane %v513, 2
    %v530 = vperm.slane %v514, 2
    %v531 = vperm.slane %v515, 2
    %v532 = vperm.slane %v516, 2
    %v533 = vperm.slane %v517, 2
    %v534 = vperm.slane %v518, 2
    %v535 = vadd.f32 %v495, %v527
    %v536 = vadd.f32 %v496, %v528
    %v537 = vadd.f32 %v497, %v529
    %v538 = vadd.f32 %v498, %v530
    %v539 = vadd.f32 %v499, %v531
    %v540 = vadd.f32 %v500, %v532
    %v541 = vadd.f32 %v501, %v533
    %v542 = vadd.f32 %v502, %v534
    %v543 = vadd.f32 %v503, %v527
    %v544 = vadd.f32 %v504, %v528
    %v545 = vadd.f32 %v505, %v529
    %v546 = vadd.f32 %v506, %v530
    %v547 = vadd.f32 %v507, %v531
    %v548 = vadd.f32 %v508, %v532
    %v549 = vadd.f32 %v509, %v533
    %v550 = vadd.f32 %v510, %v534
    %v551 = vmax.f32 %v535, 0.0
    %v552 = vmax.f32 %v536, 0.0
    %v553 = vmax.f32 %v537, 0.0
    %v554 = vmax.f32 %v538, 0.0
    %v555 = vmax.f32 %v539, 0.0
    %v556 = vmax.f32 %v540, 0.0
    %v557 = vmax.f32 %v541, 0.0
    %v558 = vmax.f32 %v542, 0.0
    %v559 = vmax.f32 %v543, 0.0
    %v560 = vmax.f32 %v544, 0.0
    %v561 = vmax.f32 %v545, 0.0
    %v562 = vmax.f32 %v546, 0.0
    %v563 = vmax.f32 %v547, 0.0
    %v564 = vmax.f32 %v548, 0.0
    %v565 = vmax.f32 %v549, 0.0
    %v566 = vmax.f32 %v550, 0.0
    %v567 = vmul.f32 %v274, %v431
    %v568 = vmul.f32 %v293, %v432
    %v569 = vmul.f32 %v312, %v433
    %v570 = vmul.f32 %v331, %v434
    %v571 = vmul.f32 %v350, %v435
    %v572 = vmul.f32 %v369, %v436
    %v573 = vmul.f32 %v388, %v437
    %v574 = vmul.f32 %v407, %v438
    %v575 = vmul.f32 %v276, %v431
    %v576 = vmul.f32 %v295, %v432
    %v577 = vmul.f32 %v314, %v433
    %v578 = vmul.f32 %v333, %v434
    %v579 = vmul.f32 %v352, %v435
    %v580 = vmul.f32 %v371, %v436
    %v581 = vmul.f32 %v390, %v437
    %v582 = vmul.f32 %v409, %v438
    %v583 = vmul.f32 %v269, %v471
    %v584 = vmul.f32 %v288, %v472
    %v585 = vmul.f32 %v307, %v473
    %v586 = vmul.f32 %v326, %v474
    %v587 = vmul.f32 %v345, %v475
    %v588 = vmul.f32 %v364, %v476
    %v589 = vmul.f32 %v383, %v477
    %v590 = vmul.f32 %v402, %v478
    %v591 = vmul.f32 %v271, %v471
    %v592 = vmul.f32 %v290, %v472
    %v593 = vmul.f32 %v309, %v473
    %v594 = vmul.f32 %v328, %v474
    %v595 = vmul.f32 %v347, %v475
    %v596 = vmul.f32 %v366, %v476
    %v597 = vmul.f32 %v385, %v477
    %v598 = vmul.f32 %v404, %v478
    %v599 = vadd.f32 %v567, %v583
    %v600 = vadd.f32 %v568, %v584
    %v601 = vadd.f32 %v569, %v585
    %v602 = vadd.f32 %v570, %v586
    %v603 = vadd.f32 %v571, %v587
    %v604 = vadd.f32 %v572, %v588
    %v605 = vadd.f32 %v573, %v589
    %v606 = vadd.f32 %v574, %v590
    %v607 = vadd.f32 %v575, %v591
    %v608 = vadd.f32 %v576, %v592
    %v609 = vadd.f32 %v577, %v593
    %v610 = vadd.f32 %v578, %v594
    %v611 = vadd.f32 %v579, %v595
    %v612 = vadd.f32 %v580, %v596
    %v613 = vadd.f32 %v581, %v597
    %v614 = vadd.f32 %v582, %v598
    %v615 = vperm.slane %v226, 3
    %v616 = vperm.slane %v226, 7
    %v617 = vperm.slane %v227, 3
    %v618 = vperm.slane %v227, 7
    %v619 = vperm.slane %v228, 3
    %v620 = vperm.slane %v228, 7
    %v621 = vperm.slane %v229, 3
    %v622 = vperm.slane %v229, 7
    %v631 = vperm.slane %v615, 3
    %v632 = vperm.slane %v616, 3
    %v633 = vperm.slane %v617, 3
    %v634 = vperm.slane %v618, 3
    %v635 = vperm.slane %v619, 3
    %v636 = vperm.slane %v620, 3
    %v637 = vperm.slane %v621, 3
    %v638 = vperm.slane %v622, 3
    %v639 = vadd.f32 %v599, %v631
    %v640 = vadd.f32 %v600, %v632
    %v641 = vadd.f32 %v601, %v633
    %v642 = vadd.f32 %v602, %v634
    %v643 = vadd.f32 %v603, %v635
    %v644 = vadd.f32 %v604, %v636
    %v645 = vadd.f32 %v605, %v637
    %v646 = vadd.f32 %v606, %v638
    %v647 = vadd.f32 %v607, %v631
    %v648 = vadd.f32 %v608, %v632
    %v649 = vadd.f32 %v609, %v633
    %v650 = vadd.f32 %v610, %v634
    %v651 = vadd.f32 %v611, %v635
    %v652 = vadd.f32 %v612, %v636
    %v653 = vadd.f32 %v613, %v637
    %v654 = vadd.f32 %v614, %v638
    %v655 = vmax.f32 %v639, 0.0
    %v656 = vmax.f32 %v640, 0.0
    %v657 = vmax.f32 %v641, 0.0
    %v658 = vmax.f32 %v642, 0.0
    %v659 = vmax.f32 %v643, 0.0
    %v660 = vmax.f32 %v644, 0.0
    %v661 = vmax.f32 %v645, 0.0
    %v662 = vmax.f32 %v646, 0.0
    %v663 = vmax.f32 %v647, 0.0
    %v664 = vmax.f32 %v648, 0.0
    %v665 = vmax.f32 %v649, 0.0
    %v666 = vmax.f32 %v650, 0.0
    %v667 = vmax.f32 %v651, 0.0
    %v668 = vmax.f32 %v652, 0.0
    %v669 = vmax.f32 %v653, 0.0
    %v670 = vmax.f32 %v654, 0.0
    %v671 = vpack.c.bf16 %v559, %v551
    %v672 = vpack.c.bf16 %v560, %v552
    %v673 = vpack.c.bf16 %v561, %v553
    %v674 = vpack.c.bf16 %v562, %v554
    %v675 = vpack.c.bf16 %v563, %v555
    %v676 = vpack.c.bf16 %v564, %v556
    %v677 = vpack.c.bf16 %v565, %v557
    %v678 = vpack.c.bf16 %v566, %v558
    %v679 = vpack.c.bf16 %v663, %v655
    %v680 = vpack.c.bf16 %v664, %v656
    %v681 = vpack.c.bf16 %v665, %v657
    %v682 = vpack.c.bf16 %v666, %v658
    %v683 = vpack.c.bf16 %v667, %v659
    %v684 = vpack.c.bf16 %v668, %v660
    %v685 = vpack.c.bf16 %v669, %v661
    %v686 = vpack.c.bf16 %v670, %v662
    %v687 = vld [vmem:[%s3] sm:$0xf]
    %v688 = vld [vmem:[%s3 + $0x4] sm:$0xf]
    %v691 = vunpack.c.l.b16 %v687
    %v692 = vunpack.c.l.b16 %v688
    %v693 = vpack.c.b16 %v692, %v691
    %vm694 = vcmask 261120
    %v696 = vsel %vm694, %v693, 0
    %698 = vmatpush.bf16.msra.mxu0 0
    %699 = vmatpush.bf16.msra.mxu0 0
    %700 = vmatpush.bf16.msra.mxu0 0
    %701 = vmatpush.bf16.msra.mxu0 0
    %702 = vmatpush.bf16.msra.mxu0 0
    %703 = vmatpush.bf16.msra.mxu0 0
    %704 = vmatpush.bf16.msra.mxu0 %v679
    %705 = vmatpush.bf16.msra.mxu0 %v671
    %706 = vmatmul.bf16.gmra.mxu0 %v696
    %v707 = vpop.f32.mrf.mxu0
    %v708 = vadd.f32 0.0, %v707
    %v709 = vpop.f32.mrf.mxu0
    %v710 = vadd.f32 0.0, %v709
    %711 = vdwg.mxu0
    %712 = vmatpush.bf16.msra.mxu0 0
    %713 = vmatpush.bf16.msra.mxu0 0
    %714 = vmatpush.bf16.msra.mxu0 0
    %715 = vmatpush.bf16.msra.mxu0 0
    %716 = vmatpush.bf16.msra.mxu0 0
    %717 = vmatpush.bf16.msra.mxu0 0
    %718 = vmatpush.bf16.msra.mxu0 %v680
    %719 = vmatpush.bf16.msra.mxu0 %v672
    %720 = vmatmul.bf16.gmra.mxu0 %v696
    %v721 = vpop.f32.mrf.mxu0
    %v722 = vadd.f32 0.0, %v721
    %v723 = vpop.f32.mrf.mxu0
    %v724 = vadd.f32 0.0, %v723
    %725 = vdwg.mxu0
    %726 = vmatpush.bf16.msra.mxu0 0
    %727 = vmatpush.bf16.msra.mxu0 0
    %728 = vmatpush.bf16.msra.mxu0 0
    %729 = vmatpush.bf16.msra.mxu0 0
    %730 = vmatpush.bf16.msra.mxu0 0
    %731 = vmatpush.bf16.msra.mxu0 0
    %732 = vmatpush.bf16.msra.mxu0 %v681
    %733 = vmatpush.bf16.msra.mxu0 %v673
    %734 = vmatmul.bf16.gmra.mxu0 %v696
    %v735 = vpop.f32.mrf.mxu0
    %v736 = vadd.f32 0.0, %v735
    %v737 = vpop.f32.mrf.mxu0
    %v738 = vadd.f32 0.0, %v737
    %739 = vdwg.mxu0
    %740 = vmatpush.bf16.msra.mxu0 0
    %741 = vmatpush.bf16.msra.mxu0 0
    %742 = vmatpush.bf16.msra.mxu0 0
    %743 = vmatpush.bf16.msra.mxu0 0
    %744 = vmatpush.bf16.msra.mxu0 0
    %745 = vmatpush.bf16.msra.mxu0 0
    %746 = vmatpush.bf16.msra.mxu0 %v682
    %747 = vmatpush.bf16.msra.mxu0 %v674
    %748 = vmatmul.bf16.gmra.mxu0 %v696
    %v749 = vpop.f32.mrf.mxu0
    %v750 = vadd.f32 0.0, %v749
    %v751 = vpop.f32.mrf.mxu0
    %v752 = vadd.f32 0.0, %v751
    %753 = vdwg.mxu0
    %754 = vmatpush.bf16.msra.mxu0 0
    %755 = vmatpush.bf16.msra.mxu0 0
    %756 = vmatpush.bf16.msra.mxu0 0
    %757 = vmatpush.bf16.msra.mxu0 0
    %758 = vmatpush.bf16.msra.mxu0 0
    %759 = vmatpush.bf16.msra.mxu0 0
    %760 = vmatpush.bf16.msra.mxu0 %v683
    %761 = vmatpush.bf16.msra.mxu0 %v675
    %762 = vmatmul.bf16.gmra.mxu0 %v696
    %v763 = vpop.f32.mrf.mxu0
    %v764 = vadd.f32 0.0, %v763
    %v765 = vpop.f32.mrf.mxu0
    %v766 = vadd.f32 0.0, %v765
    %767 = vdwg.mxu0
    %768 = vmatpush.bf16.msra.mxu0 0
    %769 = vmatpush.bf16.msra.mxu0 0
    %770 = vmatpush.bf16.msra.mxu0 0
    %771 = vmatpush.bf16.msra.mxu0 0
    %772 = vmatpush.bf16.msra.mxu0 0
    %773 = vmatpush.bf16.msra.mxu0 0
    %774 = vmatpush.bf16.msra.mxu0 %v684
    %775 = vmatpush.bf16.msra.mxu0 %v676
    %776 = vmatmul.bf16.gmra.mxu0 %v696
    %v777 = vpop.f32.mrf.mxu0
    %v778 = vadd.f32 0.0, %v777
    %v779 = vpop.f32.mrf.mxu0
    %v780 = vadd.f32 0.0, %v779
    %781 = vdwg.mxu0
    %782 = vmatpush.bf16.msra.mxu0 0
    %783 = vmatpush.bf16.msra.mxu0 0
    %784 = vmatpush.bf16.msra.mxu0 0
    %785 = vmatpush.bf16.msra.mxu0 0
    %786 = vmatpush.bf16.msra.mxu0 0
    %787 = vmatpush.bf16.msra.mxu0 0
    %788 = vmatpush.bf16.msra.mxu0 %v685
    %789 = vmatpush.bf16.msra.mxu0 %v677
    %790 = vmatmul.bf16.gmra.mxu0 %v696
    %v791 = vpop.f32.mrf.mxu0
    %v792 = vadd.f32 0.0, %v791
    %v793 = vpop.f32.mrf.mxu0
    %v794 = vadd.f32 0.0, %v793
    %795 = vdwg.mxu0
    %796 = vmatpush.bf16.msra.mxu0 0
    %797 = vmatpush.bf16.msra.mxu0 0
    %798 = vmatpush.bf16.msra.mxu0 0
    %799 = vmatpush.bf16.msra.mxu0 0
    %800 = vmatpush.bf16.msra.mxu0 0
    %801 = vmatpush.bf16.msra.mxu0 0
    %802 = vmatpush.bf16.msra.mxu0 %v686
    %803 = vmatpush.bf16.msra.mxu0 %v678
    %804 = vmatmul.bf16.gmra.mxu0 %v696
    %v805 = vpop.f32.mrf.mxu0
    %v806 = vadd.f32 0.0, %v805
    %v807 = vpop.f32.mrf.mxu0
    %v808 = vadd.f32 0.0, %v807
    %809 = vdwg.mxu0
    %v810 = vrot.slane %v736, 4
    %vm811 = vcmask 1047556
    %v812 = vsel %vm811, %v810, %v708
    %v813 = vrot.slane %v708, 4
    %v814 = vsel %vm811, %v736, %v813
    %v816 = vunpack.c.l.s4 1983009808
    %v817 = vunpack.c.0.s8 %v816
    %v818 = vperm.slane %v812, %v817
    %v820 = vunpack.c.l.s4 1983009808
    %v821 = vunpack.c.0.s8 %v820
    %v822 = vperm.slane %v814, %v821
    %v823 = vrot.slane %v750, 4
    %v824 = vsel %vm811, %v823, %v722
    %v825 = vrot.slane %v722, 4
    %v826 = vsel %vm811, %v750, %v825
    %v828 = vunpack.c.l.s4 1983009808
    %v829 = vunpack.c.0.s8 %v828
    %v830 = vperm.slane %v824, %v829
    %v832 = vunpack.c.l.s4 1983009808
    %v833 = vunpack.c.0.s8 %v832
    %v834 = vperm.slane %v826, %v833
    %v835 = vrot.slane %v792, 4
    %v836 = vsel %vm811, %v835, %v764
    %v837 = vrot.slane %v764, 4
    %v838 = vsel %vm811, %v792, %v837
    %v840 = vunpack.c.l.s4 1983009808
    %v841 = vunpack.c.0.s8 %v840
    %v842 = vperm.slane %v836, %v841
    %v844 = vunpack.c.l.s4 1983009808
    %v845 = vunpack.c.0.s8 %v844
    %v846 = vperm.slane %v838, %v845
    %v847 = vrot.slane %v806, 4
    %v848 = vsel %vm811, %v847, %v778
    %v849 = vrot.slane %v778, 4
    %v850 = vsel %vm811, %v806, %v849
    %v852 = vunpack.c.l.s4 1983009808
    %v853 = vunpack.c.0.s8 %v852
    %v854 = vperm.slane %v848, %v853
    %v856 = vunpack.c.l.s4 1983009808
    %v857 = vunpack.c.0.s8 %v856
    %v858 = vperm.slane %v850, %v857
    %v859 = vrot.slane %v830, 4
    %v860 = vsel %vm811, %v859, %v818
    %v861 = vrot.slane %v818, 4
    %v862 = vsel %vm811, %v830, %v861
    %v864 = vunpack.c.l.s4 1934713408
    %v865 = vunpack.c.0.s8 %v864
    %v866 = vperm.slane %v860, %v865
    %v868 = vunpack.c.l.s4 1934713408
    %v869 = vunpack.c.0.s8 %v868
    %v870 = vperm.slane %v862, %v869
    %v871 = vrot.slane %v834, 4
    %v872 = vsel %vm811, %v871, %v822
    %v873 = vrot.slane %v822, 4
    %v874 = vsel %vm811, %v834, %v873
    %v876 = vunpack.c.l.s4 1934713408
    %v877 = vunpack.c.0.s8 %v876
    %v878 = vperm.slane %v872, %v877
    %v880 = vunpack.c.l.s4 1934713408
    %v881 = vunpack.c.0.s8 %v880
    %v882 = vperm.slane %v874, %v881
    %v883 = vrot.slane %v854, 4
    %v884 = vsel %vm811, %v883, %v842
    %v885 = vrot.slane %v842, 4
    %v886 = vsel %vm811, %v854, %v885
    %v888 = vunpack.c.l.s4 1934713408
    %v889 = vunpack.c.0.s8 %v888
    %v890 = vperm.slane %v884, %v889
    %v892 = vunpack.c.l.s4 1934713408
    %v893 = vunpack.c.0.s8 %v892
    %v894 = vperm.slane %v886, %v893
    %v895 = vrot.slane %v858, 4
    %v896 = vsel %vm811, %v895, %v846
    %v897 = vrot.slane %v846, 4
    %v898 = vsel %vm811, %v858, %v897
    %v900 = vunpack.c.l.s4 1934713408
    %v901 = vunpack.c.0.s8 %v900
    %v902 = vperm.slane %v896, %v901
    %v904 = vunpack.c.l.s4 1934713408
    %v905 = vunpack.c.0.s8 %v904
    %v906 = vperm.slane %v898, %v905
    %v907 = vrot.slane %v890, 4
    %v908 = vsel %vm811, %v907, %v866
    %v909 = vrot.slane %v866, 4
    %v910 = vsel %vm811, %v890, %v909
    %v911 = vrot.slane %v894, 4
    %v912 = vsel %vm811, %v911, %v870
    %v913 = vrot.slane %v870, 4
    %v914 = vsel %vm811, %v894, %v913
    %v915 = vrot.slane %v902, 4
    %v916 = vsel %vm811, %v915, %v878
    %v917 = vrot.slane %v878, 4
    %v918 = vsel %vm811, %v902, %v917
    %v919 = vrot.slane %v906, 4
    %v920 = vsel %vm811, %v919, %v882
    %v921 = vrot.slane %v882, 4
    %v922 = vsel %vm811, %v906, %v921
    %v923 = vrot.slane %v738, 4
    %v924 = vsel %vm811, %v923, %v710
    %v925 = vrot.slane %v710, 4
    %v926 = vsel %vm811, %v738, %v925
    %v928 = vunpack.c.l.s4 1983009808
    %v929 = vunpack.c.0.s8 %v928
    %v930 = vperm.slane %v924, %v929
    %v932 = vunpack.c.l.s4 1983009808
    %v933 = vunpack.c.0.s8 %v932
    %v934 = vperm.slane %v926, %v933
    %v935 = vrot.slane %v752, 4
    %v936 = vsel %vm811, %v935, %v724
    %v937 = vrot.slane %v724, 4
    %v938 = vsel %vm811, %v752, %v937
    %v940 = vunpack.c.l.s4 1983009808
    %v941 = vunpack.c.0.s8 %v940
    %v942 = vperm.slane %v936, %v941
    %v944 = vunpack.c.l.s4 1983009808
    %v945 = vunpack.c.0.s8 %v944
    %v946 = vperm.slane %v938, %v945
    %v947 = vrot.slane %v794, 4
    %v948 = vsel %vm811, %v947, %v766
    %v949 = vrot.slane %v766, 4
    %v950 = vsel %vm811, %v794, %v949
    %v952 = vunpack.c.l.s4 1983009808
    %v953 = vunpack.c.0.s8 %v952
    %v954 = vperm.slane %v948, %v953
    %v956 = vunpack.c.l.s4 1983009808
    %v957 = vunpack.c.0.s8 %v956
    %v958 = vperm.slane %v950, %v957
    %v959 = vrot.slane %v808, 4
    %v960 = vsel %vm811, %v959, %v780
    %v961 = vrot.slane %v780, 4
    %v962 = vsel %vm811, %v808, %v961
    %v964 = vunpack.c.l.s4 1983009808
    %v965 = vunpack.c.0.s8 %v964
    %v966 = vperm.slane %v960, %v965
    %v968 = vunpack.c.l.s4 1983009808
    %v969 = vunpack.c.0.s8 %v968
    %v970 = vperm.slane %v962, %v969
    %v971 = vrot.slane %v942, 4
    %v972 = vsel %vm811, %v971, %v930
    %v973 = vrot.slane %v930, 4
    %v974 = vsel %vm811, %v942, %v973
    %v976 = vunpack.c.l.s4 1934713408
    %v977 = vunpack.c.0.s8 %v976
    %v978 = vperm.slane %v972, %v977
    %v980 = vunpack.c.l.s4 1934713408
    %v981 = vunpack.c.0.s8 %v980
    %v982 = vperm.slane %v974, %v981
    %v983 = vrot.slane %v946, 4
    %v984 = vsel %vm811, %v983, %v934
    %v985 = vrot.slane %v934, 4
    %v986 = vsel %vm811, %v946, %v985
    %v988 = vunpack.c.l.s4 1934713408
    %v989 = vunpack.c.0.s8 %v988
    %v990 = vperm.slane %v984, %v989
    %v992 = vunpack.c.l.s4 1934713408
    %v993 = vunpack.c.0.s8 %v992
    %v994 = vperm.slane %v986, %v993
    %v995 = vrot.slane %v966, 4
    %v996 = vsel %vm811, %v995, %v954
    %v997 = vrot.slane %v954, 4
    %v998 = vsel %vm811, %v966, %v997
    %v1000 = vunpack.c.l.s4 1934713408
    %v1001 = vunpack.c.0.s8 %v1000
    %v1002 = vperm.slane %v996, %v1001
    %v1004 = vunpack.c.l.s4 1934713408
    %v1005 = vunpack.c.0.s8 %v1004
    %v1006 = vperm.slane %v998, %v1005
    %v1007 = vrot.slane %v970, 4
    %v1008 = vsel %vm811, %v1007, %v958
    %v1009 = vrot.slane %v958, 4
    %v1010 = vsel %vm811, %v970, %v1009
    %v1012 = vunpack.c.l.s4 1934713408
    %v1013 = vunpack.c.0.s8 %v1012
    %v1014 = vperm.slane %v1008, %v1013
    %v1016 = vunpack.c.l.s4 1934713408
    %v1017 = vunpack.c.0.s8 %v1016
    %v1018 = vperm.slane %v1010, %v1017
    %v1019 = vrot.slane %v1002, 4
    %v1020 = vsel %vm811, %v1019, %v978
    %v1021 = vrot.slane %v978, 4
    %v1022 = vsel %vm811, %v1002, %v1021
    %v1023 = vrot.slane %v1006, 4
    %v1024 = vsel %vm811, %v1023, %v982
    %v1025 = vrot.slane %v982, 4
    %v1026 = vsel %vm811, %v1006, %v1025
    %v1027 = vrot.slane %v1014, 4
    %v1028 = vsel %vm811, %v1027, %v990
    %v1029 = vrot.slane %v990, 4
    %v1030 = vsel %vm811, %v1014, %v1029
    %v1031 = vrot.slane %v1018, 4
    %v1032 = vsel %vm811, %v1031, %v994
    %v1033 = vrot.slane %v994, 4
    %v1034 = vsel %vm811, %v1018, %v1033
    %v1035 = vpack.c.bf16 %v908, %v908
    %v1036 = vpack.c.bf16 %v910, %v910
    %v1037 = vpack.c.bf16 %v912, %v912
    %v1038 = vpack.c.bf16 %v914, %v914
    %v1039 = vpack.c.bf16 %v916, %v916
    %v1040 = vpack.c.bf16 %v918, %v918
    %v1041 = vpack.c.bf16 %v920, %v920
    %v1042 = vpack.c.bf16 %v922, %v922
    %v1043 = vpack.c.bf16 %v1020, %v1020
    %v1044 = vpack.c.bf16 %v1022, %v1022
    %v1045 = vpack.c.bf16 %v1024, %v1024
    %v1046 = vpack.c.bf16 %v1026, %v1026
    %v1047 = vpack.c.bf16 %v1028, %v1028
    %v1048 = vpack.c.bf16 %v1030, %v1030
    %v1049 = vpack.c.bf16 %v1032, %v1032
    %v1050 = vpack.c.bf16 %v1034, %v1034
    %v1051 = vld [vmem:[%s7] sm:$0xff]
    %v1052 = vld [vmem:[%s7 + $0x8] sm:$0xff]
    %v1053 = vld [vmem:[%s7 + $0x10] sm:$0xff]
    %v1054 = vld [vmem:[%s7 + $0x18] sm:$0xff]
    %v1055 = vld [vmem:[%s7 + $0x20] sm:$0xff]
    %v1056 = vld [vmem:[%s7 + $0x28] sm:$0xff]
    %v1057 = vld [vmem:[%s7 + $0x30] sm:$0xff]
    %v1058 = vld [vmem:[%s7 + $0x38] sm:$0xff]
    %v1059 = vld [vmem:[%s4] sm:$0xf]
    %v1060 = vld [vmem:[%s4 + $0x4] sm:$0xf]
    %v1063 = vunpack.c.l.b16 %v1059
    %v1064 = vunpack.c.l.b16 %v1060
    %v1065 = vpack.c.b16 %v1064, %v1063
    %v1067 = vsel %vm85, %v1065, 0
    %v1070 = vsel %vm89, %v1035, 0
    %v1073 = vsel %vm89, %v1036, 0
    %v1076 = vsel %vm89, %v1037, 0
    %v1079 = vsel %vm89, %v1038, 0
    %v1082 = vsel %vm89, %v1039, 0
    %v1085 = vsel %vm89, %v1040, 0
    %v1088 = vsel %vm89, %v1041, 0
    %v1091 = vsel %vm89, %v1042, 0
    %v1094 = vsel %vm89, %v1043, 0
    %v1097 = vsel %vm89, %v1044, 0
    %v1100 = vsel %vm89, %v1045, 0
    %v1103 = vsel %vm89, %v1046, 0
    %v1106 = vsel %vm89, %v1047, 0
    %v1109 = vsel %vm89, %v1048, 0
    %v1112 = vsel %vm89, %v1049, 0
    %v1115 = vsel %vm89, %v1050, 0
    %1117 = vmatpush.bf16.msra.mxu0 0
    %1118 = vmatpush.bf16.msra.mxu0 0
    %1119 = vmatpush.bf16.msra.mxu0 0
    %1120 = vmatpush.bf16.msra.mxu0 0
    %1121 = vmatpush.bf16.msra.mxu0 0
    %1122 = vmatpush.bf16.msra.mxu0 0
    %1123 = vmatpush.bf16.msra.mxu0 0
    %1124 = vmatpush.bf16.msra.mxu0 %v1070
    %1125 = vmatmul.bf16.gmra.mxu0 %v1067
    %v1126 = vpop.f32.mrf.mxu0
    %v1127 = vadd.f32 0.0, %v1126
    %v1128 = vpop.f32.mrf.mxu0
    %v1129 = vadd.f32 0.0, %v1128
    %1130 = vdwg.mxu0
    %1131 = vmatpush.bf16.msra.mxu0 0
    %1132 = vmatpush.bf16.msra.mxu0 0
    %1133 = vmatpush.bf16.msra.mxu0 0
    %1134 = vmatpush.bf16.msra.mxu0 0
    %1135 = vmatpush.bf16.msra.mxu0 0
    %1136 = vmatpush.bf16.msra.mxu0 0
    %1137 = vmatpush.bf16.msra.mxu0 0
    %1138 = vmatpush.bf16.msra.mxu0 %v1073
    %1139 = vmatmul.bf16.gmra.mxu0 %v1067
    %v1140 = vpop.f32.mrf.mxu0
    %v1141 = vadd.f32 0.0, %v1140
    %v1142 = vpop.f32.mrf.mxu0
    %v1143 = vadd.f32 0.0, %v1142
    %1144 = vdwg.mxu0
    %1145 = vmatpush.bf16.msra.mxu0 0
    %1146 = vmatpush.bf16.msra.mxu0 0
    %1147 = vmatpush.bf16.msra.mxu0 0
    %1148 = vmatpush.bf16.msra.mxu0 0
    %1149 = vmatpush.bf16.msra.mxu0 0
    %1150 = vmatpush.bf16.msra.mxu0 0
    %1151 = vmatpush.bf16.msra.mxu0 0
    %1152 = vmatpush.bf16.msra.mxu0 %v1076
    %1153 = vmatmul.bf16.gmra.mxu0 %v1067
    %v1154 = vpop.f32.mrf.mxu0
    %v1155 = vadd.f32 0.0, %v1154
    %v1156 = vpop.f32.mrf.mxu0
    %v1157 = vadd.f32 0.0, %v1156
    %1158 = vdwg.mxu0
    %1159 = vmatpush.bf16.msra.mxu0 0
    %1160 = vmatpush.bf16.msra.mxu0 0
    %1161 = vmatpush.bf16.msra.mxu0 0
    %1162 = vmatpush.bf16.msra.mxu0 0
    %1163 = vmatpush.bf16.msra.mxu0 0
    %1164 = vmatpush.bf16.msra.mxu0 0
    %1165 = vmatpush.bf16.msra.mxu0 0
    %1166 = vmatpush.bf16.msra.mxu0 %v1079
    %1167 = vmatmul.bf16.gmra.mxu0 %v1067
    %v1168 = vpop.f32.mrf.mxu0
    %v1169 = vadd.f32 0.0, %v1168
    %v1170 = vpop.f32.mrf.mxu0
    %v1171 = vadd.f32 0.0, %v1170
    %1172 = vdwg.mxu0
    %1173 = vmatpush.bf16.msra.mxu0 0
    %1174 = vmatpush.bf16.msra.mxu0 0
    %1175 = vmatpush.bf16.msra.mxu0 0
    %1176 = vmatpush.bf16.msra.mxu0 0
    %1177 = vmatpush.bf16.msra.mxu0 0
    %1178 = vmatpush.bf16.msra.mxu0 0
    %1179 = vmatpush.bf16.msra.mxu0 0
    %1180 = vmatpush.bf16.msra.mxu0 %v1082
    %1181 = vmatmul.bf16.gmra.mxu0 %v1067
    %v1182 = vpop.f32.mrf.mxu0
    %v1183 = vadd.f32 0.0, %v1182
    %v1184 = vpop.f32.mrf.mxu0
    %v1185 = vadd.f32 0.0, %v1184
    %1186 = vdwg.mxu0
    %1187 = vmatpush.bf16.msra.mxu0 0
    %1188 = vmatpush.bf16.msra.mxu0 0
    %1189 = vmatpush.bf16.msra.mxu0 0
    %1190 = vmatpush.bf16.msra.mxu0 0
    %1191 = vmatpush.bf16.msra.mxu0 0
    %1192 = vmatpush.bf16.msra.mxu0 0
    %1193 = vmatpush.bf16.msra.mxu0 0
    %1194 = vmatpush.bf16.msra.mxu0 %v1085
    %1195 = vmatmul.bf16.gmra.mxu0 %v1067
    %v1196 = vpop.f32.mrf.mxu0
    %v1197 = vadd.f32 0.0, %v1196
    %v1198 = vpop.f32.mrf.mxu0
    %v1199 = vadd.f32 0.0, %v1198
    %1200 = vdwg.mxu0
    %1201 = vmatpush.bf16.msra.mxu0 0
    %1202 = vmatpush.bf16.msra.mxu0 0
    %1203 = vmatpush.bf16.msra.mxu0 0
    %1204 = vmatpush.bf16.msra.mxu0 0
    %1205 = vmatpush.bf16.msra.mxu0 0
    %1206 = vmatpush.bf16.msra.mxu0 0
    %1207 = vmatpush.bf16.msra.mxu0 0
    %1208 = vmatpush.bf16.msra.mxu0 %v1088
    %1209 = vmatmul.bf16.gmra.mxu0 %v1067
    %v1210 = vpop.f32.mrf.mxu0
    %v1211 = vadd.f32 0.0, %v1210
    %v1212 = vpop.f32.mrf.mxu0
    %v1213 = vadd.f32 0.0, %v1212
    %1214 = vdwg.mxu0
    %1215 = vmatpush.bf16.msra.mxu0 0
    %1216 = vmatpush.bf16.msra.mxu0 0
    %1217 = vmatpush.bf16.msra.mxu0 0
    %1218 = vmatpush.bf16.msra.mxu0 0
    %1219 = vmatpush.bf16.msra.mxu0 0
    %1220 = vmatpush.bf16.msra.mxu0 0
    %1221 = vmatpush.bf16.msra.mxu0 0
    %1222 = vmatpush.bf16.msra.mxu0 %v1091
    %1223 = vmatmul.bf16.gmra.mxu0 %v1067
    %v1224 = vpop.f32.mrf.mxu0
    %v1225 = vadd.f32 0.0, %v1224
    %v1226 = vpop.f32.mrf.mxu0
    %v1227 = vadd.f32 0.0, %v1226
    %1228 = vdwg.mxu0
    %1229 = vmatpush.bf16.msra.mxu0 0
    %1230 = vmatpush.bf16.msra.mxu0 0
    %1231 = vmatpush.bf16.msra.mxu0 0
    %1232 = vmatpush.bf16.msra.mxu0 0
    %1233 = vmatpush.bf16.msra.mxu0 0
    %1234 = vmatpush.bf16.msra.mxu0 0
    %1235 = vmatpush.bf16.msra.mxu0 0
    %1236 = vmatpush.bf16.msra.mxu0 %v1094
    %1237 = vmatmul.bf16.gmra.mxu0 %v1067
    %v1238 = vpop.f32.mrf.mxu0
    %v1239 = vadd.f32 0.0, %v1238
    %v1240 = vpop.f32.mrf.mxu0
    %v1241 = vadd.f32 0.0, %v1240
    %1242 = vdwg.mxu0
    %1243 = vmatpush.bf16.msra.mxu0 0
    %1244 = vmatpush.bf16.msra.mxu0 0
    %1245 = vmatpush.bf16.msra.mxu0 0
    %1246 = vmatpush.bf16.msra.mxu0 0
    %1247 = vmatpush.bf16.msra.mxu0 0
    %1248 = vmatpush.bf16.msra.mxu0 0
    %1249 = vmatpush.bf16.msra.mxu0 0
    %1250 = vmatpush.bf16.msra.mxu0 %v1097
    %1251 = vmatmul.bf16.gmra.mxu0 %v1067
    %v1252 = vpop.f32.mrf.mxu0
    %v1253 = vadd.f32 0.0, %v1252
    %v1254 = vpop.f32.mrf.mxu0
    %v1255 = vadd.f32 0.0, %v1254
    %1256 = vdwg.mxu0
    %1257 = vmatpush.bf16.msra.mxu0 0
    %1258 = vmatpush.bf16.msra.mxu0 0
    %1259 = vmatpush.bf16.msra.mxu0 0
    %1260 = vmatpush.bf16.msra.mxu0 0
    %1261 = vmatpush.bf16.msra.mxu0 0
    %1262 = vmatpush.bf16.msra.mxu0 0
    %1263 = vmatpush.bf16.msra.mxu0 0
    %1264 = vmatpush.bf16.msra.mxu0 %v1100
    %1265 = vmatmul.bf16.gmra.mxu0 %v1067
    %v1266 = vpop.f32.mrf.mxu0
    %v1267 = vadd.f32 0.0, %v1266
    %v1268 = vpop.f32.mrf.mxu0
    %v1269 = vadd.f32 0.0, %v1268
    %1270 = vdwg.mxu0
    %1271 = vmatpush.bf16.msra.mxu0 0
    %1272 = vmatpush.bf16.msra.mxu0 0
    %1273 = vmatpush.bf16.msra.mxu0 0
    %1274 = vmatpush.bf16.msra.mxu0 0
    %1275 = vmatpush.bf16.msra.mxu0 0
    %1276 = vmatpush.bf16.msra.mxu0 0
    %1277 = vmatpush.bf16.msra.mxu0 0
    %1278 = vmatpush.bf16.msra.mxu0 %v1103
    %1279 = vmatmul.bf16.gmra.mxu0 %v1067
    %v1280 = vpop.f32.mrf.mxu0
    %v1281 = vadd.f32 0.0, %v1280
    %v1282 = vpop.f32.mrf.mxu0
    %v1283 = vadd.f32 0.0, %v1282
    %1284 = vdwg.mxu0
    %1285 = vmatpush.bf16.msra.mxu0 0
    %1286 = vmatpush.bf16.msra.mxu0 0
    %1287 = vmatpush.bf16.msra.mxu0 0
    %1288 = vmatpush.bf16.msra.mxu0 0
    %1289 = vmatpush.bf16.msra.mxu0 0
    %1290 = vmatpush.bf16.msra.mxu0 0
    %1291 = vmatpush.bf16.msra.mxu0 0
    %1292 = vmatpush.bf16.msra.mxu0 %v1106
    %1293 = vmatmul.bf16.gmra.mxu0 %v1067
    %v1294 = vpop.f32.mrf.mxu0
    %v1295 = vadd.f32 0.0, %v1294
    %v1296 = vpop.f32.mrf.mxu0
    %v1297 = vadd.f32 0.0, %v1296
    %1298 = vdwg.mxu0
    %1299 = vmatpush.bf16.msra.mxu0 0
    %1300 = vmatpush.bf16.msra.mxu0 0
    %1301 = vmatpush.bf16.msra.mxu0 0
    %1302 = vmatpush.bf16.msra.mxu0 0
    %1303 = vmatpush.bf16.msra.mxu0 0
    %1304 = vmatpush.bf16.msra.mxu0 0
    %1305 = vmatpush.bf16.msra.mxu0 0
    %1306 = vmatpush.bf16.msra.mxu0 %v1109
    %1307 = vmatmul.bf16.gmra.mxu0 %v1067
    %v1308 = vpop.f32.mrf.mxu0
    %v1309 = vadd.f32 0.0, %v1308
    %v1310 = vpop.f32.mrf.mxu0
    %v1311 = vadd.f32 0.0, %v1310
    %1312 = vdwg.mxu0
    %1313 = vmatpush.bf16.msra.mxu0 0
    %1314 = vmatpush.bf16.msra.mxu0 0
    %1315 = vmatpush.bf16.msra.mxu0 0
    %1316 = vmatpush.bf16.msra.mxu0 0
    %1317 = vmatpush.bf16.msra.mxu0 0
    %1318 = vmatpush.bf16.msra.mxu0 0
    %1319 = vmatpush.bf16.msra.mxu0 0
    %1320 = vmatpush.bf16.msra.mxu0 %v1112
    %1321 = vmatmul.bf16.gmra.mxu0 %v1067
    %v1322 = vpop.f32.mrf.mxu0
    %v1323 = vadd.f32 0.0, %v1322
    %v1324 = vpop.f32.mrf.mxu0
    %v1325 = vadd.f32 0.0, %v1324
    %1326 = vdwg.mxu0
    %1327 = vmatpush.bf16.msra.mxu0 0
    %1328 = vmatpush.bf16.msra.mxu0 0
    %1329 = vmatpush.bf16.msra.mxu0 0
    %1330 = vmatpush.bf16.msra.mxu0 0
    %1331 = vmatpush.bf16.msra.mxu0 0
    %1332 = vmatpush.bf16.msra.mxu0 0
    %1333 = vmatpush.bf16.msra.mxu0 0
    %1334 = vmatpush.bf16.msra.mxu0 %v1115
    %1335 = vmatmul.bf16.gmra.mxu0 %v1067
    %v1336 = vpop.f32.mrf.mxu0
    %v1337 = vadd.f32 0.0, %v1336
    %v1338 = vpop.f32.mrf.mxu0
    %v1339 = vadd.f32 0.0, %v1338
    %1340 = vdwg.mxu0
    %v1349 = vperm.slane %v1051, 0
    %v1350 = vperm.slane %v1051, 4
    %v1351 = vperm.slane %v1052, 0
    %v1352 = vperm.slane %v1052, 4
    %v1353 = vperm.slane %v1053, 0
    %v1354 = vperm.slane %v1053, 4
    %v1355 = vperm.slane %v1054, 0
    %v1356 = vperm.slane %v1054, 4
    %v1357 = vperm.slane %v1055, 0
    %v1358 = vperm.slane %v1055, 4
    %v1359 = vperm.slane %v1056, 0
    %v1360 = vperm.slane %v1056, 4
    %v1361 = vperm.slane %v1057, 0
    %v1362 = vperm.slane %v1057, 4
    %v1363 = vperm.slane %v1058, 0
    %v1364 = vperm.slane %v1058, 4
    %v1381 = vperm.slane %v1349, 0
    %v1382 = vperm.slane %v1350, 0
    %v1383 = vperm.slane %v1351, 0
    %v1384 = vperm.slane %v1352, 0
    %v1385 = vperm.slane %v1353, 0
    %v1386 = vperm.slane %v1354, 0
    %v1387 = vperm.slane %v1355, 0
    %v1388 = vperm.slane %v1356, 0
    %v1389 = vperm.slane %v1357, 0
    %v1390 = vperm.slane %v1358, 0
    %v1391 = vperm.slane %v1359, 0
    %v1392 = vperm.slane %v1360, 0
    %v1393 = vperm.slane %v1361, 0
    %v1394 = vperm.slane %v1362, 0
    %v1395 = vperm.slane %v1363, 0
    %v1396 = vperm.slane %v1364, 0
    %v1397 = vmul.f32 %v1127, %v1381
    %v1398 = vmul.f32 %v1141, %v1382
    %v1399 = vmul.f32 %v1155, %v1383
    %v1400 = vmul.f32 %v1169, %v1384
    %v1401 = vmul.f32 %v1183, %v1385
    %v1402 = vmul.f32 %v1197, %v1386
    %v1403 = vmul.f32 %v1211, %v1387
    %v1404 = vmul.f32 %v1225, %v1388
    %v1405 = vmul.f32 %v1239, %v1389
    %v1406 = vmul.f32 %v1253, %v1390
    %v1407 = vmul.f32 %v1267, %v1391
    %v1408 = vmul.f32 %v1281, %v1392
    %v1409 = vmul.f32 %v1295, %v1393
    %v1410 = vmul.f32 %v1309, %v1394
    %v1411 = vmul.f32 %v1323, %v1395
    %v1412 = vmul.f32 %v1337, %v1396
    %v1413 = vperm.slane %v1051, 1
    %v1414 = vperm.slane %v1051, 5
    %v1415 = vperm.slane %v1052, 1
    %v1416 = vperm.slane %v1052, 5
    %v1417 = vperm.slane %v1053, 1
    %v1418 = vperm.slane %v1053, 5
    %v1419 = vperm.slane %v1054, 1
    %v1420 = vperm.slane %v1054, 5
    %v1421 = vperm.slane %v1055, 1
    %v1422 = vperm.slane %v1055, 5
    %v1423 = vperm.slane %v1056, 1
    %v1424 = vperm.slane %v1056, 5
    %v1425 = vperm.slane %v1057, 1
    %v1426 = vperm.slane %v1057, 5
    %v1427 = vperm.slane %v1058, 1
    %v1428 = vperm.slane %v1058, 5
    %v1445 = vperm.slane %v1413, 1
    %v1446 = vperm.slane %v1414, 1
    %v1447 = vperm.slane %v1415, 1
    %v1448 = vperm.slane %v1416, 1
    %v1449 = vperm.slane %v1417, 1
    %v1450 = vperm.slane %v1418, 1
    %v1451 = vperm.slane %v1419, 1
    %v1452 = vperm.slane %v1420, 1
    %v1453 = vperm.slane %v1421, 1
    %v1454 = vperm.slane %v1422, 1
    %v1455 = vperm.slane %v1423, 1
    %v1456 = vperm.slane %v1424, 1
    %v1457 = vperm.slane %v1425, 1
    %v1458 = vperm.slane %v1426, 1
    %v1459 = vperm.slane %v1427, 1
    %v1460 = vperm.slane %v1428, 1
    %v1461 = vmul.f32 %v1129, %v1445
    %v1462 = vmul.f32 %v1143, %v1446
    %v1463 = vmul.f32 %v1157, %v1447
    %v1464 = vmul.f32 %v1171, %v1448
    %v1465 = vmul.f32 %v1185, %v1449
    %v1466 = vmul.f32 %v1199, %v1450
    %v1467 = vmul.f32 %v1213, %v1451
    %v1468 = vmul.f32 %v1227, %v1452
    %v1469 = vmul.f32 %v1241, %v1453
    %v1470 = vmul.f32 %v1255, %v1454
    %v1471 = vmul.f32 %v1269, %v1455
    %v1472 = vmul.f32 %v1283, %v1456
    %v1473 = vmul.f32 %v1297, %v1457
    %v1474 = vmul.f32 %v1311, %v1458
    %v1475 = vmul.f32 %v1325, %v1459
    %v1476 = vmul.f32 %v1339, %v1460
    %v1477 = vsub.f32 %v1397, %v1461
    %v1478 = vsub.f32 %v1398, %v1462
    %v1479 = vsub.f32 %v1399, %v1463
    %v1480 = vsub.f32 %v1400, %v1464
    %v1481 = vsub.f32 %v1401, %v1465
    %v1482 = vsub.f32 %v1402, %v1466
    %v1483 = vsub.f32 %v1403, %v1467
    %v1484 = vsub.f32 %v1404, %v1468
    %v1485 = vsub.f32 %v1405, %v1469
    %v1486 = vsub.f32 %v1406, %v1470
    %v1487 = vsub.f32 %v1407, %v1471
    %v1488 = vsub.f32 %v1408, %v1472
    %v1489 = vsub.f32 %v1409, %v1473
    %v1490 = vsub.f32 %v1410, %v1474
    %v1491 = vsub.f32 %v1411, %v1475
    %v1492 = vsub.f32 %v1412, %v1476
    %v1493 = vperm.slane %v1051, 2
    %v1494 = vperm.slane %v1051, 6
    %v1495 = vperm.slane %v1052, 2
    %v1496 = vperm.slane %v1052, 6
    %v1497 = vperm.slane %v1053, 2
    %v1498 = vperm.slane %v1053, 6
    %v1499 = vperm.slane %v1054, 2
    %v1500 = vperm.slane %v1054, 6
    %v1501 = vperm.slane %v1055, 2
    %v1502 = vperm.slane %v1055, 6
    %v1503 = vperm.slane %v1056, 2
    %v1504 = vperm.slane %v1056, 6
    %v1505 = vperm.slane %v1057, 2
    %v1506 = vperm.slane %v1057, 6
    %v1507 = vperm.slane %v1058, 2
    %v1508 = vperm.slane %v1058, 6
    %v1525 = vperm.slane %v1493, 2
    %v1526 = vperm.slane %v1494, 2
    %v1527 = vperm.slane %v1495, 2
    %v1528 = vperm.slane %v1496, 2
    %v1529 = vperm.slane %v1497, 2
    %v1530 = vperm.slane %v1498, 2
    %v1531 = vperm.slane %v1499, 2
    %v1532 = vperm.slane %v1500, 2
    %v1533 = vperm.slane %v1501, 2
    %v1534 = vperm.slane %v1502, 2
    %v1535 = vperm.slane %v1503, 2
    %v1536 = vperm.slane %v1504, 2
    %v1537 = vperm.slane %v1505, 2
    %v1538 = vperm.slane %v1506, 2
    %v1539 = vperm.slane %v1507, 2
    %v1540 = vperm.slane %v1508, 2
    %v1541 = vadd.f32 %v1477, %v1525
    %v1542 = vadd.f32 %v1478, %v1526
    %v1543 = vadd.f32 %v1479, %v1527
    %v1544 = vadd.f32 %v1480, %v1528
    %v1545 = vadd.f32 %v1481, %v1529
    %v1546 = vadd.f32 %v1482, %v1530
    %v1547 = vadd.f32 %v1483, %v1531
    %v1548 = vadd.f32 %v1484, %v1532
    %v1549 = vadd.f32 %v1485, %v1533
    %v1550 = vadd.f32 %v1486, %v1534
    %v1551 = vadd.f32 %v1487, %v1535
    %v1552 = vadd.f32 %v1488, %v1536
    %v1553 = vadd.f32 %v1489, %v1537
    %v1554 = vadd.f32 %v1490, %v1538
    %v1555 = vadd.f32 %v1491, %v1539
    %v1556 = vadd.f32 %v1492, %v1540
    %v1557 = vmax.f32 %v1541, 0.0
    %v1558 = vmax.f32 %v1542, 0.0
    %v1559 = vmax.f32 %v1543, 0.0
    %v1560 = vmax.f32 %v1544, 0.0
    %v1561 = vmax.f32 %v1545, 0.0
    %v1562 = vmax.f32 %v1546, 0.0
    %v1563 = vmax.f32 %v1547, 0.0
    %v1564 = vmax.f32 %v1548, 0.0
    %v1565 = vmax.f32 %v1549, 0.0
    %v1566 = vmax.f32 %v1550, 0.0
    %v1567 = vmax.f32 %v1551, 0.0
    %v1568 = vmax.f32 %v1552, 0.0
    %v1569 = vmax.f32 %v1553, 0.0
    %v1570 = vmax.f32 %v1554, 0.0
    %v1571 = vmax.f32 %v1555, 0.0
    %v1572 = vmax.f32 %v1556, 0.0
    %v1573 = vmul.f32 %v1129, %v1381
    %v1574 = vmul.f32 %v1143, %v1382
    %v1575 = vmul.f32 %v1157, %v1383
    %v1576 = vmul.f32 %v1171, %v1384
    %v1577 = vmul.f32 %v1185, %v1385
    %v1578 = vmul.f32 %v1199, %v1386
    %v1579 = vmul.f32 %v1213, %v1387
    %v1580 = vmul.f32 %v1227, %v1388
    %v1581 = vmul.f32 %v1241, %v1389
    %v1582 = vmul.f32 %v1255, %v1390
    %v1583 = vmul.f32 %v1269, %v1391
    %v1584 = vmul.f32 %v1283, %v1392
    %v1585 = vmul.f32 %v1297, %v1393
    %v1586 = vmul.f32 %v1311, %v1394
    %v1587 = vmul.f32 %v1325, %v1395
    %v1588 = vmul.f32 %v1339, %v1396
    %v1589 = vmul.f32 %v1127, %v1445
    %v1590 = vmul.f32 %v1141, %v1446
    %v1591 = vmul.f32 %v1155, %v1447
    %v1592 = vmul.f32 %v1169, %v1448
    %v1593 = vmul.f32 %v1183, %v1449
    %v1594 = vmul.f32 %v1197, %v1450
    %v1595 = vmul.f32 %v1211, %v1451
    %v1596 = vmul.f32 %v1225, %v1452
    %v1597 = vmul.f32 %v1239, %v1453
    %v1598 = vmul.f32 %v1253, %v1454
    %v1599 = vmul.f32 %v1267, %v1455
    %v1600 = vmul.f32 %v1281, %v1456
    %v1601 = vmul.f32 %v1295, %v1457
    %v1602 = vmul.f32 %v1309, %v1458
    %v1603 = vmul.f32 %v1323, %v1459
    %v1604 = vmul.f32 %v1337, %v1460
    %v1605 = vadd.f32 %v1573, %v1589
    %v1606 = vadd.f32 %v1574, %v1590
    %v1607 = vadd.f32 %v1575, %v1591
    %v1608 = vadd.f32 %v1576, %v1592
    %v1609 = vadd.f32 %v1577, %v1593
    %v1610 = vadd.f32 %v1578, %v1594
    %v1611 = vadd.f32 %v1579, %v1595
    %v1612 = vadd.f32 %v1580, %v1596
    %v1613 = vadd.f32 %v1581, %v1597
    %v1614 = vadd.f32 %v1582, %v1598
    %v1615 = vadd.f32 %v1583, %v1599
    %v1616 = vadd.f32 %v1584, %v1600
    %v1617 = vadd.f32 %v1585, %v1601
    %v1618 = vadd.f32 %v1586, %v1602
    %v1619 = vadd.f32 %v1587, %v1603
    %v1620 = vadd.f32 %v1588, %v1604
    %v1621 = vperm.slane %v1051, 3
    %v1622 = vperm.slane %v1051, 7
    %v1623 = vperm.slane %v1052, 3
    %v1624 = vperm.slane %v1052, 7
    %v1625 = vperm.slane %v1053, 3
    %v1626 = vperm.slane %v1053, 7
    %v1627 = vperm.slane %v1054, 3
    %v1628 = vperm.slane %v1054, 7
    %v1629 = vperm.slane %v1055, 3
    %v1630 = vperm.slane %v1055, 7
    %v1631 = vperm.slane %v1056, 3
    %v1632 = vperm.slane %v1056, 7
    %v1633 = vperm.slane %v1057, 3
    %v1634 = vperm.slane %v1057, 7
    %v1635 = vperm.slane %v1058, 3
    %v1636 = vperm.slane %v1058, 7
    %v1653 = vperm.slane %v1621, 3
    %v1654 = vperm.slane %v1622, 3
    %v1655 = vperm.slane %v1623, 3
    %v1656 = vperm.slane %v1624, 3
    %v1657 = vperm.slane %v1625, 3
    %v1658 = vperm.slane %v1626, 3
    %v1659 = vperm.slane %v1627, 3
    %v1660 = vperm.slane %v1628, 3
    %v1661 = vperm.slane %v1629, 3
    %v1662 = vperm.slane %v1630, 3
    %v1663 = vperm.slane %v1631, 3
    %v1664 = vperm.slane %v1632, 3
    %v1665 = vperm.slane %v1633, 3
    %v1666 = vperm.slane %v1634, 3
    %v1667 = vperm.slane %v1635, 3
    %v1668 = vperm.slane %v1636, 3
    %v1669 = vadd.f32 %v1605, %v1653
    %v1670 = vadd.f32 %v1606, %v1654
    %v1671 = vadd.f32 %v1607, %v1655
    %v1672 = vadd.f32 %v1608, %v1656
    %v1673 = vadd.f32 %v1609, %v1657
    %v1674 = vadd.f32 %v1610, %v1658
    %v1675 = vadd.f32 %v1611, %v1659
    %v1676 = vadd.f32 %v1612, %v1660
    %v1677 = vadd.f32 %v1613, %v1661
    %v1678 = vadd.f32 %v1614, %v1662
    %v1679 = vadd.f32 %v1615, %v1663
    %v1680 = vadd.f32 %v1616, %v1664
    %v1681 = vadd.f32 %v1617, %v1665
    %v1682 = vadd.f32 %v1618, %v1666
    %v1683 = vadd.f32 %v1619, %v1667
    %v1684 = vadd.f32 %v1620, %v1668
    %v1685 = vmax.f32 %v1669, 0.0
    %v1686 = vmax.f32 %v1670, 0.0
    %v1687 = vmax.f32 %v1671, 0.0
    %v1688 = vmax.f32 %v1672, 0.0
    %v1689 = vmax.f32 %v1673, 0.0
    %v1690 = vmax.f32 %v1674, 0.0
    %v1691 = vmax.f32 %v1675, 0.0
    %v1692 = vmax.f32 %v1676, 0.0
    %v1693 = vmax.f32 %v1677, 0.0
    %v1694 = vmax.f32 %v1678, 0.0
    %v1695 = vmax.f32 %v1679, 0.0
    %v1696 = vmax.f32 %v1680, 0.0
    %v1697 = vmax.f32 %v1681, 0.0
    %v1698 = vmax.f32 %v1682, 0.0
    %v1699 = vmax.f32 %v1683, 0.0
    %v1700 = vmax.f32 %v1684, 0.0
    %v1701 = vpack.c.bf16 %v1685, %v1557
    %v1702 = vpack.c.bf16 %v1686, %v1558
    %v1703 = vpack.c.bf16 %v1687, %v1559
    %v1704 = vpack.c.bf16 %v1688, %v1560
    %v1705 = vpack.c.bf16 %v1689, %v1561
    %v1706 = vpack.c.bf16 %v1690, %v1562
    %v1707 = vpack.c.bf16 %v1691, %v1563
    %v1708 = vpack.c.bf16 %v1692, %v1564
    %v1709 = vpack.c.bf16 %v1693, %v1565
    %v1710 = vpack.c.bf16 %v1694, %v1566
    %v1711 = vpack.c.bf16 %v1695, %v1567
    %v1712 = vpack.c.bf16 %v1696, %v1568
    %v1713 = vpack.c.bf16 %v1697, %v1569
    %v1714 = vpack.c.bf16 %v1698, %v1570
    %v1715 = vpack.c.bf16 %v1699, %v1571
    %v1716 = vpack.c.bf16 %v1700, %v1572
    %v1717 = vld [vmem:[%s5] sm:$0xf]
    %v1719 = vsel %vm252, %v1717, 0
    %1721 = vmatpush.bf16.msra.mxu0 0
    %1722 = vmatpush.bf16.msra.mxu0 0
    %1723 = vmatpush.bf16.msra.mxu0 0
    %1724 = vmatpush.bf16.msra.mxu0 0
    %1725 = vmatpush.bf16.msra.mxu0 0
    %1726 = vmatpush.bf16.msra.mxu0 0
    %1727 = vmatpush.bf16.msra.mxu0 0
    %1728 = vmatpush.bf16.msra.mxu0 %v1701
    %1729 = vmatmul.bf16.gmra.mxu0 %v1719
    %v1730 = vpop.f32.mrf.mxu0
    %v1731 = vadd.f32 0.0, %v1730
    %v1732 = vpop.f32.mrf.mxu0
    %1733 = vdwg.mxu0
    %1734 = vmatpush.bf16.msra.mxu0 0
    %1735 = vmatpush.bf16.msra.mxu0 0
    %1736 = vmatpush.bf16.msra.mxu0 0
    %1737 = vmatpush.bf16.msra.mxu0 0
    %1738 = vmatpush.bf16.msra.mxu0 0
    %1739 = vmatpush.bf16.msra.mxu0 0
    %1740 = vmatpush.bf16.msra.mxu0 0
    %1741 = vmatpush.bf16.msra.mxu0 %v1702
    %1742 = vmatmul.bf16.gmra.mxu0 %v1719
    %v1743 = vpop.f32.mrf.mxu0
    %v1744 = vadd.f32 0.0, %v1743
    %v1745 = vpop.f32.mrf.mxu0
    %1746 = vdwg.mxu0
    %1747 = vmatpush.bf16.msra.mxu0 0
    %1748 = vmatpush.bf16.msra.mxu0 0
    %1749 = vmatpush.bf16.msra.mxu0 0
    %1750 = vmatpush.bf16.msra.mxu0 0
    %1751 = vmatpush.bf16.msra.mxu0 0
    %1752 = vmatpush.bf16.msra.mxu0 0
    %1753 = vmatpush.bf16.msra.mxu0 0
    %1754 = vmatpush.bf16.msra.mxu0 %v1703
    %1755 = vmatmul.bf16.gmra.mxu0 %v1719
    %v1756 = vpop.f32.mrf.mxu0
    %v1757 = vadd.f32 0.0, %v1756
    %v1758 = vpop.f32.mrf.mxu0
    %1759 = vdwg.mxu0
    %1760 = vmatpush.bf16.msra.mxu0 0
    %1761 = vmatpush.bf16.msra.mxu0 0
    %1762 = vmatpush.bf16.msra.mxu0 0
    %1763 = vmatpush.bf16.msra.mxu0 0
    %1764 = vmatpush.bf16.msra.mxu0 0
    %1765 = vmatpush.bf16.msra.mxu0 0
    %1766 = vmatpush.bf16.msra.mxu0 0
    %1767 = vmatpush.bf16.msra.mxu0 %v1704
    %1768 = vmatmul.bf16.gmra.mxu0 %v1719
    %v1769 = vpop.f32.mrf.mxu0
    %v1770 = vadd.f32 0.0, %v1769
    %v1771 = vpop.f32.mrf.mxu0
    %1772 = vdwg.mxu0
    %1773 = vmatpush.bf16.msra.mxu0 0
    %1774 = vmatpush.bf16.msra.mxu0 0
    %1775 = vmatpush.bf16.msra.mxu0 0
    %1776 = vmatpush.bf16.msra.mxu0 0
    %1777 = vmatpush.bf16.msra.mxu0 0
    %1778 = vmatpush.bf16.msra.mxu0 0
    %1779 = vmatpush.bf16.msra.mxu0 0
    %1780 = vmatpush.bf16.msra.mxu0 %v1705
    %1781 = vmatmul.bf16.gmra.mxu0 %v1719
    %v1782 = vpop.f32.mrf.mxu0
    %v1783 = vadd.f32 0.0, %v1782
    %v1784 = vpop.f32.mrf.mxu0
    %1785 = vdwg.mxu0
    %1786 = vmatpush.bf16.msra.mxu0 0
    %1787 = vmatpush.bf16.msra.mxu0 0
    %1788 = vmatpush.bf16.msra.mxu0 0
    %1789 = vmatpush.bf16.msra.mxu0 0
    %1790 = vmatpush.bf16.msra.mxu0 0
    %1791 = vmatpush.bf16.msra.mxu0 0
    %1792 = vmatpush.bf16.msra.mxu0 0
    %1793 = vmatpush.bf16.msra.mxu0 %v1706
    %1794 = vmatmul.bf16.gmra.mxu0 %v1719
    %v1795 = vpop.f32.mrf.mxu0
    %v1796 = vadd.f32 0.0, %v1795
    %v1797 = vpop.f32.mrf.mxu0
    %1798 = vdwg.mxu0
    %1799 = vmatpush.bf16.msra.mxu0 0
    %1800 = vmatpush.bf16.msra.mxu0 0
    %1801 = vmatpush.bf16.msra.mxu0 0
    %1802 = vmatpush.bf16.msra.mxu0 0
    %1803 = vmatpush.bf16.msra.mxu0 0
    %1804 = vmatpush.bf16.msra.mxu0 0
    %1805 = vmatpush.bf16.msra.mxu0 0
    %1806 = vmatpush.bf16.msra.mxu0 %v1707
    %1807 = vmatmul.bf16.gmra.mxu0 %v1719
    %v1808 = vpop.f32.mrf.mxu0
    %v1809 = vadd.f32 0.0, %v1808
    %v1810 = vpop.f32.mrf.mxu0
    %1811 = vdwg.mxu0
    %1812 = vmatpush.bf16.msra.mxu0 0
    %1813 = vmatpush.bf16.msra.mxu0 0
    %1814 = vmatpush.bf16.msra.mxu0 0
    %1815 = vmatpush.bf16.msra.mxu0 0
    %1816 = vmatpush.bf16.msra.mxu0 0
    %1817 = vmatpush.bf16.msra.mxu0 0
    %1818 = vmatpush.bf16.msra.mxu0 0
    %1819 = vmatpush.bf16.msra.mxu0 %v1708
    %1820 = vmatmul.bf16.gmra.mxu0 %v1719
    %v1821 = vpop.f32.mrf.mxu0
    %v1822 = vadd.f32 0.0, %v1821
    %v1823 = vpop.f32.mrf.mxu0
    %1824 = vdwg.mxu0
    %1825 = vmatpush.bf16.msra.mxu0 0
    %1826 = vmatpush.bf16.msra.mxu0 0
    %1827 = vmatpush.bf16.msra.mxu0 0
    %1828 = vmatpush.bf16.msra.mxu0 0
    %1829 = vmatpush.bf16.msra.mxu0 0
    %1830 = vmatpush.bf16.msra.mxu0 0
    %1831 = vmatpush.bf16.msra.mxu0 0
    %1832 = vmatpush.bf16.msra.mxu0 %v1709
    %1833 = vmatmul.bf16.gmra.mxu0 %v1719
    %v1834 = vpop.f32.mrf.mxu0
    %v1835 = vadd.f32 0.0, %v1834
    %v1836 = vpop.f32.mrf.mxu0
    %1837 = vdwg.mxu0
    %1838 = vmatpush.bf16.msra.mxu0 0
    %1839 = vmatpush.bf16.msra.mxu0 0
    %1840 = vmatpush.bf16.msra.mxu0 0
    %1841 = vmatpush.bf16.msra.mxu0 0
    %1842 = vmatpush.bf16.msra.mxu0 0
    %1843 = vmatpush.bf16.msra.mxu0 0
    %1844 = vmatpush.bf16.msra.mxu0 0
    %1845 = vmatpush.bf16.msra.mxu0 %v1710
    %1846 = vmatmul.bf16.gmra.mxu0 %v1719
    %v1847 = vpop.f32.mrf.mxu0
    %v1848 = vadd.f32 0.0, %v1847
    %v1849 = vpop.f32.mrf.mxu0
    %1850 = vdwg.mxu0
    %1851 = vmatpush.bf16.msra.mxu0 0
    %1852 = vmatpush.bf16.msra.mxu0 0
    %1853 = vmatpush.bf16.msra.mxu0 0
    %1854 = vmatpush.bf16.msra.mxu0 0
    %1855 = vmatpush.bf16.msra.mxu0 0
    %1856 = vmatpush.bf16.msra.mxu0 0
    %1857 = vmatpush.bf16.msra.mxu0 0
    %1858 = vmatpush.bf16.msra.mxu0 %v1711
    %1859 = vmatmul.bf16.gmra.mxu0 %v1719
    %v1860 = vpop.f32.mrf.mxu0
    %v1861 = vadd.f32 0.0, %v1860
    %v1862 = vpop.f32.mrf.mxu0
    %1863 = vdwg.mxu0
    %1864 = vmatpush.bf16.msra.mxu0 0
    %1865 = vmatpush.bf16.msra.mxu0 0
    %1866 = vmatpush.bf16.msra.mxu0 0
    %1867 = vmatpush.bf16.msra.mxu0 0
    %1868 = vmatpush.bf16.msra.mxu0 0
    %1869 = vmatpush.bf16.msra.mxu0 0
    %1870 = vmatpush.bf16.msra.mxu0 0
    %1871 = vmatpush.bf16.msra.mxu0 %v1712
    %1872 = vmatmul.bf16.gmra.mxu0 %v1719
    %v1873 = vpop.f32.mrf.mxu0
    %v1874 = vadd.f32 0.0, %v1873
    %v1875 = vpop.f32.mrf.mxu0
    %1876 = vdwg.mxu0
    %1877 = vmatpush.bf16.msra.mxu0 0
    %1878 = vmatpush.bf16.msra.mxu0 0
    %1879 = vmatpush.bf16.msra.mxu0 0
    %1880 = vmatpush.bf16.msra.mxu0 0
    %1881 = vmatpush.bf16.msra.mxu0 0
    %1882 = vmatpush.bf16.msra.mxu0 0
    %1883 = vmatpush.bf16.msra.mxu0 0
    %1884 = vmatpush.bf16.msra.mxu0 %v1713
    %1885 = vmatmul.bf16.gmra.mxu0 %v1719
    %v1886 = vpop.f32.mrf.mxu0
    %v1887 = vadd.f32 0.0, %v1886
    %v1888 = vpop.f32.mrf.mxu0
    %1889 = vdwg.mxu0
    %1890 = vmatpush.bf16.msra.mxu0 0
    %1891 = vmatpush.bf16.msra.mxu0 0
    %1892 = vmatpush.bf16.msra.mxu0 0
    %1893 = vmatpush.bf16.msra.mxu0 0
    %1894 = vmatpush.bf16.msra.mxu0 0
    %1895 = vmatpush.bf16.msra.mxu0 0
    %1896 = vmatpush.bf16.msra.mxu0 0
    %1897 = vmatpush.bf16.msra.mxu0 %v1714
    %1898 = vmatmul.bf16.gmra.mxu0 %v1719
    %v1899 = vpop.f32.mrf.mxu0
    %v1900 = vadd.f32 0.0, %v1899
    %v1901 = vpop.f32.mrf.mxu0
    %1902 = vdwg.mxu0
    %1903 = vmatpush.bf16.msra.mxu0 0
    %1904 = vmatpush.bf16.msra.mxu0 0
    %1905 = vmatpush.bf16.msra.mxu0 0
    %1906 = vmatpush.bf16.msra.mxu0 0
    %1907 = vmatpush.bf16.msra.mxu0 0
    %1908 = vmatpush.bf16.msra.mxu0 0
    %1909 = vmatpush.bf16.msra.mxu0 0
    %1910 = vmatpush.bf16.msra.mxu0 %v1715
    %1911 = vmatmul.bf16.gmra.mxu0 %v1719
    %v1912 = vpop.f32.mrf.mxu0
    %v1913 = vadd.f32 0.0, %v1912
    %v1914 = vpop.f32.mrf.mxu0
    %1915 = vdwg.mxu0
    %1916 = vmatpush.bf16.msra.mxu0 0
    %1917 = vmatpush.bf16.msra.mxu0 0
    %1918 = vmatpush.bf16.msra.mxu0 0
    %1919 = vmatpush.bf16.msra.mxu0 0
    %1920 = vmatpush.bf16.msra.mxu0 0
    %1921 = vmatpush.bf16.msra.mxu0 0
    %1922 = vmatpush.bf16.msra.mxu0 0
    %1923 = vmatpush.bf16.msra.mxu0 %v1716
    %1924 = vmatmul.bf16.gmra.mxu0 %v1719
    %v1925 = vpop.f32.mrf.mxu0
    %v1926 = vadd.f32 0.0, %v1925
    %v1927 = vpop.f32.mrf.mxu0
    %1928 = vdwg.mxu0
    %v1929 = vrot.slane %v1757, 4
    %v1930 = vsel %vm811, %v1929, %v1731
    %v1931 = vrot.slane %v1731, 4
    %v1932 = vsel %vm811, %v1757, %v1931
    %v1934 = vunpack.c.l.s4 1983009808
    %v1935 = vunpack.c.0.s8 %v1934
    %v1936 = vperm.slane %v1930, %v1935
    %v1938 = vunpack.c.l.s4 1983009808
    %v1939 = vunpack.c.0.s8 %v1938
    %v1940 = vperm.slane %v1932, %v1939
    %v1941 = vrot.slane %v1770, 4
    %v1942 = vsel %vm811, %v1941, %v1744
    %v1943 = vrot.slane %v1744, 4
    %v1944 = vsel %vm811, %v1770, %v1943
    %v1946 = vunpack.c.l.s4 1983009808
    %v1947 = vunpack.c.0.s8 %v1946
    %v1948 = vperm.slane %v1942, %v1947
    %v1950 = vunpack.c.l.s4 1983009808
    %v1951 = vunpack.c.0.s8 %v1950
    %v1952 = vperm.slane %v1944, %v1951
    %v1953 = vrot.slane %v1809, 4
    %v1954 = vsel %vm811, %v1953, %v1783
    %v1955 = vrot.slane %v1783, 4
    %v1956 = vsel %vm811, %v1809, %v1955
    %v1958 = vunpack.c.l.s4 1983009808
    %v1959 = vunpack.c.0.s8 %v1958
    %v1960 = vperm.slane %v1954, %v1959
    %v1962 = vunpack.c.l.s4 1983009808
    %v1963 = vunpack.c.0.s8 %v1962
    %v1964 = vperm.slane %v1956, %v1963
    %v1965 = vrot.slane %v1822, 4
    %v1966 = vsel %vm811, %v1965, %v1796
    %v1967 = vrot.slane %v1796, 4
    %v1968 = vsel %vm811, %v1822, %v1967
    %v1970 = vunpack.c.l.s4 1983009808
    %v1971 = vunpack.c.0.s8 %v1970
    %v1972 = vperm.slane %v1966, %v1971
    %v1974 = vunpack.c.l.s4 1983009808
    %v1975 = vunpack.c.0.s8 %v1974
    %v1976 = vperm.slane %v1968, %v1975
    %v1977 = vrot.slane %v1948, 4
    %v1978 = vsel %vm811, %v1977, %v1936
    %v1979 = vrot.slane %v1936, 4
    %v1980 = vsel %vm811, %v1948, %v1979
    %v1982 = vunpack.c.l.s4 1934713408
    %v1983 = vunpack.c.0.s8 %v1982
    %v1984 = vperm.slane %v1978, %v1983
    %v1986 = vunpack.c.l.s4 1934713408
    %v1987 = vunpack.c.0.s8 %v1986
    %v1988 = vperm.slane %v1980, %v1987
    %v1989 = vrot.slane %v1952, 4
    %v1990 = vsel %vm811, %v1989, %v1940
    %v1991 = vrot.slane %v1940, 4
    %v1992 = vsel %vm811, %v1952, %v1991
    %v1994 = vunpack.c.l.s4 1934713408
    %v1995 = vunpack.c.0.s8 %v1994
    %v1996 = vperm.slane %v1990, %v1995
    %v1998 = vunpack.c.l.s4 1934713408
    %v1999 = vunpack.c.0.s8 %v1998
    %v2000 = vperm.slane %v1992, %v1999
    %v2001 = vrot.slane %v1972, 4
    %v2002 = vsel %vm811, %v2001, %v1960
    %v2003 = vrot.slane %v1960, 4
    %v2004 = vsel %vm811, %v1972, %v2003
    %v2006 = vunpack.c.l.s4 1934713408
    %v2007 = vunpack.c.0.s8 %v2006
    %v2008 = vperm.slane %v2002, %v2007
    %v2010 = vunpack.c.l.s4 1934713408
    %v2011 = vunpack.c.0.s8 %v2010
    %v2012 = vperm.slane %v2004, %v2011
    %v2013 = vrot.slane %v1976, 4
    %v2014 = vsel %vm811, %v2013, %v1964
    %v2015 = vrot.slane %v1964, 4
    %v2016 = vsel %vm811, %v1976, %v2015
    %v2018 = vunpack.c.l.s4 1934713408
    %v2019 = vunpack.c.0.s8 %v2018
    %v2020 = vperm.slane %v2014, %v2019
    %v2022 = vunpack.c.l.s4 1934713408
    %v2023 = vunpack.c.0.s8 %v2022
    %v2024 = vperm.slane %v2016, %v2023
    %v2025 = vrot.slane %v2008, 4
    %v2026 = vsel %vm811, %v2025, %v1984
    %v2027 = vrot.slane %v1984, 4
    %v2028 = vsel %vm811, %v2008, %v2027
    %v2029 = vrot.slane %v2012, 4
    %v2030 = vsel %vm811, %v2029, %v1988
    %v2031 = vrot.slane %v1988, 4
    %v2032 = vsel %vm811, %v2012, %v2031
    %v2033 = vrot.slane %v2020, 4
    %v2034 = vsel %vm811, %v2033, %v1996
    %v2035 = vrot.slane %v1996, 4
    %v2036 = vsel %vm811, %v2020, %v2035
    %v2037 = vrot.slane %v2024, 4
    %v2038 = vsel %vm811, %v2037, %v2000
    %v2039 = vrot.slane %v2000, 4
    %v2040 = vsel %vm811, %v2024, %v2039
    %v2041 = vrot.slane %v1861, 4
    %v2042 = vsel %vm811, %v2041, %v1835
    %v2043 = vrot.slane %v1835, 4
    %v2044 = vsel %vm811, %v1861, %v2043
    %v2046 = vunpack.c.l.s4 1983009808
    %v2047 = vunpack.c.0.s8 %v2046
    %v2048 = vperm.slane %v2042, %v2047
    %v2050 = vunpack.c.l.s4 1983009808
    %v2051 = vunpack.c.0.s8 %v2050
    %v2052 = vperm.slane %v2044, %v2051
    %v2053 = vrot.slane %v1874, 4
    %v2054 = vsel %vm811, %v2053, %v1848
    %v2055 = vrot.slane %v1848, 4
    %v2056 = vsel %vm811, %v1874, %v2055
    %v2058 = vunpack.c.l.s4 1983009808
    %v2059 = vunpack.c.0.s8 %v2058
    %v2060 = vperm.slane %v2054, %v2059
    %v2062 = vunpack.c.l.s4 1983009808
    %v2063 = vunpack.c.0.s8 %v2062
    %v2064 = vperm.slane %v2056, %v2063
    %v2065 = vrot.slane %v1913, 4
    %v2066 = vsel %vm811, %v2065, %v1887
    %v2067 = vrot.slane %v1887, 4
    %v2068 = vsel %vm811, %v1913, %v2067
    %v2070 = vunpack.c.l.s4 1983009808
    %v2071 = vunpack.c.0.s8 %v2070
    %v2072 = vperm.slane %v2066, %v2071
    %v2074 = vunpack.c.l.s4 1983009808
    %v2075 = vunpack.c.0.s8 %v2074
    %v2076 = vperm.slane %v2068, %v2075
    %v2077 = vrot.slane %v1926, 4
    %v2078 = vsel %vm811, %v2077, %v1900
    %v2079 = vrot.slane %v1900, 4
    %v2080 = vsel %vm811, %v1926, %v2079
    %v2082 = vunpack.c.l.s4 1983009808
    %v2083 = vunpack.c.0.s8 %v2082
    %v2084 = vperm.slane %v2078, %v2083
    %v2086 = vunpack.c.l.s4 1983009808
    %v2087 = vunpack.c.0.s8 %v2086
    %v2088 = vperm.slane %v2080, %v2087
    %v2089 = vrot.slane %v2060, 4
    %v2090 = vsel %vm811, %v2089, %v2048
    %v2091 = vrot.slane %v2048, 4
    %v2092 = vsel %vm811, %v2060, %v2091
    %v2094 = vunpack.c.l.s4 1934713408
    %v2095 = vunpack.c.0.s8 %v2094
    %v2096 = vperm.slane %v2090, %v2095
    %v2098 = vunpack.c.l.s4 1934713408
    %v2099 = vunpack.c.0.s8 %v2098
    %v2100 = vperm.slane %v2092, %v2099
    %v2101 = vrot.slane %v2064, 4
    %v2102 = vsel %vm811, %v2101, %v2052
    %v2103 = vrot.slane %v2052, 4
    %v2104 = vsel %vm811, %v2064, %v2103
    %v2106 = vunpack.c.l.s4 1934713408
    %v2107 = vunpack.c.0.s8 %v2106
    %v2108 = vperm.slane %v2102, %v2107
    %v2110 = vunpack.c.l.s4 1934713408
    %v2111 = vunpack.c.0.s8 %v2110
    %v2112 = vperm.slane %v2104, %v2111
    %v2113 = vrot.slane %v2084, 4
    %v2114 = vsel %vm811, %v2113, %v2072
    %v2115 = vrot.slane %v2072, 4
    %v2116 = vsel %vm811, %v2084, %v2115
    %v2118 = vunpack.c.l.s4 1934713408
    %v2119 = vunpack.c.0.s8 %v2118
    %v2120 = vperm.slane %v2114, %v2119
    %v2122 = vunpack.c.l.s4 1934713408
    %v2123 = vunpack.c.0.s8 %v2122
    %v2124 = vperm.slane %v2116, %v2123
    %v2125 = vrot.slane %v2088, 4
    %v2126 = vsel %vm811, %v2125, %v2076
    %v2127 = vrot.slane %v2076, 4
    %v2128 = vsel %vm811, %v2088, %v2127
    %v2130 = vunpack.c.l.s4 1934713408
    %v2131 = vunpack.c.0.s8 %v2130
    %v2132 = vperm.slane %v2126, %v2131
    %v2134 = vunpack.c.l.s4 1934713408
    %v2135 = vunpack.c.0.s8 %v2134
    %v2136 = vperm.slane %v2128, %v2135
    %v2137 = vrot.slane %v2120, 4
    %v2138 = vsel %vm811, %v2137, %v2096
    %v2139 = vrot.slane %v2096, 4
    %v2140 = vsel %vm811, %v2120, %v2139
    %v2141 = vrot.slane %v2124, 4
    %v2142 = vsel %vm811, %v2141, %v2100
    %v2143 = vrot.slane %v2100, 4
    %v2144 = vsel %vm811, %v2124, %v2143
    %v2145 = vrot.slane %v2132, 4
    %v2146 = vsel %vm811, %v2145, %v2108
    %v2147 = vrot.slane %v2108, 4
    %v2148 = vsel %vm811, %v2132, %v2147
    %v2149 = vrot.slane %v2136, 4
    %v2150 = vsel %vm811, %v2149, %v2112
    %v2151 = vrot.slane %v2112, 4
    %v2152 = vsel %vm811, %v2136, %v2151
    %v2153 = vadd.f32 %v2026, %v124
    %v2154 = vadd.f32 %v2028, %v138
    %v2155 = vadd.f32 %v2030, %v152
    %v2156 = vadd.f32 %v2032, %v166
    %v2157 = vadd.f32 %v2034, %v180
    %v2158 = vadd.f32 %v2036, %v194
    %v2159 = vadd.f32 %v2038, %v208
    %v2160 = vadd.f32 %v2040, %v222
    %v2161 = vadd.f32 %v2138, %v126
    %v2162 = vadd.f32 %v2140, %v140
    %v2163 = vadd.f32 %v2142, %v154
    %v2164 = vadd.f32 %v2144, %v168
    %v2165 = vadd.f32 %v2146, %v182
    %v2166 = vadd.f32 %v2148, %v196
    %v2167 = vadd.f32 %v2150, %v210
    %v2168 = vadd.f32 %v2152, %v224
    %v2169 = vpack.c.bf16 %v2161, %v2153
    %v2170 = vpack.c.bf16 %v2162, %v2154
    %v2171 = vpack.c.bf16 %v2163, %v2155
    %v2172 = vpack.c.bf16 %v2164, %v2156
    %v2173 = vpack.c.bf16 %v2165, %v2157
    %v2174 = vpack.c.bf16 %v2166, %v2158
    %v2175 = vpack.c.bf16 %v2167, %v2159
    %v2176 = vpack.c.bf16 %v2168, %v2160
    %v2177 = vld [vmem:[#allocation2] sm:$0xff]
    %v2178 = vld [vmem:[#allocation2 + $0x8] sm:$0xff]
    %v2179 = vld [vmem:[#allocation2 + $0x10] sm:$0xff]
    %v2180 = vld [vmem:[#allocation2 + $0x18] sm:$0xff]
    %v2181 = vld [vmem:[#allocation2 + $0x20] sm:$0xff]
    %v2182 = vld [vmem:[#allocation2 + $0x28] sm:$0xff]
    %v2183 = vld [vmem:[#allocation2 + $0x30] sm:$0xff]
    %v2184 = vld [vmem:[#allocation2 + $0x38] sm:$0xff]
    %v2185 = vld [vmem:[#allocation2 + $0x40] sm:$0xff]
    %v2186 = vld [vmem:[#allocation2 + $0x48] sm:$0xff]
    %v2187 = vld [vmem:[#allocation2 + $0x50] sm:$0xff]
    %v2188 = vld [vmem:[#allocation2 + $0x58] sm:$0xff]
    %v2189 = vld [vmem:[#allocation2 + $0x60] sm:$0xff]
    %v2190 = vld [vmem:[#allocation2 + $0x68] sm:$0xff]
    %v2191 = vld [vmem:[#allocation2 + $0x70] sm:$0xff]
    %v2192 = vld [vmem:[#allocation2 + $0x78] sm:$0xff]
    %v2193 = vld [vmem:[#allocation2 + $0x80] sm:$0xff]
    %v2194 = vld [vmem:[#allocation2 + $0x88] sm:$0xff]
    %v2195 = vld [vmem:[#allocation2 + $0x90] sm:$0xff]
    %v2196 = vld [vmem:[#allocation2 + $0x98] sm:$0xff]
    %v2197 = vld [vmem:[#allocation2 + $0xa0] sm:$0xff]
    %v2198 = vld [vmem:[#allocation2 + $0xa8] sm:$0xff]
    %v2199 = vld [vmem:[#allocation2 + $0xb0] sm:$0xff]
    %v2200 = vld [vmem:[#allocation2 + $0xb8] sm:$0xff]
    %v2201 = vld [vmem:[#allocation2 + $0xc0] sm:$0xff]
    %v2202 = vld [vmem:[#allocation2 + $0xc8] sm:$0xff]
    %v2203 = vld [vmem:[#allocation2 + $0xd0] sm:$0xff]
    %v2204 = vld [vmem:[#allocation2 + $0xd8] sm:$0xff]
    %v2205 = vld [vmem:[#allocation2 + $0xe0] sm:$0xff]
    %v2206 = vld [vmem:[#allocation2 + $0xe8] sm:$0xff]
    %v2207 = vld [vmem:[#allocation2 + $0xf0] sm:$0xff]
    %v2208 = vld [vmem:[#allocation2 + $0xf8] sm:$0xff]
    %v2209 = vld [vmem:[#allocation2 + $0x100] sm:$0xff]
    %v2210 = vld [vmem:[#allocation2 + $0x108] sm:$0xff]
    %v2211 = vld [vmem:[#allocation2 + $0x110] sm:$0xff]
    %v2212 = vld [vmem:[#allocation2 + $0x118] sm:$0xff]
    %v2213 = vld [vmem:[#allocation2 + $0x120] sm:$0xff]
    %v2214 = vld [vmem:[#allocation2 + $0x128] sm:$0xff]
    %v2215 = vld [vmem:[#allocation2 + $0x130] sm:$0xff]
    %v2216 = vld [vmem:[#allocation2 + $0x138] sm:$0xff]
    %v2217 = vld [vmem:[#allocation2 + $0x140] sm:$0xff]
    %v2218 = vld [vmem:[#allocation2 + $0x148] sm:$0xff]
    %v2219 = vld [vmem:[#allocation2 + $0x150] sm:$0xff]
    %v2220 = vld [vmem:[#allocation2 + $0x158] sm:$0xff]
    %v2221 = vld [vmem:[#allocation2 + $0x160] sm:$0xff]
    %v2222 = vld [vmem:[#allocation2 + $0x168] sm:$0xff]
    %v2223 = vld [vmem:[#allocation2 + $0x170] sm:$0xff]
    %v2224 = vld [vmem:[#allocation2 + $0x178] sm:$0xff]
    %v2225 = vld [vmem:[#allocation2 + $0x180] sm:$0xff]
    %v2226 = vld [vmem:[#allocation2 + $0x188] sm:$0xff]
    %v2227 = vld [vmem:[#allocation2 + $0x190] sm:$0xff]
    %v2228 = vld [vmem:[#allocation2 + $0x198] sm:$0xff]
    %v2229 = vld [vmem:[#allocation2 + $0x1a0] sm:$0xff]
    %v2230 = vld [vmem:[#allocation2 + $0x1a8] sm:$0xff]
    %v2231 = vld [vmem:[#allocation2 + $0x1b0] sm:$0xff]
    %v2232 = vld [vmem:[#allocation2 + $0x1b8] sm:$0xff]
    %v2233 = vld [vmem:[#allocation2 + $0x1c0] sm:$0xff]
    %v2234 = vld [vmem:[#allocation2 + $0x1c8] sm:$0xff]
    %v2235 = vld [vmem:[#allocation2 + $0x1d0] sm:$0xff]
    %v2236 = vld [vmem:[#allocation2 + $0x1d8] sm:$0xff]
    %v2237 = vld [vmem:[#allocation2 + $0x1e0] sm:$0xff]
    %v2238 = vld [vmem:[#allocation2 + $0x1e8] sm:$0xff]
    %v2239 = vld [vmem:[#allocation2 + $0x1f0] sm:$0xff]
    %v2240 = vld [vmem:[#allocation2 + $0x1f8] sm:$0xff]
    %v2241 = vld [vmem:[#allocation2 + $0x200] sm:$0xff]
    %v2242 = vld [vmem:[#allocation2 + $0x208] sm:$0xff]
    %v2243 = vld [vmem:[#allocation2 + $0x210] sm:$0xff]
    %v2244 = vld [vmem:[#allocation2 + $0x218] sm:$0xff]
    %v2245 = vld [vmem:[#allocation2 + $0x220] sm:$0xff]
    %v2246 = vld [vmem:[#allocation2 + $0x228] sm:$0xff]
    %v2247 = vld [vmem:[#allocation2 + $0x230] sm:$0xff]
    %v2248 = vld [vmem:[#allocation2 + $0x238] sm:$0xff]
    %v2249 = vld [vmem:[#allocation2 + $0x240] sm:$0xff]
    %v2250 = vld [vmem:[#allocation2 + $0x248] sm:$0xff]
    %v2251 = vld [vmem:[#allocation2 + $0x250] sm:$0xff]
    %v2252 = vld [vmem:[#allocation2 + $0x258] sm:$0xff]
    %v2253 = vld [vmem:[#allocation2 + $0x260] sm:$0xff]
    %v2254 = vld [vmem:[#allocation2 + $0x268] sm:$0xff]
    %v2255 = vld [vmem:[#allocation2 + $0x270] sm:$0xff]
    %v2256 = vld [vmem:[#allocation2 + $0x278] sm:$0xff]
    %v2257 = vld [vmem:[#allocation2 + $0x280] sm:$0xff]
    %v2258 = vld [vmem:[#allocation2 + $0x288] sm:$0xff]
    %v2259 = vld [vmem:[#allocation2 + $0x290] sm:$0xff]
    %v2260 = vld [vmem:[#allocation2 + $0x298] sm:$0xff]
    %v2261 = vld [vmem:[#allocation2 + $0x2a0] sm:$0xff]
    %v2262 = vld [vmem:[#allocation2 + $0x2a8] sm:$0xff]
    %v2263 = vld [vmem:[#allocation2 + $0x2b0] sm:$0xff]
    %v2264 = vld [vmem:[#allocation2 + $0x2b8] sm:$0xff]
    %v2265 = vld [vmem:[#allocation2 + $0x2c0] sm:$0xff]
    %v2266 = vld [vmem:[#allocation2 + $0x2c8] sm:$0xff]
    %v2267 = vld [vmem:[#allocation2 + $0x2d0] sm:$0xff]
    %v2268 = vld [vmem:[#allocation2 + $0x2d8] sm:$0xff]
    %v2269 = vld [vmem:[#allocation2 + $0x2e0] sm:$0xff]
    %v2270 = vld [vmem:[#allocation2 + $0x2e8] sm:$0xff]
    %v2271 = vld [vmem:[#allocation2 + $0x2f0] sm:$0xff]
    %v2272 = vld [vmem:[#allocation2 + $0x2f8] sm:$0xff]
    %v2273 = vld [vmem:[#allocation2 + $0x300] sm:$0xff]
    %v2274 = vld [vmem:[#allocation2 + $0x308] sm:$0xff]
    %v2275 = vld [vmem:[#allocation2 + $0x310] sm:$0xff]
    %v2276 = vld [vmem:[#allocation2 + $0x318] sm:$0xff]
    %v2277 = vld [vmem:[#allocation2 + $0x320] sm:$0xff]
    %v2278 = vld [vmem:[#allocation2 + $0x328] sm:$0xff]
    %v2279 = vld [vmem:[#allocation2 + $0x330] sm:$0xff]
    %v2280 = vld [vmem:[#allocation2 + $0x338] sm:$0xff]
    %v2281 = vld [vmem:[#allocation2 + $0x340] sm:$0xff]
    %v2282 = vld [vmem:[#allocation2 + $0x348] sm:$0xff]
    %v2283 = vld [vmem:[#allocation2 + $0x350] sm:$0xff]
    %v2284 = vld [vmem:[#allocation2 + $0x358] sm:$0xff]
    %v2285 = vld [vmem:[#allocation2 + $0x360] sm:$0xff]
    %v2286 = vld [vmem:[#allocation2 + $0x368] sm:$0xff]
    %v2287 = vld [vmem:[#allocation2 + $0x370] sm:$0xff]
    %v2288 = vld [vmem:[#allocation2 + $0x378] sm:$0xff]
    %v2289 = vld [vmem:[#allocation2 + $0x380] sm:$0xff]
    %v2290 = vld [vmem:[#allocation2 + $0x388] sm:$0xff]
    %v2291 = vld [vmem:[#allocation2 + $0x390] sm:$0xff]
    %v2292 = vld [vmem:[#allocation2 + $0x398] sm:$0xff]
    %v2293 = vld [vmem:[#allocation2 + $0x3a0] sm:$0xff]
    %v2294 = vld [vmem:[#allocation2 + $0x3a8] sm:$0xff]
    %v2295 = vld [vmem:[#allocation2 + $0x3b0] sm:$0xff]
    %v2296 = vld [vmem:[#allocation2 + $0x3b8] sm:$0xff]
    %v2297 = vld [vmem:[#allocation2 + $0x3c0] sm:$0xff]
    %v2298 = vld [vmem:[#allocation2 + $0x3c8] sm:$0xff]
    %v2299 = vld [vmem:[#allocation2 + $0x3d0] sm:$0xff]
    %v2300 = vld [vmem:[#allocation2 + $0x3d8] sm:$0xff]
    %v2301 = vld [vmem:[#allocation2 + $0x3e0] sm:$0xff]
    %v2302 = vld [vmem:[#allocation2 + $0x3e8] sm:$0xff]
    %v2303 = vld [vmem:[#allocation2 + $0x3f0] sm:$0xff]
    %v2304 = vld [vmem:[#allocation2 + $0x3f8] sm:$0xff]
    %v2305 = vld [vmem:[%s9] sm:$0x3]
    %v2307 = vperm.slane %v2305, 0
    %v2308 = vperm.slane %v2305, 1
    %v2439 = vunpack.c.l.b16 %v2177
    %v2440 = vunpack.c.h.b16 %v2177
    %v2441 = vunpack.c.l.b16 %v2178
    %v2442 = vunpack.c.h.b16 %v2178
    %v2443 = vunpack.c.l.b16 %v2179
    %v2444 = vunpack.c.h.b16 %v2179
    %v2445 = vunpack.c.l.b16 %v2180
    %v2446 = vunpack.c.h.b16 %v2180
    %v2447 = vunpack.c.l.b16 %v2181
    %v2448 = vunpack.c.h.b16 %v2181
    %v2449 = vunpack.c.l.b16 %v2182
    %v2450 = vunpack.c.h.b16 %v2182
    %v2451 = vunpack.c.l.b16 %v2183
    %v2452 = vunpack.c.h.b16 %v2183
    %v2453 = vunpack.c.l.b16 %v2184
    %v2454 = vunpack.c.h.b16 %v2184
    %v2455 = vunpack.c.l.b16 %v2185
    %v2456 = vunpack.c.h.b16 %v2185
    %v2457 = vunpack.c.l.b16 %v2186
    %v2458 = vunpack.c.h.b16 %v2186
    %v2459 = vunpack.c.l.b16 %v2187
    %v2460 = vunpack.c.h.b16 %v2187
    %v2461 = vunpack.c.l.b16 %v2188
    %v2462 = vunpack.c.h.b16 %v2188
    %v2463 = vunpack.c.l.b16 %v2189
    %v2464 = vunpack.c.h.b16 %v2189
    %v2465 = vunpack.c.l.b16 %v2190
    %v2466 = vunpack.c.h.b16 %v2190
    %v2467 = vunpack.c.l.b16 %v2191
    %v2468 = vunpack.c.h.b16 %v2191
    %v2469 = vunpack.c.l.b16 %v2192
    %v2470 = vunpack.c.h.b16 %v2192
    %v2471 = vunpack.c.l.b16 %v2193
    %v2472 = vunpack.c.h.b16 %v2193
    %v2473 = vunpack.c.l.b16 %v2194
    %v2474 = vunpack.c.h.b16 %v2194
    %v2475 = vunpack.c.l.b16 %v2195
    %v2476 = vunpack.c.h.b16 %v2195
    %v2477 = vunpack.c.l.b16 %v2196
    %v2478 = vunpack.c.h.b16 %v2196
    %v2479 = vunpack.c.l.b16 %v2197
    %v2480 = vunpack.c.h.b16 %v2197
    %v2481 = vunpack.c.l.b16 %v2198
    %v2482 = vunpack.c.h.b16 %v2198
    %v2483 = vunpack.c.l.b16 %v2199
    %v2484 = vunpack.c.h.b16 %v2199
    %v2485 = vunpack.c.l.b16 %v2200
    %v2486 = vunpack.c.h.b16 %v2200
    %v2487 = vunpack.c.l.b16 %v2201
    %v2488 = vunpack.c.h.b16 %v2201
    %v2489 = vunpack.c.l.b16 %v2202
    %v2490 = vunpack.c.h.b16 %v2202
    %v2491 = vunpack.c.l.b16 %v2203
    %v2492 = vunpack.c.h.b16 %v2203
    %v2493 = vunpack.c.l.b16 %v2204
    %v2494 = vunpack.c.h.b16 %v2204
    %v2495 = vunpack.c.l.b16 %v2205
    %v2496 = vunpack.c.h.b16 %v2205
    %v2497 = vunpack.c.l.b16 %v2206
    %v2498 = vunpack.c.h.b16 %v2206
    %v2499 = vunpack.c.l.b16 %v2207
    %v2500 = vunpack.c.h.b16 %v2207
    %v2501 = vunpack.c.l.b16 %v2208
    %v2502 = vunpack.c.h.b16 %v2208
    %v2503 = vunpack.c.l.b16 %v2209
    %v2504 = vunpack.c.h.b16 %v2209
    %v2505 = vunpack.c.l.b16 %v2210
    %v2506 = vunpack.c.h.b16 %v2210
    %v2507 = vunpack.c.l.b16 %v2211
    %v2508 = vunpack.c.h.b16 %v2211
    %v2509 = vunpack.c.l.b16 %v2212
    %v2510 = vunpack.c.h.b16 %v2212
    %v2511 = vunpack.c.l.b16 %v2213
    %v2512 = vunpack.c.h.b16 %v2213
    %v2513 = vunpack.c.l.b16 %v2214
    %v2514 = vunpack.c.h.b16 %v2214
    %v2515 = vunpack.c.l.b16 %v2215
    %v2516 = vunpack.c.h.b16 %v2215
    %v2517 = vunpack.c.l.b16 %v2216
    %v2518 = vunpack.c.h.b16 %v2216
    %v2519 = vunpack.c.l.b16 %v2217
    %v2520 = vunpack.c.h.b16 %v2217
    %v2521 = vunpack.c.l.b16 %v2218
    %v2522 = vunpack.c.h.b16 %v2218
    %v2523 = vunpack.c.l.b16 %v2219
    %v2524 = vunpack.c.h.b16 %v2219
    %v2525 = vunpack.c.l.b16 %v2220
    %v2526 = vunpack.c.h.b16 %v2220
    %v2527 = vunpack.c.l.b16 %v2221
    %v2528 = vunpack.c.h.b16 %v2221
    %v2529 = vunpack.c.l.b16 %v2222
    %v2530 = vunpack.c.h.b16 %v2222
    %v2531 = vunpack.c.l.b16 %v2223
    %v2532 = vunpack.c.h.b16 %v2223
    %v2533 = vunpack.c.l.b16 %v2224
    %v2534 = vunpack.c.h.b16 %v2224
    %v2535 = vunpack.c.l.b16 %v2225
    %v2536 = vunpack.c.h.b16 %v2225
    %v2537 = vunpack.c.l.b16 %v2226
    %v2538 = vunpack.c.h.b16 %v2226
    %v2539 = vunpack.c.l.b16 %v2227
    %v2540 = vunpack.c.h.b16 %v2227
    %v2541 = vunpack.c.l.b16 %v2228
    %v2542 = vunpack.c.h.b16 %v2228
    %v2543 = vunpack.c.l.b16 %v2229
    %v2544 = vunpack.c.h.b16 %v2229
    %v2545 = vunpack.c.l.b16 %v2230
    %v2546 = vunpack.c.h.b16 %v2230
    %v2547 = vunpack.c.l.b16 %v2231
    %v2548 = vunpack.c.h.b16 %v2231
    %v2549 = vunpack.c.l.b16 %v2232
    %v2550 = vunpack.c.h.b16 %v2232
    %v2551 = vunpack.c.l.b16 %v2233
    %v2552 = vunpack.c.h.b16 %v2233
    %v2553 = vunpack.c.l.b16 %v2234
    %v2554 = vunpack.c.h.b16 %v2234
    %v2555 = vunpack.c.l.b16 %v2235
    %v2556 = vunpack.c.h.b16 %v2235
    %v2557 = vunpack.c.l.b16 %v2236
    %v2558 = vunpack.c.h.b16 %v2236
    %v2559 = vunpack.c.l.b16 %v2237
    %v2560 = vunpack.c.h.b16 %v2237
    %v2561 = vunpack.c.l.b16 %v2238
    %v2562 = vunpack.c.h.b16 %v2238
    %v2563 = vunpack.c.l.b16 %v2239
    %v2564 = vunpack.c.h.b16 %v2239
    %v2565 = vunpack.c.l.b16 %v2240
    %v2566 = vunpack.c.h.b16 %v2240
    %v2567 = vunpack.c.l.b16 %v2241
    %v2568 = vunpack.c.h.b16 %v2241
    %v2569 = vunpack.c.l.b16 %v2242
    %v2570 = vunpack.c.h.b16 %v2242
    %v2571 = vunpack.c.l.b16 %v2243
    %v2572 = vunpack.c.h.b16 %v2243
    %v2573 = vunpack.c.l.b16 %v2244
    %v2574 = vunpack.c.h.b16 %v2244
    %v2575 = vunpack.c.l.b16 %v2245
    %v2576 = vunpack.c.h.b16 %v2245
    %v2577 = vunpack.c.l.b16 %v2246
    %v2578 = vunpack.c.h.b16 %v2246
    %v2579 = vunpack.c.l.b16 %v2247
    %v2580 = vunpack.c.h.b16 %v2247
    %v2581 = vunpack.c.l.b16 %v2248
    %v2582 = vunpack.c.h.b16 %v2248
    %v2583 = vunpack.c.l.b16 %v2249
    %v2584 = vunpack.c.h.b16 %v2249
    %v2585 = vunpack.c.l.b16 %v2250
    %v2586 = vunpack.c.h.b16 %v2250
    %v2587 = vunpack.c.l.b16 %v2251
    %v2588 = vunpack.c.h.b16 %v2251
    %v2589 = vunpack.c.l.b16 %v2252
    %v2590 = vunpack.c.h.b16 %v2252
    %v2591 = vunpack.c.l.b16 %v2253
    %v2592 = vunpack.c.h.b16 %v2253
    %v2593 = vunpack.c.l.b16 %v2254
    %v2594 = vunpack.c.h.b16 %v2254
    %v2595 = vunpack.c.l.b16 %v2255
    %v2596 = vunpack.c.h.b16 %v2255
    %v2597 = vunpack.c.l.b16 %v2256
    %v2598 = vunpack.c.h.b16 %v2256
    %v2599 = vunpack.c.l.b16 %v2257
    %v2600 = vunpack.c.h.b16 %v2257
    %v2601 = vunpack.c.l.b16 %v2258
    %v2602 = vunpack.c.h.b16 %v2258
    %v2603 = vunpack.c.l.b16 %v2259
    %v2604 = vunpack.c.h.b16 %v2259
    %v2605 = vunpack.c.l.b16 %v2260
    %v2606 = vunpack.c.h.b16 %v2260
    %v2607 = vunpack.c.l.b16 %v2261
    %v2608 = vunpack.c.h.b16 %v2261
    %v2609 = vunpack.c.l.b16 %v2262
    %v2610 = vunpack.c.h.b16 %v2262
    %v2611 = vunpack.c.l.b16 %v2263
    %v2612 = vunpack.c.h.b16 %v2263
    %v2613 = vunpack.c.l.b16 %v2264
    %v2614 = vunpack.c.h.b16 %v2264
    %v2615 = vunpack.c.l.b16 %v2265
    %v2616 = vunpack.c.h.b16 %v2265
    %v2617 = vunpack.c.l.b16 %v2266
    %v2618 = vunpack.c.h.b16 %v2266
    %v2619 = vunpack.c.l.b16 %v2267
    %v2620 = vunpack.c.h.b16 %v2267
    %v2621 = vunpack.c.l.b16 %v2268
    %v2622 = vunpack.c.h.b16 %v2268
    %v2623 = vunpack.c.l.b16 %v2269
    %v2624 = vunpack.c.h.b16 %v2269
    %v2625 = vunpack.c.l.b16 %v2270
    %v2626 = vunpack.c.h.b16 %v2270
    %v2627 = vunpack.c.l.b16 %v2271
    %v2628 = vunpack.c.h.b16 %v2271
    %v2629 = vunpack.c.l.b16 %v2272
    %v2630 = vunpack.c.h.b16 %v2272
    %v2631 = vunpack.c.l.b16 %v2273
    %v2632 = vunpack.c.h.b16 %v2273
    %v2633 = vunpack.c.l.b16 %v2274
    %v2634 = vunpack.c.h.b16 %v2274
    %v2635 = vunpack.c.l.b16 %v2275
    %v2636 = vunpack.c.h.b16 %v2275
    %v2637 = vunpack.c.l.b16 %v2276
    %v2638 = vunpack.c.h.b16 %v2276
    %v2639 = vunpack.c.l.b16 %v2277
    %v2640 = vunpack.c.h.b16 %v2277
    %v2641 = vunpack.c.l.b16 %v2278
    %v2642 = vunpack.c.h.b16 %v2278
    %v2643 = vunpack.c.l.b16 %v2279
    %v2644 = vunpack.c.h.b16 %v2279
    %v2645 = vunpack.c.l.b16 %v2280
    %v2646 = vunpack.c.h.b16 %v2280
    %v2647 = vunpack.c.l.b16 %v2281
    %v2648 = vunpack.c.h.b16 %v2281
    %v2649 = vunpack.c.l.b16 %v2282
    %v2650 = vunpack.c.h.b16 %v2282
    %v2651 = vunpack.c.l.b16 %v2283
    %v2652 = vunpack.c.h.b16 %v2283
    %v2653 = vunpack.c.l.b16 %v2284
    %v2654 = vunpack.c.h.b16 %v2284
    %v2655 = vunpack.c.l.b16 %v2285
    %v2656 = vunpack.c.h.b16 %v2285
    %v2657 = vunpack.c.l.b16 %v2286
    %v2658 = vunpack.c.h.b16 %v2286
    %v2659 = vunpack.c.l.b16 %v2287
    %v2660 = vunpack.c.h.b16 %v2287
    %v2661 = vunpack.c.l.b16 %v2288
    %v2662 = vunpack.c.h.b16 %v2288
    %v2663 = vunpack.c.l.b16 %v2289
    %v2664 = vunpack.c.h.b16 %v2289
    %v2665 = vunpack.c.l.b16 %v2290
    %v2666 = vunpack.c.h.b16 %v2290
    %v2667 = vunpack.c.l.b16 %v2291
    %v2668 = vunpack.c.h.b16 %v2291
    %v2669 = vunpack.c.l.b16 %v2292
    %v2670 = vunpack.c.h.b16 %v2292
    %v2671 = vunpack.c.l.b16 %v2293
    %v2672 = vunpack.c.h.b16 %v2293
    %v2673 = vunpack.c.l.b16 %v2294
    %v2674 = vunpack.c.h.b16 %v2294
    %v2675 = vunpack.c.l.b16 %v2295
    %v2676 = vunpack.c.h.b16 %v2295
    %v2677 = vunpack.c.l.b16 %v2296
    %v2678 = vunpack.c.h.b16 %v2296
    %v2679 = vunpack.c.l.b16 %v2297
    %v2680 = vunpack.c.h.b16 %v2297
    %v2681 = vunpack.c.l.b16 %v2298
    %v2682 = vunpack.c.h.b16 %v2298
    %v2683 = vunpack.c.l.b16 %v2299
    %v2684 = vunpack.c.h.b16 %v2299
    %v2685 = vunpack.c.l.b16 %v2300
    %v2686 = vunpack.c.h.b16 %v2300
    %v2687 = vunpack.c.l.b16 %v2301
    %v2688 = vunpack.c.h.b16 %v2301
    %v2689 = vunpack.c.l.b16 %v2302
    %v2690 = vunpack.c.h.b16 %v2302
    %v2691 = vunpack.c.l.b16 %v2303
    %v2692 = vunpack.c.h.b16 %v2303
    %v2693 = vunpack.c.l.b16 %v2304
    %v2694 = vunpack.c.h.b16 %v2304
    %v2695 = vpack.c.b16 %v2441, %v2439
    %v2696 = vpack.c.b16 %v2442, %v2440
    %v2697 = vpack.c.b16 %v2445, %v2443
    %v2698 = vpack.c.b16 %v2446, %v2444
    %v2699 = vpack.c.b16 %v2449, %v2447
    %v2700 = vpack.c.b16 %v2450, %v2448
    %v2701 = vpack.c.b16 %v2453, %v2451
    %v2702 = vpack.c.b16 %v2454, %v2452
    %v2703 = vpack.c.b16 %v2457, %v2455
    %v2704 = vpack.c.b16 %v2458, %v2456
    %v2705 = vpack.c.b16 %v2461, %v2459
    %v2706 = vpack.c.b16 %v2462, %v2460
    %v2707 = vpack.c.b16 %v2465, %v2463
    %v2708 = vpack.c.b16 %v2466, %v2464
    %v2709 = vpack.c.b16 %v2469, %v2467
    %v2710 = vpack.c.b16 %v2470, %v2468
    %v2711 = vpack.c.b16 %v2473, %v2471
    %v2712 = vpack.c.b16 %v2474, %v2472
    %v2713 = vpack.c.b16 %v2477, %v2475
    %v2714 = vpack.c.b16 %v2478, %v2476
    %v2715 = vpack.c.b16 %v2481, %v2479
    %v2716 = vpack.c.b16 %v2482, %v2480
    %v2717 = vpack.c.b16 %v2485, %v2483
    %v2718 = vpack.c.b16 %v2486, %v2484
    %v2719 = vpack.c.b16 %v2489, %v2487
    %v2720 = vpack.c.b16 %v2490, %v2488
    %v2721 = vpack.c.b16 %v2493, %v2491
    %v2722 = vpack.c.b16 %v2494, %v2492
    %v2723 = vpack.c.b16 %v2497, %v2495
    %v2724 = vpack.c.b16 %v2498, %v2496
    %v2725 = vpack.c.b16 %v2501, %v2499
    %v2726 = vpack.c.b16 %v2502, %v2500
    %v2727 = vpack.c.b16 %v2505, %v2503
    %v2728 = vpack.c.b16 %v2506, %v2504
    %v2729 = vpack.c.b16 %v2509, %v2507
    %v2730 = vpack.c.b16 %v2510, %v2508
    %v2731 = vpack.c.b16 %v2513, %v2511
    %v2732 = vpack.c.b16 %v2514, %v2512
    %v2733 = vpack.c.b16 %v2517, %v2515
    %v2734 = vpack.c.b16 %v2518, %v2516
    %v2735 = vpack.c.b16 %v2521, %v2519
    %v2736 = vpack.c.b16 %v2522, %v2520
    %v2737 = vpack.c.b16 %v2525, %v2523
    %v2738 = vpack.c.b16 %v2526, %v2524
    %v2739 = vpack.c.b16 %v2529, %v2527
    %v2740 = vpack.c.b16 %v2530, %v2528
    %v2741 = vpack.c.b16 %v2533, %v2531
    %v2742 = vpack.c.b16 %v2534, %v2532
    %v2743 = vpack.c.b16 %v2537, %v2535
    %v2744 = vpack.c.b16 %v2538, %v2536
    %v2745 = vpack.c.b16 %v2541, %v2539
    %v2746 = vpack.c.b16 %v2542, %v2540
    %v2747 = vpack.c.b16 %v2545, %v2543
    %v2748 = vpack.c.b16 %v2546, %v2544
    %v2749 = vpack.c.b16 %v2549, %v2547
    %v2750 = vpack.c.b16 %v2550, %v2548
    %v2751 = vpack.c.b16 %v2553, %v2551
    %v2752 = vpack.c.b16 %v2554, %v2552
    %v2753 = vpack.c.b16 %v2557, %v2555
    %v2754 = vpack.c.b16 %v2558, %v2556
    %v2755 = vpack.c.b16 %v2561, %v2559
    %v2756 = vpack.c.b16 %v2562, %v2560
    %v2757 = vpack.c.b16 %v2565, %v2563
    %v2758 = vpack.c.b16 %v2566, %v2564
    %v2759 = vpack.c.b16 %v2569, %v2567
    %v2760 = vpack.c.b16 %v2570, %v2568
    %v2761 = vpack.c.b16 %v2573, %v2571
    %v2762 = vpack.c.b16 %v2574, %v2572
    %v2763 = vpack.c.b16 %v2577, %v2575
    %v2764 = vpack.c.b16 %v2578, %v2576
    %v2765 = vpack.c.b16 %v2581, %v2579
    %v2766 = vpack.c.b16 %v2582, %v2580
    %v2767 = vpack.c.b16 %v2585, %v2583
    %v2768 = vpack.c.b16 %v2586, %v2584
    %v2769 = vpack.c.b16 %v2589, %v2587
    %v2770 = vpack.c.b16 %v2590, %v2588
    %v2771 = vpack.c.b16 %v2593, %v2591
    %v2772 = vpack.c.b16 %v2594, %v2592
    %v2773 = vpack.c.b16 %v2597, %v2595
    %v2774 = vpack.c.b16 %v2598, %v2596
    %v2775 = vpack.c.b16 %v2601, %v2599
    %v2776 = vpack.c.b16 %v2602, %v2600
    %v2777 = vpack.c.b16 %v2605, %v2603
    %v2778 = vpack.c.b16 %v2606, %v2604
    %v2779 = vpack.c.b16 %v2609, %v2607
    %v2780 = vpack.c.b16 %v2610, %v2608
    %v2781 = vpack.c.b16 %v2613, %v2611
    %v2782 = vpack.c.b16 %v2614, %v2612
    %v2783 = vpack.c.b16 %v2617, %v2615
    %v2784 = vpack.c.b16 %v2618, %v2616
    %v2785 = vpack.c.b16 %v2621, %v2619
    %v2786 = vpack.c.b16 %v2622, %v2620
    %v2787 = vpack.c.b16 %v2625, %v2623
    %v2788 = vpack.c.b16 %v2626, %v2624
    %v2789 = vpack.c.b16 %v2629, %v2627
    %v2790 = vpack.c.b16 %v2630, %v2628
    %v2791 = vpack.c.b16 %v2633, %v2631
    %v2792 = vpack.c.b16 %v2634, %v2632
    %v2793 = vpack.c.b16 %v2637, %v2635
    %v2794 = vpack.c.b16 %v2638, %v2636
    %v2795 = vpack.c.b16 %v2641, %v2639
    %v2796 = vpack.c.b16 %v2642, %v2640
    %v2797 = vpack.c.b16 %v2645, %v2643
    %v2798 = vpack.c.b16 %v2646, %v2644
    %v2799 = vpack.c.b16 %v2649, %v2647
    %v2800 = vpack.c.b16 %v2650, %v2648
    %v2801 = vpack.c.b16 %v2653, %v2651
    %v2802 = vpack.c.b16 %v2654, %v2652
    %v2803 = vpack.c.b16 %v2657, %v2655
    %v2804 = vpack.c.b16 %v2658, %v2656
    %v2805 = vpack.c.b16 %v2661, %v2659
    %v2806 = vpack.c.b16 %v2662, %v2660
    %v2807 = vpack.c.b16 %v2665, %v2663
    %v2808 = vpack.c.b16 %v2666, %v2664
    %v2809 = vpack.c.b16 %v2669, %v2667
    %v2810 = vpack.c.b16 %v2670, %v2668
    %v2811 = vpack.c.b16 %v2673, %v2671
    %v2812 = vpack.c.b16 %v2674, %v2672
    %v2813 = vpack.c.b16 %v2677, %v2675
    %v2814 = vpack.c.b16 %v2678, %v2676
    %v2815 = vpack.c.b16 %v2681, %v2679
    %v2816 = vpack.c.b16 %v2682, %v2680
    %v2817 = vpack.c.b16 %v2685, %v2683
    %v2818 = vpack.c.b16 %v2686, %v2684
    %v2819 = vpack.c.b16 %v2689, %v2687
    %v2820 = vpack.c.b16 %v2690, %v2688
    %v2821 = vpack.c.b16 %v2693, %v2691
    %v2822 = vpack.c.b16 %v2694, %v2692
    %2951 = vmatpush.bf16.msra.mxu0 %v2709
    %2952 = vmatpush.bf16.msra.mxu0 %v2707
    %2953 = vmatpush.bf16.msra.mxu0 %v2705
    %2954 = vmatpush.bf16.msra.mxu0 %v2703
    %2955 = vmatpush.bf16.msra.mxu0 %v2701
    %2956 = vmatpush.bf16.msra.mxu0 %v2699
    %2957 = vmatpush.bf16.msra.mxu0 %v2697
    %2958 = vmatpush.bf16.msra.mxu0 %v2695
    %2959 = vmatmul.bf16.gmra.mxu0 %v2169
    %v2960 = vpop.f32.mrf.mxu0
    %v2961 = vadd.f32 %v2307, %v2960
    %v2962 = vpop.f32.mrf.mxu0
    %v2963 = vadd.f32 %v2307, %v2962
    %2964 = vdwg.mxu0
    %2965 = vmatpush.bf16.msra.mxu0 %v2725
    %2966 = vmatpush.bf16.msra.mxu0 %v2723
    %2967 = vmatpush.bf16.msra.mxu0 %v2721
    %2968 = vmatpush.bf16.msra.mxu0 %v2719
    %2969 = vmatpush.bf16.msra.mxu0 %v2717
    %2970 = vmatpush.bf16.msra.mxu0 %v2715
    %2971 = vmatpush.bf16.msra.mxu0 %v2713
    %2972 = vmatpush.bf16.msra.mxu0 %v2711
    %2973 = vmatmul.bf16.gmra.mxu0 %v2170
    %v2974 = vpop.f32.mrf.mxu0
    %v2975 = vadd.f32 %v2961, %v2974
    %v2976 = vpop.f32.mrf.mxu0
    %v2977 = vadd.f32 %v2963, %v2976
    %2978 = vdwg.mxu0
    %2979 = vmatpush.bf16.msra.mxu0 %v2741
    %2980 = vmatpush.bf16.msra.mxu0 %v2739
    %2981 = vmatpush.bf16.msra.mxu0 %v2737
    %2982 = vmatpush.bf16.msra.mxu0 %v2735
    %2983 = vmatpush.bf16.msra.mxu0 %v2733
    %2984 = vmatpush.bf16.msra.mxu0 %v2731
    %2985 = vmatpush.bf16.msra.mxu0 %v2729
    %2986 = vmatpush.bf16.msra.mxu0 %v2727
    %2987 = vmatmul.bf16.gmra.mxu0 %v2171
    %v2988 = vpop.f32.mrf.mxu0
    %v2989 = vadd.f32 %v2975, %v2988
    %v2990 = vpop.f32.mrf.mxu0
    %v2991 = vadd.f32 %v2977, %v2990
    %2992 = vdwg.mxu0
    %2993 = vmatpush.bf16.msra.mxu0 %v2757
    %2994 = vmatpush.bf16.msra.mxu0 %v2755
    %2995 = vmatpush.bf16.msra.mxu0 %v2753
    %2996 = vmatpush.bf16.msra.mxu0 %v2751
    %2997 = vmatpush.bf16.msra.mxu0 %v2749
    %2998 = vmatpush.bf16.msra.mxu0 %v2747
    %2999 = vmatpush.bf16.msra.mxu0 %v2745
    %3000 = vmatpush.bf16.msra.mxu0 %v2743
    %3001 = vmatmul.bf16.gmra.mxu0 %v2172
    %v3002 = vpop.f32.mrf.mxu0
    %v3003 = vadd.f32 %v2989, %v3002
    %v3004 = vpop.f32.mrf.mxu0
    %v3005 = vadd.f32 %v2991, %v3004
    %3006 = vdwg.mxu0
    %3007 = vmatpush.bf16.msra.mxu0 %v2773
    %3008 = vmatpush.bf16.msra.mxu0 %v2771
    %3009 = vmatpush.bf16.msra.mxu0 %v2769
    %3010 = vmatpush.bf16.msra.mxu0 %v2767
    %3011 = vmatpush.bf16.msra.mxu0 %v2765
    %3012 = vmatpush.bf16.msra.mxu0 %v2763
    %3013 = vmatpush.bf16.msra.mxu0 %v2761
    %3014 = vmatpush.bf16.msra.mxu0 %v2759
    %3015 = vmatmul.bf16.gmra.mxu0 %v2173
    %v3016 = vpop.f32.mrf.mxu0
    %v3017 = vadd.f32 %v3003, %v3016
    %v3018 = vpop.f32.mrf.mxu0
    %v3019 = vadd.f32 %v3005, %v3018
    %3020 = vdwg.mxu0
    %3021 = vmatpush.bf16.msra.mxu0 %v2789
    %3022 = vmatpush.bf16.msra.mxu0 %v2787
    %3023 = vmatpush.bf16.msra.mxu0 %v2785
    %3024 = vmatpush.bf16.msra.mxu0 %v2783
    %3025 = vmatpush.bf16.msra.mxu0 %v2781
    %3026 = vmatpush.bf16.msra.mxu0 %v2779
    %3027 = vmatpush.bf16.msra.mxu0 %v2777
    %3028 = vmatpush.bf16.msra.mxu0 %v2775
    %3029 = vmatmul.bf16.gmra.mxu0 %v2174
    %v3030 = vpop.f32.mrf.mxu0
    %v3031 = vadd.f32 %v3017, %v3030
    %v3032 = vpop.f32.mrf.mxu0
    %v3033 = vadd.f32 %v3019, %v3032
    %3034 = vdwg.mxu0
    %3035 = vmatpush.bf16.msra.mxu0 %v2805
    %3036 = vmatpush.bf16.msra.mxu0 %v2803
    %3037 = vmatpush.bf16.msra.mxu0 %v2801
    %3038 = vmatpush.bf16.msra.mxu0 %v2799
    %3039 = vmatpush.bf16.msra.mxu0 %v2797
    %3040 = vmatpush.bf16.msra.mxu0 %v2795
    %3041 = vmatpush.bf16.msra.mxu0 %v2793
    %3042 = vmatpush.bf16.msra.mxu0 %v2791
    %3043 = vmatmul.bf16.gmra.mxu0 %v2175
    %v3044 = vpop.f32.mrf.mxu0
    %v3045 = vadd.f32 %v3031, %v3044
    %v3046 = vpop.f32.mrf.mxu0
    %v3047 = vadd.f32 %v3033, %v3046
    %3048 = vdwg.mxu0
    %3049 = vmatpush.bf16.msra.mxu0 %v2821
    %3050 = vmatpush.bf16.msra.mxu0 %v2819
    %3051 = vmatpush.bf16.msra.mxu0 %v2817
    %3052 = vmatpush.bf16.msra.mxu0 %v2815
    %3053 = vmatpush.bf16.msra.mxu0 %v2813
    %3054 = vmatpush.bf16.msra.mxu0 %v2811
    %3055 = vmatpush.bf16.msra.mxu0 %v2809
    %3056 = vmatpush.bf16.msra.mxu0 %v2807
    %3057 = vmatmul.bf16.gmra.mxu0 %v2176
    %v3058 = vpop.f32.mrf.mxu0
    %v3059 = vadd.f32 %v3045, %v3058
    %v3060 = vpop.f32.mrf.mxu0
    %v3061 = vadd.f32 %v3047, %v3060
    %3062 = vdwg.mxu0
    %3063 = vmatpush.bf16.msra.mxu0 %v2710
    %3064 = vmatpush.bf16.msra.mxu0 %v2708
    %3065 = vmatpush.bf16.msra.mxu0 %v2706
    %3066 = vmatpush.bf16.msra.mxu0 %v2704
    %3067 = vmatpush.bf16.msra.mxu0 %v2702
    %3068 = vmatpush.bf16.msra.mxu0 %v2700
    %3069 = vmatpush.bf16.msra.mxu0 %v2698
    %3070 = vmatpush.bf16.msra.mxu0 %v2696
    %3071 = vmatmul.bf16.gmra.mxu0 %v2169
    %v3072 = vpop.f32.mrf.mxu0
    %v3073 = vadd.f32 %v2308, %v3072
    %v3074 = vpop.f32.mrf.mxu0
    %v3075 = vadd.f32 %v2308, %v3074
    %3076 = vdwg.mxu0
    %3077 = vmatpush.bf16.msra.mxu0 %v2726
    %3078 = vmatpush.bf16.msra.mxu0 %v2724
    %3079 = vmatpush.bf16.msra.mxu0 %v2722
    %3080 = vmatpush.bf16.msra.mxu0 %v2720
    %3081 = vmatpush.bf16.msra.mxu0 %v2718
    %3082 = vmatpush.bf16.msra.mxu0 %v2716
    %3083 = vmatpush.bf16.msra.mxu0 %v2714
    %3084 = vmatpush.bf16.msra.mxu0 %v2712
    %3085 = vmatmul.bf16.gmra.mxu0 %v2170
    %v3086 = vpop.f32.mrf.mxu0
    %v3087 = vadd.f32 %v3073, %v3086
    %v3088 = vpop.f32.mrf.mxu0
    %v3089 = vadd.f32 %v3075, %v3088
    %3090 = vdwg.mxu0
    %3091 = vmatpush.bf16.msra.mxu0 %v2742
    %3092 = vmatpush.bf16.msra.mxu0 %v2740
    %3093 = vmatpush.bf16.msra.mxu0 %v2738
    %3094 = vmatpush.bf16.msra.mxu0 %v2736
    %3095 = vmatpush.bf16.msra.mxu0 %v2734
    %3096 = vmatpush.bf16.msra.mxu0 %v2732
    %3097 = vmatpush.bf16.msra.mxu0 %v2730
    %3098 = vmatpush.bf16.msra.mxu0 %v2728
    %3099 = vmatmul.bf16.gmra.mxu0 %v2171
    %v3100 = vpop.f32.mrf.mxu0
    %v3101 = vadd.f32 %v3087, %v3100
    %v3102 = vpop.f32.mrf.mxu0
    %v3103 = vadd.f32 %v3089, %v3102
    %3104 = vdwg.mxu0
    %3105 = vmatpush.bf16.msra.mxu0 %v2758
    %3106 = vmatpush.bf16.msra.mxu0 %v2756
    %3107 = vmatpush.bf16.msra.mxu0 %v2754
    %3108 = vmatpush.bf16.msra.mxu0 %v2752
    %3109 = vmatpush.bf16.msra.mxu0 %v2750
    %3110 = vmatpush.bf16.msra.mxu0 %v2748
    %3111 = vmatpush.bf16.msra.mxu0 %v2746
    %3112 = vmatpush.bf16.msra.mxu0 %v2744
    %3113 = vmatmul.bf16.gmra.mxu0 %v2172
    %v3114 = vpop.f32.mrf.mxu0
    %v3115 = vadd.f32 %v3101, %v3114
    %v3116 = vpop.f32.mrf.mxu0
    %v3117 = vadd.f32 %v3103, %v3116
    %3118 = vdwg.mxu0
    %3119 = vmatpush.bf16.msra.mxu0 %v2774
    %3120 = vmatpush.bf16.msra.mxu0 %v2772
    %3121 = vmatpush.bf16.msra.mxu0 %v2770
    %3122 = vmatpush.bf16.msra.mxu0 %v2768
    %3123 = vmatpush.bf16.msra.mxu0 %v2766
    %3124 = vmatpush.bf16.msra.mxu0 %v2764
    %3125 = vmatpush.bf16.msra.mxu0 %v2762
    %3126 = vmatpush.bf16.msra.mxu0 %v2760
    %3127 = vmatmul.bf16.gmra.mxu0 %v2173
    %v3128 = vpop.f32.mrf.mxu0
    %v3129 = vadd.f32 %v3115, %v3128
    %v3130 = vpop.f32.mrf.mxu0
    %v3131 = vadd.f32 %v3117, %v3130
    %3132 = vdwg.mxu0
    %3133 = vmatpush.bf16.msra.mxu0 %v2790
    %3134 = vmatpush.bf16.msra.mxu0 %v2788
    %3135 = vmatpush.bf16.msra.mxu0 %v2786
    %3136 = vmatpush.bf16.msra.mxu0 %v2784
    %3137 = vmatpush.bf16.msra.mxu0 %v2782
    %3138 = vmatpush.bf16.msra.mxu0 %v2780
    %3139 = vmatpush.bf16.msra.mxu0 %v2778
    %3140 = vmatpush.bf16.msra.mxu0 %v2776
    %3141 = vmatmul.bf16.gmra.mxu0 %v2174
    %v3142 = vpop.f32.mrf.mxu0
    %v3143 = vadd.f32 %v3129, %v3142
    %v3144 = vpop.f32.mrf.mxu0
    %v3145 = vadd.f32 %v3131, %v3144
    %3146 = vdwg.mxu0
    %3147 = vmatpush.bf16.msra.mxu0 %v2806
    %3148 = vmatpush.bf16.msra.mxu0 %v2804
    %3149 = vmatpush.bf16.msra.mxu0 %v2802
    %3150 = vmatpush.bf16.msra.mxu0 %v2800
    %3151 = vmatpush.bf16.msra.mxu0 %v2798
    %3152 = vmatpush.bf16.msra.mxu0 %v2796
    %3153 = vmatpush.bf16.msra.mxu0 %v2794
    %3154 = vmatpush.bf16.msra.mxu0 %v2792
    %3155 = vmatmul.bf16.gmra.mxu0 %v2175
    %v3156 = vpop.f32.mrf.mxu0
    %v3157 = vadd.f32 %v3143, %v3156
    %v3158 = vpop.f32.mrf.mxu0
    %v3159 = vadd.f32 %v3145, %v3158
    %3160 = vdwg.mxu0
    %3161 = vmatpush.bf16.msra.mxu0 %v2822
    %3162 = vmatpush.bf16.msra.mxu0 %v2820
    %3163 = vmatpush.bf16.msra.mxu0 %v2818
    %3164 = vmatpush.bf16.msra.mxu0 %v2816
    %3165 = vmatpush.bf16.msra.mxu0 %v2814
    %3166 = vmatpush.bf16.msra.mxu0 %v2812
    %3167 = vmatpush.bf16.msra.mxu0 %v2810
    %3168 = vmatpush.bf16.msra.mxu0 %v2808
    %3169 = vmatmul.bf16.gmra.mxu0 %v2176
    %v3170 = vpop.f32.mrf.mxu0
    %v3171 = vadd.f32 %v3157, %v3170
    %v3172 = vpop.f32.mrf.mxu0
    %v3173 = vadd.f32 %v3159, %v3172
    %3174 = vdwg.mxu0
    %vm3175 = vcmp.gt.f32.partialorder %v3059, 0.0
    %vm3176 = vcmp.gt.f32.partialorder %v3171, 0.0
    %vm3177 = vcmp.gt.f32.partialorder %v3061, 0.0
    %vm3178 = vcmp.gt.f32.partialorder %v3173, 0.0
    %v3179 = vmul.f32 %v3059, 0.01
    %v3180 = vmul.f32 %v3171, 0.01
    %v3181 = vmul.f32 %v3061, 0.01
    %v3182 = vmul.f32 %v3173, 0.01
    %v3183 = vsel %vm3175, %v3059, %v3179
    %v3184 = vsel %vm3176, %v3171, %v3180
    %v3185 = vsel %vm3177, %v3061, %v3181
    %v3186 = vsel %vm3178, %v3173, %v3182
    %v3187 = vpack.c.bf16 %v3185, %v3183
    %v3188 = vpack.c.bf16 %v3186, %v3184
    %v3189 = vld [vmem:[%s10] sm:$0xf]
    %v3190 = vld [vmem:[%s10 + $0x4] sm:$0xf]
    %v3191 = vld [vmem:[%s10 + $0x8] sm:$0xf]
    %v3192 = vld [vmem:[%s10 + $0xc] sm:$0xf]
    %v3193 = vld [vmem:[%s10 + $0x10] sm:$0xf]
    %v3194 = vld [vmem:[%s10 + $0x14] sm:$0xf]
    %v3195 = vld [vmem:[%s10 + $0x18] sm:$0xf]
    %v3196 = vld [vmem:[%s10 + $0x1c] sm:$0xf]
    %v3197 = vld [vmem:[%s10 + $0x20] sm:$0xf]
    %v3198 = vld [vmem:[%s10 + $0x24] sm:$0xf]
    %v3199 = vld [vmem:[%s10 + $0x28] sm:$0xf]
    %v3200 = vld [vmem:[%s10 + $0x2c] sm:$0xf]
    %v3201 = vld [vmem:[%s10 + $0x30] sm:$0xf]
    %v3202 = vld [vmem:[%s10 + $0x34] sm:$0xf]
    %v3203 = vld [vmem:[%s10 + $0x38] sm:$0xf]
    %v3204 = vld [vmem:[%s10 + $0x3c] sm:$0xf]
    %v3205 = vld [vmem:[%s10 + $0x40] sm:$0xf]
    %v3206 = vld [vmem:[%s10 + $0x44] sm:$0xf]
    %v3207 = vld [vmem:[%s10 + $0x48] sm:$0xf]
    %v3208 = vld [vmem:[%s10 + $0x4c] sm:$0xf]
    %v3209 = vld [vmem:[%s10 + $0x50] sm:$0xf]
    %v3210 = vld [vmem:[%s10 + $0x54] sm:$0xf]
    %v3211 = vld [vmem:[%s10 + $0x58] sm:$0xf]
    %v3212 = vld [vmem:[%s10 + $0x5c] sm:$0xf]
    %v3213 = vld [vmem:[%s10 + $0x60] sm:$0xf]
    %v3214 = vld [vmem:[%s10 + $0x64] sm:$0xf]
    %v3215 = vld [vmem:[%s10 + $0x68] sm:$0xf]
    %v3216 = vld [vmem:[%s10 + $0x6c] sm:$0xf]
    %v3217 = vld [vmem:[%s10 + $0x70] sm:$0xf]
    %v3218 = vld [vmem:[%s10 + $0x74] sm:$0xf]
    %v3219 = vld [vmem:[%s10 + $0x78] sm:$0xf]
    %v3220 = vld [vmem:[%s10 + $0x7c] sm:$0xf]
    %v3221 = vld [vmem:[%s11] sm:$0x1]
    %v3223 = vperm.slane %v3221, 0
    %v3257 = vunpack.c.l.b16 %v3189
    %v3258 = vunpack.c.l.b16 %v3190
    %v3259 = vunpack.c.l.b16 %v3191
    %v3260 = vunpack.c.l.b16 %v3192
    %v3261 = vunpack.c.l.b16 %v3193
    %v3262 = vunpack.c.l.b16 %v3194
    %v3263 = vunpack.c.l.b16 %v3195
    %v3264 = vunpack.c.l.b16 %v3196
    %v3265 = vunpack.c.l.b16 %v3197
    %v3266 = vunpack.c.l.b16 %v3198
    %v3267 = vunpack.c.l.b16 %v3199
    %v3268 = vunpack.c.l.b16 %v3200
    %v3269 = vunpack.c.l.b16 %v3201
    %v3270 = vunpack.c.l.b16 %v3202
    %v3271 = vunpack.c.l.b16 %v3203
    %v3272 = vunpack.c.l.b16 %v3204
    %v3273 = vunpack.c.l.b16 %v3205
    %v3274 = vunpack.c.l.b16 %v3206
    %v3275 = vunpack.c.l.b16 %v3207
    %v3276 = vunpack.c.l.b16 %v3208
    %v3277 = vunpack.c.l.b16 %v3209
    %v3278 = vunpack.c.l.b16 %v3210
    %v3279 = vunpack.c.l.b16 %v3211
    %v3280 = vunpack.c.l.b16 %v3212
    %v3281 = vunpack.c.l.b16 %v3213
    %v3282 = vunpack.c.l.b16 %v3214
    %v3283 = vunpack.c.l.b16 %v3215
    %v3284 = vunpack.c.l.b16 %v3216
    %v3285 = vunpack.c.l.b16 %v3217
    %v3286 = vunpack.c.l.b16 %v3218
    %v3287 = vunpack.c.l.b16 %v3219
    %v3288 = vunpack.c.l.b16 %v3220
    %v3289 = vpack.c.b16 %v3258, %v3257
    %v3290 = vpack.c.b16 %v3260, %v3259
    %v3291 = vpack.c.b16 %v3262, %v3261
    %v3292 = vpack.c.b16 %v3264, %v3263
    %v3293 = vpack.c.b16 %v3266, %v3265
    %v3294 = vpack.c.b16 %v3268, %v3267
    %v3295 = vpack.c.b16 %v3270, %v3269
    %v3296 = vpack.c.b16 %v3272, %v3271
    %v3297 = vpack.c.b16 %v3274, %v3273
    %v3298 = vpack.c.b16 %v3276, %v3275
    %v3299 = vpack.c.b16 %v3278, %v3277
    %v3300 = vpack.c.b16 %v3280, %v3279
    %v3301 = vpack.c.b16 %v3282, %v3281
    %v3302 = vpack.c.b16 %v3284, %v3283
    %v3303 = vpack.c.b16 %v3286, %v3285
    %v3304 = vpack.c.b16 %v3288, %v3287
    %3321 = vmatpush.bf16.msra.mxu0 %v3296
    %3322 = vmatpush.bf16.msra.mxu0 %v3295
    %3323 = vmatpush.bf16.msra.mxu0 %v3294
    %3324 = vmatpush.bf16.msra.mxu0 %v3293
    %3325 = vmatpush.bf16.msra.mxu0 %v3292
    %3326 = vmatpush.bf16.msra.mxu0 %v3291
    %3327 = vmatpush.bf16.msra.mxu0 %v3290
    %3328 = vmatpush.bf16.msra.mxu0 %v3289
    %3329 = vmatmul.bf16.gmra.mxu0 %v3187
    %v3330 = vpop.f32.mrf.mxu0
    %v3331 = vadd.f32 %v3223, %v3330
    %v3332 = vpop.f32.mrf.mxu0
    %v3333 = vadd.f32 %v3223, %v3332
    %3334 = vdwg.mxu0
    %3335 = vmatpush.bf16.msra.mxu0 %v3304
    %3336 = vmatpush.bf16.msra.mxu0 %v3303
    %3337 = vmatpush.bf16.msra.mxu0 %v3302
    %3338 = vmatpush.bf16.msra.mxu0 %v3301
    %3339 = vmatpush.bf16.msra.mxu0 %v3300
    %3340 = vmatpush.bf16.msra.mxu0 %v3299
    %3341 = vmatpush.bf16.msra.mxu0 %v3298
    %3342 = vmatpush.bf16.msra.mxu0 %v3297
    %3343 = vmatmul.bf16.gmra.mxu0 %v3188
    %v3344 = vpop.f32.mrf.mxu0
    %v3345 = vadd.f32 %v3331, %v3344
    %v3346 = vpop.f32.mrf.mxu0
    %v3347 = vadd.f32 %v3333, %v3346
    %3348 = vdwg.mxu0
    %vm3349 = vcmask 31744
    %3350 = vst.msk [vmem:[%s12] sm:$0xff] %vm3349, %v3345
    %3351 = vst.msk [vmem:[%s12 + $0x8] sm:$0xff] %vm3349, %v3347
    // Predicated region
    $region54: #{tpu_custom_call.1} parent=1 // pred_check
      _
    $region55: #{tpu_custom_call.1} parent=1 // pred_check_branch
      %3353 = sbr.rel (0) target = $region57
    $region56: #{tpu_custom_call.1} parent=1 // pred_region
      _
    $region57: #{tpu_custom_call.1} parent=1 // pred_fallthru
      _
    // Predicated region
    $region58: #{tpu_custom_call.1} parent=1 // pred_check
      _
    $region59: #{tpu_custom_call.1} parent=1 // pred_check_branch
      %3355 = sbr.rel (0) target = $region61
    $region60: #{tpu_custom_call.1} parent=1 // pred_region
      _
    $region61: #{tpu_custom_call.1} parent=1 // pred_fallthru
      _
    %3356 = vsyncpa [#allocation3], 1

</llo_original>
